<compile_context>
chip_gen: v6e
topology: v6e:2x2x1
jax: 0.10.0
libtpu: 0.0.40
codegen_flags: <defaults>
</compile_context>

<pallas_src>
import functools
import math
from functools import partial

import numpy as np
import jax
import jax.numpy as jnp
from jax import lax
from jax.experimental import pallas as pl
from jax.experimental.pallas import tpu as pltpu


def _round_up(x, m):
    return ((x + m - 1) // m) * m


def _bucket_from_rel(rel, *, num_buckets, max_distance, bidirectional):
    """T5 _relative_position_bucket on an int32 array (matches the torch ref)."""
    if bidirectional:
        nb = num_buckets // 2
        buckets = (rel > 0).astype(jnp.int32) * nb
        rel_abs = jnp.abs(rel)
    else:
        nb = num_buckets
        buckets = jnp.zeros_like(rel)
        rel_abs = jnp.maximum(-rel, 0)
    max_exact = nb // 2
    is_small = rel_abs < max_exact
    # clamp to 1.0 only to avoid log(0) on the masked branch; selected values
    # are identical to the PyTorch reference.
    rel_f = jnp.maximum(rel_abs.astype(jnp.float32), 1.0)
    large = max_exact + (
        jnp.log(rel_f / max_exact)
        / math.log(max_distance / max_exact)
        * (nb - max_exact)
    ).astype(jnp.int32)          # truncation toward zero == .to(torch.long)
    large = jnp.minimum(large, nb - 1)
    return buckets + jnp.where(is_small, rel_abs, large)


@functools.lru_cache(maxsize=None)
def _roll_direction():
    """Probe pltpu.roll's (unstrided) direction once per process.

    Returns +1 if pltpu.roll matches jnp.roll (result[i] = x[i - shift]),
    -1 if it is the reverse convention, and 0 if roll is unavailable (the
    kernel then uses static shifted slices instead).  The direction is a
    property of the Mosaic lowering, not of a particular chip.
    """
    def probe(o_ref):
        x = lax.broadcasted_iota(jnp.float32, (8, 128), 1)
        o_ref[...] = pltpu.roll(x, 1, 1)

    try:
        r = np.asarray(jax.device_get(pl.pallas_call(
            probe, out_shape=jax.ShapeDtypeStruct((8, 128), jnp.float32))()))
    except Exception:
        return 0
    if r[0, 0] == 127.0:
        return 1
    if r[0, 0] == 1.0:
        return -1
    return 0


def _toeplitz_expand_kernel(win_ref, out_ref, *, tq, tk, strip, roll_dir):
    """Pure Toeplitz expansion (no program_id dependence in the body).

    win_ref: (H, 8, strip) window already selected by the BlockSpec index_map;
             win[h, r, l] is the bias of head h for relative position
             rel = base + l - r, where `base` is this tile's window origin.
    out_ref: (H, tq, tk) with out[h, q, k] = bias(head h, rel = k_glob - q_glob).
    With q = 8*b + r the needed value is win[h, r, (tq - 8*b) + k]: a constant
    lane shift per 8-row band, identical for all 8 sublanes of the band
    (the per-row shift was pre-baked into the r axis of `win`).
    """
    H = out_ref.shape[0]
    bands = (tq + 7) // 8
    for h in range(H):
        w = win_ref[h]                              # (8, strip): a few vregs
        for b in range(bands):
            q0 = 8 * b
            rows = min(8, tq - q0)
            sh = tq - q0                            # static shift, multiple of 8
            if roll_dir == 0:
                band = w[:rows, sh:sh + tk]         # static shifted slice
            else:
                shift = (strip - sh) if roll_dir > 0 else sh
                band = pltpu.roll(w, shift, 1)[:rows, :tk]
            out_ref[h, q0:q0 + rows, :] = band      # dense lane-aligned store


def _vmem_capacity_bytes():
    try:
        info = pltpu.get_tpu_info()
        for name in ("vmem_capacity_bytes", "vmem_bytes", "vmem_size_bytes"):
            v = getattr(info, name, None)
            if v:
                return int(v)
    except Exception:
        pass
    return 64 << 20      # conservative (v7x-sized) default


def _pick_tiles(Q, K, H, itemsize, vmem_cap):
    # Query tile: 128 keeps the per-tile window origins 128-lane aligned;
    # otherwise fall back to a single tile along queries (alignment then
    # comes from tk alone).
    tq = 128 if (Q > 128 and Q % 128 == 0) else Q
    # Key tile: lane-dense multiple of 128.  Bigger tiles amortize the
    # ~0.35us per-step overhead on v5e/v6e (128 MiB VMEM); on v7x (64 MiB)
    # keep the double-buffered output block inside a tighter budget.
    if K <= 512 or K % 128 != 0:
        return tq, K
    budget = max(vmem_cap // 4, 4 << 20)
    cands = (2048, 1024, 512, 256, 128) if vmem_cap >= (96 << 20) else (1024, 512, 256, 128)
    for c in cands:
        if K % c == 0 and 2 * H * tq * c * itemsize <= budget:
            return tq, c
    return tq, 128


def relative_bias(embeddings, query_length, key_length, *,
                  relative_attention_max_distance, is_decoder,
                  out_dtype=None, tq=None, tk=None):
    """T5 relative position bias.

    embeddings: (num_buckets, n_heads) table (the nn.Embedding weight).
    Returns (1, n_heads, query_length, key_length) in `out_dtype`
    (default: embeddings.dtype; pass bf16 to halve the HBM write traffic).
    """
    NB, H = embeddings.shape
    Q, K = int(query_length), int(key_length)
    out_dtype = jnp.dtype(out_dtype if out_dtype is not None else embeddings.dtype)
    itemsize = out_dtype.itemsize

    vmem_cap = _vmem_capacity_bytes()
    auto_tq, auto_tk = _pick_tiles(Q, K, H, itemsize, vmem_cap)
    tq = auto_tq if tq is None else int(tq)
    tk = auto_tk if tk is None else int(tk)
    if Q % tq or K % tk:
        raise ValueError("query_length/key_length must be divisible by the tiles")
    grid_q, grid_k = Q // tq, K // tk
    if grid_q > 1 and tq % 128:
        raise ValueError("tq must be a multiple of 128 when it does not cover Q")
    if grid_k > 1 and tk % 128:
        raise ValueError("tk must be a multiple of 128 when it does not cover K")

    strip = _round_up(tq + tk, 128)          # padded Toeplitz window length

    # ---------- O(Q+K) precompute in plain JAX (an exact gather) ----------
    # windows[n, h, r, l] = embeddings[bucket(128*n + l - r - Q), h]
    # Tile (i, j) consumes window n = n0 + j*nk - i*nq (exact integer by the
    # alignment rules above), i.e. window origin base = Q - tq + j*tk - i*tq,
    # and out[h, 8b+r, k] = windows[n, h, r, (tq - 8b) + k].
    n0, nq, nk = (Q - tq) // 128, tq // 128, tk // 128
    num_win = n0 + (grid_k - 1) * nk + 1
    n_ids = jnp.arange(num_win, dtype=jnp.int32)[:, None, None]
    r_ids = jnp.arange(8, dtype=jnp.int32)[None, :, None]
    l_ids = jnp.arange(strip, dtype=jnp.int32)[None, None, :]
    rel = 128 * n_ids + l_ids - r_ids - Q                       # (num_win, 8, strip)
    bucket = _bucket_from_rel(rel, num_buckets=NB,
                              max_distance=relative_attention_max_distance,
                              bidirectional=not is_decoder)
    windows = jnp.transpose(embeddings[bucket], (0, 3, 1, 2))   # (num_win, H, 8, strip)
    windows = windows.astype(out_dtype)      # cast BEFORE any expansion work

    kernel = partial(_toeplitz_expand_kernel, tq=tq, tk=tk, strip=strip,
                     roll_dir=_roll_direction())

    win_spec = pl.BlockSpec((None, H, 8, strip),
                            lambda i, j: (n0 + j * nk - i * nq, 0, 0, 0))
    out_spec = pl.BlockSpec((H, tq, tk), lambda i, j: (0, i, j))

    # Double-buffered output block + double-buffered input window + slack.
    vmem_need = 2 * H * tq * tk * itemsize + 2 * H * 8 * strip * itemsize + (2 << 20)
    vmem_limit = int(min(max(vmem_need, 16 << 20), (vmem_cap * 5) // 8))

    cost = pl.CostEstimate(
        flops=H * Q * K,                      # ~one shift/copy op per element
        transcendentals=0,
        bytes_accessed=(H * Q * K + grid_q * grid_k * H * 8 * strip) * itemsize)

    out = pl.pallas_call(
        kernel,
        out_shape=jax.ShapeDtypeStruct((H, Q, K), out_dtype),
        grid=(grid_q, grid_k),
        in_specs=[win_spec],
        out_specs=out_spec,
        compiler_params=pltpu.CompilerParams(
            dimension_semantics=("parallel", "parallel"),
            vmem_limit_bytes=vmem_limit),
        cost_estimate=cost,
    )(windows)
    return out[None]                           # (1, H, Q, K)


# ---- pure-JAX reference (mirrors the PyTorch module) ----
def _relative_bias_ref(embeddings, query_length, key_length, *,
                       relative_attention_num_buckets,
                       relative_attention_max_distance, is_decoder):
    ctx = jnp.arange(query_length, dtype=jnp.int32)[:, None]
    mem = jnp.arange(key_length, dtype=jnp.int32)[None, :]
    rel = mem - ctx
    bucket = _bucket_from_rel(
        rel, num_buckets=relative_attention_num_buckets,
        max_distance=relative_attention_max_distance,
        bidirectional=not is_decoder)
    values = embeddings[bucket]                       # (Q, K, H)
    return jnp.transpose(values, (2, 0, 1))[None]     # (1, H, Q, K)


if __name__ == "__main__":
    # module config
    relative_attention_num_buckets = 32
    relative_attention_max_distance = 128
    n_heads = 8
    is_decoder = False

    # forward-call shapes (small; default tiles give a (2, 1) parallel grid)
    query_length = 256
    key_length = 256

    # deterministic parameter init (nn.Embedding default: N(0, 1))
    key = jax.random.PRNGKey(0)
    embeddings = jax.random.normal(
        key, (relative_attention_num_buckets, n_heads), dtype=jnp.float32)

    out = relative_bias(
        embeddings, query_length, key_length,
        relative_attention_max_distance=relative_attention_max_distance,
        is_decoder=is_decoder)
    out = jax.block_until_ready(out)

    ref = _relative_bias_ref(
        embeddings, query_length, key_length,
        relative_attention_num_buckets=relative_attention_num_buckets,
        relative_attention_max_distance=relative_attention_max_distance,
        is_decoder=is_decoder)

    assert out.shape == (1, n_heads, query_length, key_length)
    np.testing.assert_allclose(np.asarray(out), np.asarray(ref),
                               rtol=0, atol=0)
    print("KERNEL_OK")
</pallas_src>

<mosaic_0001>
module attributes {stable_mosaic.version = 11 : i64} {
  func.func @_toeplitz_expand_kernel(%arg0: i32, %arg1: i32, %arg2: memref<1x8x8x384xf32, #tpu.memory_space<vmem>>, %arg3: memref<8x128x256xf32, #tpu.memory_space<vmem>>) attributes {dimension_semantics = [#tpu.dimension_semantics<parallel>, #tpu.dimension_semantics<parallel>], iteration_bounds = array<i64: 2, 1>, scalar_prefetch = 0 : i64, scratch_operands = 0 : i64, tpu.core_type = #tpu.core_type<tc>, window_params = [{transform_indices = @transform_0, window_bounds = array<i64: 1, 8, 8, 384>}, {transform_indices = @transform_1, window_bounds = array<i64: 8, 128, 256>}]} {
    %c0 = arith.constant 0 : index
    %c0_0 = arith.constant 0 : index
    %c0_1 = arith.constant 0 : index
    %c0_2 = arith.constant 0 : index
    %0 = vector.load %arg2[%c0, %c0_0, %c0_1, %c0_2] : memref<1x8x8x384xf32, #tpu.memory_space<vmem>>, vector<1x1x8x384xf32>
    %1 = vector.shape_cast %0 : vector<1x1x8x384xf32> to vector<8x384xf32>
    %2 = vector.extract_strided_slice %1 {offsets = [0, 128], sizes = [8, 256], strides = [1, 1]} : vector<8x384xf32> to vector<8x256xf32>
    %c0_3 = arith.constant 0 : index
    %c0_4 = arith.constant 0 : index
    %c0_5 = arith.constant 0 : index
    %3 = vector.load %arg3[%c0_3, %c0_4, %c0_5] : memref<8x128x256xf32, #tpu.memory_space<vmem>>, vector<1x8x256xf32>
    %4 = vector.shape_cast %3 : vector<1x8x256xf32> to vector<8x256xf32>
    %5 = vector.shape_cast %2 : vector<8x256xf32> to vector<1x8x256xf32>
    tpu.vector_store %arg3[%c0_3, %c0_4, %c0_5], %5 {strides = array<i32>} : memref<8x128x256xf32, #tpu.memory_space<vmem>>, vector<1x8x256xf32>,
    %6 = vector.extract_strided_slice %1 {offsets = [0, 120], sizes = [8, 256], strides = [1, 1]} : vector<8x384xf32> to vector<8x256xf32>
    %c0_6 = arith.constant 0 : index
    %c8 = arith.constant 8 : index
    %c0_7 = arith.constant 0 : index
    %7 = vector.load %arg3[%c0_6, %c8, %c0_7] : memref<8x128x256xf32, #tpu.memory_space<vmem>>, vector<1x8x256xf32>
    %8 = vector.shape_cast %7 : vector<1x8x256xf32> to vector<8x256xf32>
    %9 = vector.shape_cast %6 : vector<8x256xf32> to vector<1x8x256xf32>
    tpu.vector_store %arg3[%c0_6, %c8, %c0_7], %9 {strides = array<i32>} : memref<8x128x256xf32, #tpu.memory_space<vmem>>, vector<1x8x256xf32>,
    %10 = vector.extract_strided_slice %1 {offsets = [0, 112], sizes = [8, 256], strides = [1, 1]} : vector<8x384xf32> to vector<8x256xf32>
    %c0_8 = arith.constant 0 : index
    %c16 = arith.constant 16 : index
    %c0_9 = arith.constant 0 : index
    %11 = vector.load %arg3[%c0_8, %c16, %c0_9] : memref<8x128x256xf32, #tpu.memory_space<vmem>>, vector<1x8x256xf32>
    %12 = vector.shape_cast %11 : vector<1x8x256xf32> to vector<8x256xf32>
    %13 = vector.shape_cast %10 : vector<8x256xf32> to vector<1x8x256xf32>
    tpu.vector_store %arg3[%c0_8, %c16, %c0_9], %13 {strides = array<i32>} : memref<8x128x256xf32, #tpu.memory_space<vmem>>, vector<1x8x256xf32>,
    %14 = vector.extract_strided_slice %1 {offsets = [0, 104], sizes = [8, 256], strides = [1, 1]} : vector<8x384xf32> to vector<8x256xf32>
    %c0_10 = arith.constant 0 : index
    %c24 = arith.constant 24 : index
    %c0_11 = arith.constant 0 : index
    %15 = vector.load %arg3[%c0_10, %c24, %c0_11] : memref<8x128x256xf32, #tpu.memory_space<vmem>>, vector<1x8x256xf32>
    %16 = vector.shape_cast %15 : vector<1x8x256xf32> to vector<8x256xf32>
    %17 = vector.shape_cast %14 : vector<8x256xf32> to vector<1x8x256xf32>
    tpu.vector_store %arg3[%c0_10, %c24, %c0_11], %17 {strides = array<i32>} : memref<8x128x256xf32, #tpu.memory_space<vmem>>, vector<1x8x256xf32>,
    %18 = vector.extract_strided_slice %1 {offsets = [0, 96], sizes = [8, 256], strides = [1, 1]} : vector<8x384xf32> to vector<8x256xf32>
    %c0_12 = arith.constant 0 : index
    %c32 = arith.constant 32 : index
    %c0_13 = arith.constant 0 : index
    %19 = vector.load %arg3[%c0_12, %c32, %c0_13] : memref<8x128x256xf32, #tpu.memory_space<vmem>>, vector<1x8x256xf32>
    %20 = vector.shape_cast %19 : vector<1x8x256xf32> to vector<8x256xf32>
    %21 = vector.shape_cast %18 : vector<8x256xf32> to vector<1x8x256xf32>
    tpu.vector_store %arg3[%c0_12, %c32, %c0_13], %21 {strides = array<i32>} : memref<8x128x256xf32, #tpu.memory_space<vmem>>, vector<1x8x256xf32>,
    %22 = vector.extract_strided_slice %1 {offsets = [0, 88], sizes = [8, 256], strides = [1, 1]} : vector<8x384xf32> to vector<8x256xf32>
    %c0_14 = arith.constant 0 : index
    %c40 = arith.constant 40 : index
    %c0_15 = arith.constant 0 : index
    %23 = vector.load %arg3[%c0_14, %c40, %c0_15] : memref<8x128x256xf32, #tpu.memory_space<vmem>>, vector<1x8x256xf32>
    %24 = vector.shape_cast %23 : vector<1x8x256xf32> to vector<8x256xf32>
    %25 = vector.shape_cast %22 : vector<8x256xf32> to vector<1x8x256xf32>
    tpu.vector_store %arg3[%c0_14, %c40, %c0_15], %25 {strides = array<i32>} : memref<8x128x256xf32, #tpu.memory_space<vmem>>, vector<1x8x256xf32>,
    %26 = vector.extract_strided_slice %1 {offsets = [0, 80], sizes = [8, 256], strides = [1, 1]} : vector<8x384xf32> to vector<8x256xf32>
    %c0_16 = arith.constant 0 : index
    %c48 = arith.constant 48 : index
    %c0_17 = arith.constant 0 : index
    %27 = vector.load %arg3[%c0_16, %c48, %c0_17] : memref<8x128x256xf32, #tpu.memory_space<vmem>>, vector<1x8x256xf32>
    %28 = vector.shape_cast %27 : vector<1x8x256xf32> to vector<8x256xf32>
    %29 = vector.shape_cast %26 : vector<8x256xf32> to vector<1x8x256xf32>
    tpu.vector_store %arg3[%c0_16, %c48, %c0_17], %29 {strides = array<i32>} : memref<8x128x256xf32, #tpu.memory_space<vmem>>, vector<1x8x256xf32>,
    %30 = vector.extract_strided_slice %1 {offsets = [0, 72], sizes = [8, 256], strides = [1, 1]} : vector<8x384xf32> to vector<8x256xf32>
    %c0_18 = arith.constant 0 : index
    %c56 = arith.constant 56 : index
    %c0_19 = arith.constant 0 : index
    %31 = vector.load %arg3[%c0_18, %c56, %c0_19] : memref<8x128x256xf32, #tpu.memory_space<vmem>>, vector<1x8x256xf32>
    %32 = vector.shape_cast %31 : vector<1x8x256xf32> to vector<8x256xf32>
    %33 = vector.shape_cast %30 : vector<8x256xf32> to vector<1x8x256xf32>
    tpu.vector_store %arg3[%c0_18, %c56, %c0_19], %33 {strides = array<i32>} : memref<8x128x256xf32, #tpu.memory_space<vmem>>, vector<1x8x256xf32>,
    %34 = vector.extract_strided_slice %1 {offsets = [0, 64], sizes = [8, 256], strides = [1, 1]} : vector<8x384xf32> to vector<8x256xf32>
    %c0_20 = arith.constant 0 : index
    %c64 = arith.constant 64 : index
    %c0_21 = arith.constant 0 : index
    %35 = vector.load %arg3[%c0_20, %c64, %c0_21] : memref<8x128x256xf32, #tpu.memory_space<vmem>>, vector<1x8x256xf32>
    %36 = vector.shape_cast %35 : vector<1x8x256xf32> to vector<8x256xf32>
    %37 = vector.shape_cast %34 : vector<8x256xf32> to vector<1x8x256xf32>
    tpu.vector_store %arg3[%c0_20, %c64, %c0_21], %37 {strides = array<i32>} : memref<8x128x256xf32, #tpu.memory_space<vmem>>, vector<1x8x256xf32>,
    %38 = vector.extract_strided_slice %1 {offsets = [0, 56], sizes = [8, 256], strides = [1, 1]} : vector<8x384xf32> to vector<8x256xf32>
    %c0_22 = arith.constant 0 : index
    %c72 = arith.constant 72 : index
    %c0_23 = arith.constant 0 : index
    %39 = vector.load %arg3[%c0_22, %c72, %c0_23] : memref<8x128x256xf32, #tpu.memory_space<vmem>>, vector<1x8x256xf32>
    %40 = vector.shape_cast %39 : vector<1x8x256xf32> to vector<8x256xf32>
    %41 = vector.shape_cast %38 : vector<8x256xf32> to vector<1x8x256xf32>
    tpu.vector_store %arg3[%c0_22, %c72, %c0_23], %41 {strides = array<i32>} : memref<8x128x256xf32, #tpu.memory_space<vmem>>, vector<1x8x256xf32>,
    %42 = vector.extract_strided_slice %1 {offsets = [0, 48], sizes = [8, 256], strides = [1, 1]} : vector<8x384xf32> to vector<8x256xf32>
    %c0_24 = arith.constant 0 : index
    %c80 = arith.constant 80 : index
    %c0_25 = arith.constant 0 : index
    %43 = vector.load %arg3[%c0_24, %c80, %c0_25] : memref<8x128x256xf32, #tpu.memory_space<vmem>>, vector<1x8x256xf32>
    %44 = vector.shape_cast %43 : vector<1x8x256xf32> to vector<8x256xf32>
    %45 = vector.shape_cast %42 : vector<8x256xf32> to vector<1x8x256xf32>
    tpu.vector_store %arg3[%c0_24, %c80, %c0_25], %45 {strides = array<i32>} : memref<8x128x256xf32, #tpu.memory_space<vmem>>, vector<1x8x256xf32>,
    %46 = vector.extract_strided_slice %1 {offsets = [0, 40], sizes = [8, 256], strides = [1, 1]} : vector<8x384xf32> to vector<8x256xf32>
    %c0_26 = arith.constant 0 : index
    %c88 = arith.constant 88 : index
    %c0_27 = arith.constant 0 : index
    %47 = vector.load %arg3[%c0_26, %c88, %c0_27] : memref<8x128x256xf32, #tpu.memory_space<vmem>>, vector<1x8x256xf32>
    %48 = vector.shape_cast %47 : vector<1x8x256xf32> to vector<8x256xf32>
    %49 = vector.shape_cast %46 : vector<8x256xf32> to vector<1x8x256xf32>
    tpu.vector_store %arg3[%c0_26, %c88, %c0_27], %49 {strides = array<i32>} : memref<8x128x256xf32, #tpu.memory_space<vmem>>, vector<1x8x256xf32>,
    %50 = vector.extract_strided_slice %1 {offsets = [0, 32], sizes = [8, 256], strides = [1, 1]} : vector<8x384xf32> to vector<8x256xf32>
    %c0_28 = arith.constant 0 : index
    %c96 = arith.constant 96 : index
    %c0_29 = arith.constant 0 : index
    %51 = vector.load %arg3[%c0_28, %c96, %c0_29] : memref<8x128x256xf32, #tpu.memory_space<vmem>>, vector<1x8x256xf32>
    %52 = vector.shape_cast %51 : vector<1x8x256xf32> to vector<8x256xf32>
    %53 = vector.shape_cast %50 : vector<8x256xf32> to vector<1x8x256xf32>
    tpu.vector_store %arg3[%c0_28, %c96, %c0_29], %53 {strides = array<i32>} : memref<8x128x256xf32, #tpu.memory_space<vmem>>, vector<1x8x256xf32>,
    %54 = vector.extract_strided_slice %1 {offsets = [0, 24], sizes = [8, 256], strides = [1, 1]} : vector<8x384xf32> to vector<8x256xf32>
    %c0_30 = arith.constant 0 : index
    %c104 = arith.constant 104 : index
    %c0_31 = arith.constant 0 : index
    %55 = vector.load %arg3[%c0_30, %c104, %c0_31] : memref<8x128x256xf32, #tpu.memory_space<vmem>>, vector<1x8x256xf32>
    %56 = vector.shape_cast %55 : vector<1x8x256xf32> to vector<8x256xf32>
    %57 = vector.shape_cast %54 : vector<8x256xf32> to vector<1x8x256xf32>
    tpu.vector_store %arg3[%c0_30, %c104, %c0_31], %57 {strides = array<i32>} : memref<8x128x256xf32, #tpu.memory_space<vmem>>, vector<1x8x256xf32>,
    %58 = vector.extract_strided_slice %1 {offsets = [0, 16], sizes = [8, 256], strides = [1, 1]} : vector<8x384xf32> to vector<8x256xf32>
    %c0_32 = arith.constant 0 : index
    %c112 = arith.constant 112 : index
    %c0_33 = arith.constant 0 : index
    %59 = vector.load %arg3[%c0_32, %c112, %c0_33] : memref<8x128x256xf32, #tpu.memory_space<vmem>>, vector<1x8x256xf32>
    %60 = vector.shape_cast %59 : vector<1x8x256xf32> to vector<8x256xf32>
    %61 = vector.shape_cast %58 : vector<8x256xf32> to vector<1x8x256xf32>
    tpu.vector_store %arg3[%c0_32, %c112, %c0_33], %61 {strides = array<i32>} : memref<8x128x256xf32, #tpu.memory_space<vmem>>, vector<1x8x256xf32>,
    %62 = vector.extract_strided_slice %1 {offsets = [0, 8], sizes = [8, 256], strides = [1, 1]} : vector<8x384xf32> to vector<8x256xf32>
    %c0_34 = arith.constant 0 : index
    %c120 = arith.constant 120 : index
    %c0_35 = arith.constant 0 : index
    %63 = vector.load %arg3[%c0_34, %c120, %c0_35] : memref<8x128x256xf32, #tpu.memory_space<vmem>>, vector<1x8x256xf32>
    %64 = vector.shape_cast %63 : vector<1x8x256xf32> to vector<8x256xf32>
    %65 = vector.shape_cast %62 : vector<8x256xf32> to vector<1x8x256xf32>
    tpu.vector_store %arg3[%c0_34, %c120, %c0_35], %65 {strides = array<i32>} : memref<8x128x256xf32, #tpu.memory_space<vmem>>, vector<1x8x256xf32>,
    %c0_36 = arith.constant 0 : index
    %c1 = arith.constant 1 : index
    %c0_37 = arith.constant 0 : index
    %c0_38 = arith.constant 0 : index
    %66 = vector.load %arg2[%c0_36, %c1, %c0_37, %c0_38] : memref<1x8x8x384xf32, #tpu.memory_space<vmem>>, vector<1x1x8x384xf32>
    %67 = vector.shape_cast %66 : vector<1x1x8x384xf32> to vector<8x384xf32>
    %68 = vector.extract_strided_slice %67 {offsets = [0, 128], sizes = [8, 256], strides = [1, 1]} : vector<8x384xf32> to vector<8x256xf32>
    %c1_39 = arith.constant 1 : index
    %c0_40 = arith.constant 0 : index
    %c0_41 = arith.constant 0 : index
    %69 = vector.load %arg3[%c1_39, %c0_40, %c0_41] : memref<8x128x256xf32, #tpu.memory_space<vmem>>, vector<1x8x256xf32>
    %70 = vector.shape_cast %69 : vector<1x8x256xf32> to vector<8x256xf32>
    %71 = vector.shape_cast %68 : vector<8x256xf32> to vector<1x8x256xf32>
    tpu.vector_store %arg3[%c1_39, %c0_40, %c0_41], %71 {strides = array<i32>} : memref<8x128x256xf32, #tpu.memory_space<vmem>>, vector<1x8x256xf32>,
    %72 = vector.extract_strided_slice %67 {offsets = [0, 120], sizes = [8, 256], strides = [1, 1]} : vector<8x384xf32> to vector<8x256xf32>
    %c1_42 = arith.constant 1 : index
    %c8_43 = arith.constant 8 : index
    %c0_44 = arith.constant 0 : index
    %73 = vector.load %arg3[%c1_42, %c8_43, %c0_44] : memref<8x128x256xf32, #tpu.memory_space<vmem>>, vector<1x8x256xf32>
    %74 = vector.shape_cast %73 : vector<1x8x256xf32> to vector<8x256xf32>
    %75 = vector.shape_cast %72 : vector<8x256xf32> to vector<1x8x256xf32>
    tpu.vector_store %arg3[%c1_42, %c8_43, %c0_44], %75 {strides = array<i32>} : memref<8x128x256xf32, #tpu.memory_space<vmem>>, vector<1x8x256xf32>,
    %76 = vector.extract_strided_slice %67 {offsets = [0, 112], sizes = [8, 256], strides = [1, 1]} : vector<8x384xf32> to vector<8x256xf32>
    %c1_45 = arith.constant 1 : index
    %c16_46 = arith.constant 16 : index
    %c0_47 = arith.constant 0 : index
    %77 = vector.load %arg3[%c1_45, %c16_46, %c0_47] : memref<8x128x256xf32, #tpu.memory_space<vmem>>, vector<1x8x256xf32>
    %78 = vector.shape_cast %77 : vector<1x8x256xf32> to vector<8x256xf32>
    %79 = vector.shape_cast %76 : vector<8x256xf32> to vector<1x8x256xf32>
    tpu.vector_store %arg3[%c1_45, %c16_46, %c0_47], %79 {strides = array<i32>} : memref<8x128x256xf32, #tpu.memory_space<vmem>>, vector<1x8x256xf32>,
    %80 = vector.extract_strided_slice %67 {offsets = [0, 104], sizes = [8, 256], strides = [1, 1]} : vector<8x384xf32> to vector<8x256xf32>
    %c1_48 = arith.constant 1 : index
    %c24_49 = arith.constant 24 : index
    %c0_50 = arith.constant 0 : index
    %81 = vector.load %arg3[%c1_48, %c24_49, %c0_50] : memref<8x128x256xf32, #tpu.memory_space<vmem>>, vector<1x8x256xf32>
    %82 = vector.shape_cast %81 : vector<1x8x256xf32> to vector<8x256xf32>
    %83 = vector.shape_cast %80 : vector<8x256xf32> to vector<1x8x256xf32>
    tpu.vector_store %arg3[%c1_48, %c24_49, %c0_50], %83 {strides = array<i32>} : memref<8x128x256xf32, #tpu.memory_space<vmem>>, vector<1x8x256xf32>,
    %84 = vector.extract_strided_slice %67 {offsets = [0, 96], sizes = [8, 256], strides = [1, 1]} : vector<8x384xf32> to vector<8x256xf32>
    %c1_51 = arith.constant 1 : index
    %c32_52 = arith.constant 32 : index
    %c0_53 = arith.constant 0 : index
    %85 = vector.load %arg3[%c1_51, %c32_52, %c0_53] : memref<8x128x256xf32, #tpu.memory_space<vmem>>, vector<1x8x256xf32>
    %86 = vector.shape_cast %85 : vector<1x8x256xf32> to vector<8x256xf32>
    %87 = vector.shape_cast %84 : vector<8x256xf32> to vector<1x8x256xf32>
    tpu.vector_store %arg3[%c1_51, %c32_52, %c0_53], %87 {strides = array<i32>} : memref<8x128x256xf32, #tpu.memory_space<vmem>>, vector<1x8x256xf32>,
    %88 = vector.extract_strided_slice %67 {offsets = [0, 88], sizes = [8, 256], strides = [1, 1]} : vector<8x384xf32> to vector<8x256xf32>
    %c1_54 = arith.constant 1 : index
    %c40_55 = arith.constant 40 : index
    %c0_56 = arith.constant 0 : index
    %89 = vector.load %arg3[%c1_54, %c40_55, %c0_56] : memref<8x128x256xf32, #tpu.memory_space<vmem>>, vector<1x8x256xf32>
    %90 = vector.shape_cast %89 : vector<1x8x256xf32> to vector<8x256xf32>
    %91 = vector.shape_cast %88 : vector<8x256xf32> to vector<1x8x256xf32>
    tpu.vector_store %arg3[%c1_54, %c40_55, %c0_56], %91 {strides = array<i32>} : memref<8x128x256xf32, #tpu.memory_space<vmem>>, vector<1x8x256xf32>,
    %92 = vector.extract_strided_slice %67 {offsets = [0, 80], sizes = [8, 256], strides = [1, 1]} : vector<8x384xf32> to vector<8x256xf32>
    %c1_57 = arith.constant 1 : index
    %c48_58 = arith.constant 48 : index
    %c0_59 = arith.constant 0 : index
    %93 = vector.load %arg3[%c1_57, %c48_58, %c0_59] : memref<8x128x256xf32, #tpu.memory_space<vmem>>, vector<1x8x256xf32>
    %94 = vector.shape_cast %93 : vector<1x8x256xf32> to vector<8x256xf32>
    %95 = vector.shape_cast %92 : vector<8x256xf32> to vector<1x8x256xf32>
    tpu.vector_store %arg3[%c1_57, %c48_58, %c0_59], %95 {strides = array<i32>} : memref<8x128x256xf32, #tpu.memory_space<vmem>>, vector<1x8x256xf32>,
    %96 = vector.extract_strided_slice %67 {offsets = [0, 72], sizes = [8, 256], strides = [1, 1]} : vector<8x384xf32> to vector<8x256xf32>
    %c1_60 = arith.constant 1 : index
    %c56_61 = arith.constant 56 : index
    %c0_62 = arith.constant 0 : index
    %97 = vector.load %arg3[%c1_60, %c56_61, %c0_62] : memref<8x128x256xf32, #tpu.memory_space<vmem>>, vector<1x8x256xf32>
    %98 = vector.shape_cast %97 : vector<1x8x256xf32> to vector<8x256xf32>
    %99 = vector.shape_cast %96 : vector<8x256xf32> to vector<1x8x256xf32>
    tpu.vector_store %arg3[%c1_60, %c56_61, %c0_62], %99 {strides = array<i32>} : memref<8x128x256xf32, #tpu.memory_space<vmem>>, vector<1x8x256xf32>,
    %100 = vector.extract_strided_slice %67 {offsets = [0, 64], sizes = [8, 256], strides = [1, 1]} : vector<8x384xf32> to vector<8x256xf32>
    %c1_63 = arith.constant 1 : index
    %c64_64 = arith.constant 64 : index
    %c0_65 = arith.constant 0 : index
    %101 = vector.load %arg3[%c1_63, %c64_64, %c0_65] : memref<8x128x256xf32, #tpu.memory_space<vmem>>, vector<1x8x256xf32>
    %102 = vector.shape_cast %101 : vector<1x8x256xf32> to vector<8x256xf32>
    %103 = vector.shape_cast %100 : vector<8x256xf32> to vector<1x8x256xf32>
    tpu.vector_store %arg3[%c1_63, %c64_64, %c0_65], %103 {strides = array<i32>} : memref<8x128x256xf32, #tpu.memory_space<vmem>>, vector<1x8x256xf32>,
    %104 = vector.extract_strided_slice %67 {offsets = [0, 56], sizes = [8, 256], strides = [1, 1]} : vector<8x384xf32> to vector<8x256xf32>
    %c1_66 = arith.constant 1 : index
    %c72_67 = arith.constant 72 : index
    %c0_68 = arith.constant 0 : index
    %105 = vector.load %arg3[%c1_66, %c72_67, %c0_68] : memref<8x128x256xf32, #tpu.memory_space<vmem>>, vector<1x8x256xf32>
    %106 = vector.shape_cast %105 : vector<1x8x256xf32> to vector<8x256xf32>
    %107 = vector.shape_cast %104 : vector<8x256xf32> to vector<1x8x256xf32>
    tpu.vector_store %arg3[%c1_66, %c72_67, %c0_68], %107 {strides = array<i32>} : memref<8x128x256xf32, #tpu.memory_space<vmem>>, vector<1x8x256xf32>,
    %108 = vector.extract_strided_slice %67 {offsets = [0, 48], sizes = [8, 256], strides = [1, 1]} : vector<8x384xf32> to vector<8x256xf32>
    %c1_69 = arith.constant 1 : index
    %c80_70 = arith.constant 80 : index
    %c0_71 = arith.constant 0 : index
    %109 = vector.load %arg3[%c1_69, %c80_70, %c0_71] : memref<8x128x256xf32, #tpu.memory_space<vmem>>, vector<1x8x256xf32>
    %110 = vector.shape_cast %109 : vector<1x8x256xf32> to vector<8x256xf32>
    %111 = vector.shape_cast %108 : vector<8x256xf32> to vector<1x8x256xf32>
    tpu.vector_store %arg3[%c1_69, %c80_70, %c0_71], %111 {strides = array<i32>} : memref<8x128x256xf32, #tpu.memory_space<vmem>>, vector<1x8x256xf32>,
    %112 = vector.extract_strided_slice %67 {offsets = [0, 40], sizes = [8, 256], strides = [1, 1]} : vector<8x384xf32> to vector<8x256xf32>
    %c1_72 = arith.constant 1 : index
    %c88_73 = arith.constant 88 : index
    %c0_74 = arith.constant 0 : index
    %113 = vector.load %arg3[%c1_72, %c88_73, %c0_74] : memref<8x128x256xf32, #tpu.memory_space<vmem>>, vector<1x8x256xf32>
    %114 = vector.shape_cast %113 : vector<1x8x256xf32> to vector<8x256xf32>
    %115 = vector.shape_cast %112 : vector<8x256xf32> to vector<1x8x256xf32>
    tpu.vector_store %arg3[%c1_72, %c88_73, %c0_74], %115 {strides = array<i32>} : memref<8x128x256xf32, #tpu.memory_space<vmem>>, vector<1x8x256xf32>,
    %116 = vector.extract_strided_slice %67 {offsets = [0, 32], sizes = [8, 256], strides = [1, 1]} : vector<8x384xf32> to vector<8x256xf32>
    %c1_75 = arith.constant 1 : index
    %c96_76 = arith.constant 96 : index
    %c0_77 = arith.constant 0 : index
    %117 = vector.load %arg3[%c1_75, %c96_76, %c0_77] : memref<8x128x256xf32, #tpu.memory_space<vmem>>, vector<1x8x256xf32>
    %118 = vector.shape_cast %117 : vector<1x8x256xf32> to vector<8x256xf32>
    %119 = vector.shape_cast %116 : vector<8x256xf32> to vector<1x8x256xf32>
    tpu.vector_store %arg3[%c1_75, %c96_76, %c0_77], %119 {strides = array<i32>} : memref<8x128x256xf32, #tpu.memory_space<vmem>>, vector<1x8x256xf32>,
    %120 = vector.extract_strided_slice %67 {offsets = [0, 24], sizes = [8, 256], strides = [1, 1]} : vector<8x384xf32> to vector<8x256xf32>
    %c1_78 = arith.constant 1 : index
    %c104_79 = arith.constant 104 : index
    %c0_80 = arith.constant 0 : index
    %121 = vector.load %arg3[%c1_78, %c104_79, %c0_80] : memref<8x128x256xf32, #tpu.memory_space<vmem>>, vector<1x8x256xf32>
    %122 = vector.shape_cast %121 : vector<1x8x256xf32> to vector<8x256xf32>
    %123 = vector.shape_cast %120 : vector<8x256xf32> to vector<1x8x256xf32>
    tpu.vector_store %arg3[%c1_78, %c104_79, %c0_80], %123 {strides = array<i32>} : memref<8x128x256xf32, #tpu.memory_space<vmem>>, vector<1x8x256xf32>,
    %124 = vector.extract_strided_slice %67 {offsets = [0, 16], sizes = [8, 256], strides = [1, 1]} : vector<8x384xf32> to vector<8x256xf32>
    %c1_81 = arith.constant 1 : index
    %c112_82 = arith.constant 112 : index
    %c0_83 = arith.constant 0 : index
    %125 = vector.load %arg3[%c1_81, %c112_82, %c0_83] : memref<8x128x256xf32, #tpu.memory_space<vmem>>, vector<1x8x256xf32>
    %126 = vector.shape_cast %125 : vector<1x8x256xf32> to vector<8x256xf32>
    %127 = vector.shape_cast %124 : vector<8x256xf32> to vector<1x8x256xf32>
    tpu.vector_store %arg3[%c1_81, %c112_82, %c0_83], %127 {strides = array<i32>} : memref<8x128x256xf32, #tpu.memory_space<vmem>>, vector<1x8x256xf32>,
    %128 = vector.extract_strided_slice %67 {offsets = [0, 8], sizes = [8, 256], strides = [1, 1]} : vector<8x384xf32> to vector<8x256xf32>
    %c1_84 = arith.constant 1 : index
    %c120_85 = arith.constant 120 : index
    %c0_86 = arith.constant 0 : index
    %129 = vector.load %arg3[%c1_84, %c120_85, %c0_86] : memref<8x128x256xf32, #tpu.memory_space<vmem>>, vector<1x8x256xf32>
    %130 = vector.shape_cast %129 : vector<1x8x256xf32> to vector<8x256xf32>
    %131 = vector.shape_cast %128 : vector<8x256xf32> to vector<1x8x256xf32>
    tpu.vector_store %arg3[%c1_84, %c120_85, %c0_86], %131 {strides = array<i32>} : memref<8x128x256xf32, #tpu.memory_space<vmem>>, vector<1x8x256xf32>,
    %c0_87 = arith.constant 0 : index
    %c2 = arith.constant 2 : index
    %c0_88 = arith.constant 0 : index
    %c0_89 = arith.constant 0 : index
    %132 = vector.load %arg2[%c0_87, %c2, %c0_88, %c0_89] : memref<1x8x8x384xf32, #tpu.memory_space<vmem>>, vector<1x1x8x384xf32>
    %133 = vector.shape_cast %132 : vector<1x1x8x384xf32> to vector<8x384xf32>
    %134 = vector.extract_strided_slice %133 {offsets = [0, 128], sizes = [8, 256], strides = [1, 1]} : vector<8x384xf32> to vector<8x256xf32>
    %c2_90 = arith.constant 2 : index
    %c0_91 = arith.constant 0 : index
    %c0_92 = arith.constant 0 : index
    %135 = vector.load %arg3[%c2_90, %c0_91, %c0_92] : memref<8x128x256xf32, #tpu.memory_space<vmem>>, vector<1x8x256xf32>
    %136 = vector.shape_cast %135 : vector<1x8x256xf32> to vector<8x256xf32>
    %137 = vector.shape_cast %134 : vector<8x256xf32> to vector<1x8x256xf32>
    tpu.vector_store %arg3[%c2_90, %c0_91, %c0_92], %137 {strides = array<i32>} : memref<8x128x256xf32, #tpu.memory_space<vmem>>, vector<1x8x256xf32>,
    %138 = vector.extract_strided_slice %133 {offsets = [0, 120], sizes = [8, 256], strides = [1, 1]} : vector<8x384xf32> to vector<8x256xf32>
    %c2_93 = arith.constant 2 : index
    %c8_94 = arith.constant 8 : index
    %c0_95 = arith.constant 0 : index
    %139 = vector.load %arg3[%c2_93, %c8_94, %c0_95] : memref<8x128x256xf32, #tpu.memory_space<vmem>>, vector<1x8x256xf32>
    %140 = vector.shape_cast %139 : vector<1x8x256xf32> to vector<8x256xf32>
    %141 = vector.shape_cast %138 : vector<8x256xf32> to vector<1x8x256xf32>
    tpu.vector_store %arg3[%c2_93, %c8_94, %c0_95], %141 {strides = array<i32>} : memref<8x128x256xf32, #tpu.memory_space<vmem>>, vector<1x8x256xf32>,
    %142 = vector.extract_strided_slice %133 {offsets = [0, 112], sizes = [8, 256], strides = [1, 1]} : vector<8x384xf32> to vector<8x256xf32>
    %c2_96 = arith.constant 2 : index
    %c16_97 = arith.constant 16 : index
    %c0_98 = arith.constant 0 : index
    %143 = vector.load %arg3[%c2_96, %c16_97, %c0_98] : memref<8x128x256xf32, #tpu.memory_space<vmem>>, vector<1x8x256xf32>
    %144 = vector.shape_cast %143 : vector<1x8x256xf32> to vector<8x256xf32>
    %145 = vector.shape_cast %142 : vector<8x256xf32> to vector<1x8x256xf32>
    tpu.vector_store %arg3[%c2_96, %c16_97, %c0_98], %145 {strides = array<i32>} : memref<8x128x256xf32, #tpu.memory_space<vmem>>, vector<1x8x256xf32>,
    %146 = vector.extract_strided_slice %133 {offsets = [0, 104], sizes = [8, 256], strides = [1, 1]} : vector<8x384xf32> to vector<8x256xf32>
    %c2_99 = arith.constant 2 : index
    %c24_100 = arith.constant 24 : index
    %c0_101 = arith.constant 0 : index
    %147 = vector.load %arg3[%c2_99, %c24_100, %c0_101] : memref<8x128x256xf32, #tpu.memory_space<vmem>>, vector<1x8x256xf32>
    %148 = vector.shape_cast %147 : vector<1x8x256xf32> to vector<8x256xf32>
    %149 = vector.shape_cast %146 : vector<8x256xf32> to vector<1x8x256xf32>
    tpu.vector_store %arg3[%c2_99, %c24_100, %c0_101], %149 {strides = array<i32>} : memref<8x128x256xf32, #tpu.memory_space<vmem>>, vector<1x8x256xf32>,
    %150 = vector.extract_strided_slice %133 {offsets = [0, 96], sizes = [8, 256], strides = [1, 1]} : vector<8x384xf32> to vector<8x256xf32>
    %c2_102 = arith.constant 2 : index
    %c32_103 = arith.constant 32 : index
    %c0_104 = arith.constant 0 : index
    %151 = vector.load %arg3[%c2_102, %c32_103, %c0_104] : memref<8x128x256xf32, #tpu.memory_space<vmem>>, vector<1x8x256xf32>
    %152 = vector.shape_cast %151 : vector<1x8x256xf32> to vector<8x256xf32>
    %153 = vector.shape_cast %150 : vector<8x256xf32> to vector<1x8x256xf32>
    tpu.vector_store %arg3[%c2_102, %c32_103, %c0_104], %153 {strides = array<i32>} : memref<8x128x256xf32, #tpu.memory_space<vmem>>, vector<1x8x256xf32>,
    %154 = vector.extract_strided_slice %133 {offsets = [0, 88], sizes = [8, 256], strides = [1, 1]} : vector<8x384xf32> to vector<8x256xf32>
    %c2_105 = arith.constant 2 : index
    %c40_106 = arith.constant 40 : index
    %c0_107 = arith.constant 0 : index
    %155 = vector.load %arg3[%c2_105, %c40_106, %c0_107] : memref<8x128x256xf32, #tpu.memory_space<vmem>>, vector<1x8x256xf32>
    %156 = vector.shape_cast %155 : vector<1x8x256xf32> to vector<8x256xf32>
    %157 = vector.shape_cast %154 : vector<8x256xf32> to vector<1x8x256xf32>
    tpu.vector_store %arg3[%c2_105, %c40_106, %c0_107], %157 {strides = array<i32>} : memref<8x128x256xf32, #tpu.memory_space<vmem>>, vector<1x8x256xf32>,
    %158 = vector.extract_strided_slice %133 {offsets = [0, 80], sizes = [8, 256], strides = [1, 1]} : vector<8x384xf32> to vector<8x256xf32>
    %c2_108 = arith.constant 2 : index
    %c48_109 = arith.constant 48 : index
    %c0_110 = arith.constant 0 : index
    %159 = vector.load %arg3[%c2_108, %c48_109, %c0_110] : memref<8x128x256xf32, #tpu.memory_space<vmem>>, vector<1x8x256xf32>
    %160 = vector.shape_cast %159 : vector<1x8x256xf32> to vector<8x256xf32>
    %161 = vector.shape_cast %158 : vector<8x256xf32> to vector<1x8x256xf32>
    tpu.vector_store %arg3[%c2_108, %c48_109, %c0_110], %161 {strides = array<i32>} : memref<8x128x256xf32, #tpu.memory_space<vmem>>, vector<1x8x256xf32>,
    %162 = vector.extract_strided_slice %133 {offsets = [0, 72], sizes = [8, 256], strides = [1, 1]} : vector<8x384xf32> to vector<8x256xf32>
    %c2_111 = arith.constant 2 : index
    %c56_112 = arith.constant 56 : index
    %c0_113 = arith.constant 0 : index
    %163 = vector.load %arg3[%c2_111, %c56_112, %c0_113] : memref<8x128x256xf32, #tpu.memory_space<vmem>>, vector<1x8x256xf32>
    %164 = vector.shape_cast %163 : vector<1x8x256xf32> to vector<8x256xf32>
    %165 = vector.shape_cast %162 : vector<8x256xf32> to vector<1x8x256xf32>
    tpu.vector_store %arg3[%c2_111, %c56_112, %c0_113], %165 {strides = array<i32>} : memref<8x128x256xf32, #tpu.memory_space<vmem>>, vector<1x8x256xf32>,
    %166 = vector.extract_strided_slice %133 {offsets = [0, 64], sizes = [8, 256], strides = [1, 1]} : vector<8x384xf32> to vector<8x256xf32>
    %c2_114 = arith.constant 2 : index
    %c64_115 = arith.constant 64 : index
    %c0_116 = arith.constant 0 : index
    %167 = vector.load %arg3[%c2_114, %c64_115, %c0_116] : memref<8x128x256xf32, #tpu.memory_space<vmem>>, vector<1x8x256xf32>
    %168 = vector.shape_cast %167 : vector<1x8x256xf32> to vector<8x256xf32>
    %169 = vector.shape_cast %166 : vector<8x256xf32> to vector<1x8x256xf32>
    tpu.vector_store %arg3[%c2_114, %c64_115, %c0_116], %169 {strides = array<i32>} : memref<8x128x256xf32, #tpu.memory_space<vmem>>, vector<1x8x256xf32>,
    %170 = vector.extract_strided_slice %133 {offsets = [0, 56], sizes = [8, 256], strides = [1, 1]} : vector<8x384xf32> to vector<8x256xf32>
    %c2_117 = arith.constant 2 : index
    %c72_118 = arith.constant 72 : index
    %c0_119 = arith.constant 0 : index
    %171 = vector.load %arg3[%c2_117, %c72_118, %c0_119] : memref<8x128x256xf32, #tpu.memory_space<vmem>>, vector<1x8x256xf32>
    %172 = vector.shape_cast %171 : vector<1x8x256xf32> to vector<8x256xf32>
    %173 = vector.shape_cast %170 : vector<8x256xf32> to vector<1x8x256xf32>
    tpu.vector_store %arg3[%c2_117, %c72_118, %c0_119], %173 {strides = array<i32>} : memref<8x128x256xf32, #tpu.memory_space<vmem>>, vector<1x8x256xf32>,
    %174 = vector.extract_strided_slice %133 {offsets = [0, 48], sizes = [8, 256], strides = [1, 1]} : vector<8x384xf32> to vector<8x256xf32>
    %c2_120 = arith.constant 2 : index
    %c80_121 = arith.constant 80 : index
    %c0_122 = arith.constant 0 : index
    %175 = vector.load %arg3[%c2_120, %c80_121, %c0_122] : memref<8x128x256xf32, #tpu.memory_space<vmem>>, vector<1x8x256xf32>
    %176 = vector.shape_cast %175 : vector<1x8x256xf32> to vector<8x256xf32>
    %177 = vector.shape_cast %174 : vector<8x256xf32> to vector<1x8x256xf32>
    tpu.vector_store %arg3[%c2_120, %c80_121, %c0_122], %177 {strides = array<i32>} : memref<8x128x256xf32, #tpu.memory_space<vmem>>, vector<1x8x256xf32>,
    %178 = vector.extract_strided_slice %133 {offsets = [0, 40], sizes = [8, 256], strides = [1, 1]} : vector<8x384xf32> to vector<8x256xf32>
    %c2_123 = arith.constant 2 : index
    %c88_124 = arith.constant 88 : index
    %c0_125 = arith.constant 0 : index
    %179 = vector.load %arg3[%c2_123, %c88_124, %c0_125] : memref<8x128x256xf32, #tpu.memory_space<vmem>>, vector<1x8x256xf32>
    %180 = vector.shape_cast %179 : vector<1x8x256xf32> to vector<8x256xf32>
    %181 = vector.shape_cast %178 : vector<8x256xf32> to vector<1x8x256xf32>
    tpu.vector_store %arg3[%c2_123, %c88_124, %c0_125], %181 {strides = array<i32>} : memref<8x128x256xf32, #tpu.memory_space<vmem>>, vector<1x8x256xf32>,
    %182 = vector.extract_strided_slice %133 {offsets = [0, 32], sizes = [8, 256], strides = [1, 1]} : vector<8x384xf32> to vector<8x256xf32>
    %c2_126 = arith.constant 2 : index
    %c96_127 = arith.constant 96 : index
    %c0_128 = arith.constant 0 : index
    %183 = vector.load %arg3[%c2_126, %c96_127, %c0_128] : memref<8x128x256xf32, #tpu.memory_space<vmem>>, vector<1x8x256xf32>
    %184 = vector.shape_cast %183 : vector<1x8x256xf32> to vector<8x256xf32>
    %185 = vector.shape_cast %182 : vector<8x256xf32> to vector<1x8x256xf32>
    tpu.vector_store %arg3[%c2_126, %c96_127, %c0_128], %185 {strides = array<i32>} : memref<8x128x256xf32, #tpu.memory_space<vmem>>, vector<1x8x256xf32>,
    %186 = vector.extract_strided_slice %133 {offsets = [0, 24], sizes = [8, 256], strides = [1, 1]} : vector<8x384xf32> to vector<8x256xf32>
    %c2_129 = arith.constant 2 : index
    %c104_130 = arith.constant 104 : index
    %c0_131 = arith.constant 0 : index
    %187 = vector.load %arg3[%c2_129, %c104_130, %c0_131] : memref<8x128x256xf32, #tpu.memory_space<vmem>>, vector<1x8x256xf32>
    %188 = vector.shape_cast %187 : vector<1x8x256xf32> to vector<8x256xf32>
    %189 = vector.shape_cast %186 : vector<8x256xf32> to vector<1x8x256xf32>
    tpu.vector_store %arg3[%c2_129, %c104_130, %c0_131], %189 {strides = array<i32>} : memref<8x128x256xf32, #tpu.memory_space<vmem>>, vector<1x8x256xf32>,
    %190 = vector.extract_strided_slice %133 {offsets = [0, 16], sizes = [8, 256], strides = [1, 1]} : vector<8x384xf32> to vector<8x256xf32>
    %c2_132 = arith.constant 2 : index
    %c112_133 = arith.constant 112 : index
    %c0_134 = arith.constant 0 : index
    %191 = vector.load %arg3[%c2_132, %c112_133, %c0_134] : memref<8x128x256xf32, #tpu.memory_space<vmem>>, vector<1x8x256xf32>
    %192 = vector.shape_cast %191 : vector<1x8x256xf32> to vector<8x256xf32>
    %193 = vector.shape_cast %190 : vector<8x256xf32> to vector<1x8x256xf32>
    tpu.vector_store %arg3[%c2_132, %c112_133, %c0_134], %193 {strides = array<i32>} : memref<8x128x256xf32, #tpu.memory_space<vmem>>, vector<1x8x256xf32>,
    %194 = vector.extract_strided_slice %133 {offsets = [0, 8], sizes = [8, 256], strides = [1, 1]} : vector<8x384xf32> to vector<8x256xf32>
    %c2_135 = arith.constant 2 : index
    %c120_136 = arith.constant 120 : index
    %c0_137 = arith.constant 0 : index
    %195 = vector.load %arg3[%c2_135, %c120_136, %c0_137] : memref<8x128x256xf32, #tpu.memory_space<vmem>>, vector<1x8x256xf32>
    %196 = vector.shape_cast %195 : vector<1x8x256xf32> to vector<8x256xf32>
    %197 = vector.shape_cast %194 : vector<8x256xf32> to vector<1x8x256xf32>
    tpu.vector_store %arg3[%c2_135, %c120_136, %c0_137], %197 {strides = array<i32>} : memref<8x128x256xf32, #tpu.memory_space<vmem>>, vector<1x8x256xf32>,
    %c0_138 = arith.constant 0 : index
    %c3 = arith.constant 3 : index
    %c0_139 = arith.constant 0 : index
    %c0_140 = arith.constant 0 : index
    %198 = vector.load %arg2[%c0_138, %c3, %c0_139, %c0_140] : memref<1x8x8x384xf32, #tpu.memory_space<vmem>>, vector<1x1x8x384xf32>
    %199 = vector.shape_cast %198 : vector<1x1x8x384xf32> to vector<8x384xf32>
    %200 = vector.extract_strided_slice %199 {offsets = [0, 128], sizes = [8, 256], strides = [1, 1]} : vector<8x384xf32> to vector<8x256xf32>
    %c3_141 = arith.constant 3 : index
    %c0_142 = arith.constant 0 : index
    %c0_143 = arith.constant 0 : index
    %201 = vector.load %arg3[%c3_141, %c0_142, %c0_143] : memref<8x128x256xf32, #tpu.memory_space<vmem>>, vector<1x8x256xf32>
    %202 = vector.shape_cast %201 : vector<1x8x256xf32> to vector<8x256xf32>
    %203 = vector.shape_cast %200 : vector<8x256xf32> to vector<1x8x256xf32>
    tpu.vector_store %arg3[%c3_141, %c0_142, %c0_143], %203 {strides = array<i32>} : memref<8x128x256xf32, #tpu.memory_space<vmem>>, vector<1x8x256xf32>,
    %204 = vector.extract_strided_slice %199 {offsets = [0, 120], sizes = [8, 256], strides = [1, 1]} : vector<8x384xf32> to vector<8x256xf32>
    %c3_144 = arith.constant 3 : index
    %c8_145 = arith.constant 8 : index
    %c0_146 = arith.constant 0 : index
    %205 = vector.load %arg3[%c3_144, %c8_145, %c0_146] : memref<8x128x256xf32, #tpu.memory_space<vmem>>, vector<1x8x256xf32>
    %206 = vector.shape_cast %205 : vector<1x8x256xf32> to vector<8x256xf32>
    %207 = vector.shape_cast %204 : vector<8x256xf32> to vector<1x8x256xf32>
    tpu.vector_store %arg3[%c3_144, %c8_145, %c0_146], %207 {strides = array<i32>} : memref<8x128x256xf32, #tpu.memory_space<vmem>>, vector<1x8x256xf32>,
    %208 = vector.extract_strided_slice %199 {offsets = [0, 112], sizes = [8, 256], strides = [1, 1]} : vector<8x384xf32> to vector<8x256xf32>
    %c3_147 = arith.constant 3 : index
    %c16_148 = arith.constant 16 : index
    %c0_149 = arith.constant 0 : index
    %209 = vector.load %arg3[%c3_147, %c16_148, %c0_149] : memref<8x128x256xf32, #tpu.memory_space<vmem>>, vector<1x8x256xf32>
    %210 = vector.shape_cast %209 : vector<1x8x256xf32> to vector<8x256xf32>
    %211 = vector.shape_cast %208 : vector<8x256xf32> to vector<1x8x256xf32>
    tpu.vector_store %arg3[%c3_147, %c16_148, %c0_149], %211 {strides = array<i32>} : memref<8x128x256xf32, #tpu.memory_space<vmem>>, vector<1x8x256xf32>,
    %212 = vector.extract_strided_slice %199 {offsets = [0, 104], sizes = [8, 256], strides = [1, 1]} : vector<8x384xf32> to vector<8x256xf32>
    %c3_150 = arith.constant 3 : index
    %c24_151 = arith.constant 24 : index
    %c0_152 = arith.constant 0 : index
    %213 = vector.load %arg3[%c3_150, %c24_151, %c0_152] : memref<8x128x256xf32, #tpu.memory_space<vmem>>, vector<1x8x256xf32>
    %214 = vector.shape_cast %213 : vector<1x8x256xf32> to vector<8x256xf32>
    %215 = vector.shape_cast %212 : vector<8x256xf32> to vector<1x8x256xf32>
    tpu.vector_store %arg3[%c3_150, %c24_151, %c0_152], %215 {strides = array<i32>} : memref<8x128x256xf32, #tpu.memory_space<vmem>>, vector<1x8x256xf32>,
    %216 = vector.extract_strided_slice %199 {offsets = [0, 96], sizes = [8, 256], strides = [1, 1]} : vector<8x384xf32> to vector<8x256xf32>
    %c3_153 = arith.constant 3 : index
    %c32_154 = arith.constant 32 : index
    %c0_155 = arith.constant 0 : index
    %217 = vector.load %arg3[%c3_153, %c32_154, %c0_155] : memref<8x128x256xf32, #tpu.memory_space<vmem>>, vector<1x8x256xf32>
    %218 = vector.shape_cast %217 : vector<1x8x256xf32> to vector<8x256xf32>
    %219 = vector.shape_cast %216 : vector<8x256xf32> to vector<1x8x256xf32>
    tpu.vector_store %arg3[%c3_153, %c32_154, %c0_155], %219 {strides = array<i32>} : memref<8x128x256xf32, #tpu.memory_space<vmem>>, vector<1x8x256xf32>,
    %220 = vector.extract_strided_slice %199 {offsets = [0, 88], sizes = [8, 256], strides = [1, 1]} : vector<8x384xf32> to vector<8x256xf32>
    %c3_156 = arith.constant 3 : index
    %c40_157 = arith.constant 40 : index
    %c0_158 = arith.constant 0 : index
    %221 = vector.load %arg3[%c3_156, %c40_157, %c0_158] : memref<8x128x256xf32, #tpu.memory_space<vmem>>, vector<1x8x256xf32>
    %222 = vector.shape_cast %221 : vector<1x8x256xf32> to vector<8x256xf32>
    %223 = vector.shape_cast %220 : vector<8x256xf32> to vector<1x8x256xf32>
    tpu.vector_store %arg3[%c3_156, %c40_157, %c0_158], %223 {strides = array<i32>} : memref<8x128x256xf32, #tpu.memory_space<vmem>>, vector<1x8x256xf32>,
    %224 = vector.extract_strided_slice %199 {offsets = [0, 80], sizes = [8, 256], strides = [1, 1]} : vector<8x384xf32> to vector<8x256xf32>
    %c3_159 = arith.constant 3 : index
    %c48_160 = arith.constant 48 : index
    %c0_161 = arith.constant 0 : index
    %225 = vector.load %arg3[%c3_159, %c48_160, %c0_161] : memref<8x128x256xf32, #tpu.memory_space<vmem>>, vector<1x8x256xf32>
    %226 = vector.shape_cast %225 : vector<1x8x256xf32> to vector<8x256xf32>
    %227 = vector.shape_cast %224 : vector<8x256xf32> to vector<1x8x256xf32>
    tpu.vector_store %arg3[%c3_159, %c48_160, %c0_161], %227 {strides = array<i32>} : memref<8x128x256xf32, #tpu.memory_space<vmem>>, vector<1x8x256xf32>,
    %228 = vector.extract_strided_slice %199 {offsets = [0, 72], sizes = [8, 256], strides = [1, 1]} : vector<8x384xf32> to vector<8x256xf32>
    %c3_162 = arith.constant 3 : index
    %c56_163 = arith.constant 56 : index
    %c0_164 = arith.constant 0 : index
    %229 = vector.load %arg3[%c3_162, %c56_163, %c0_164] : memref<8x128x256xf32, #tpu.memory_space<vmem>>, vector<1x8x256xf32>
    %230 = vector.shape_cast %229 : vector<1x8x256xf32> to vector<8x256xf32>
    %231 = vector.shape_cast %228 : vector<8x256xf32> to vector<1x8x256xf32>
    tpu.vector_store %arg3[%c3_162, %c56_163, %c0_164], %231 {strides = array<i32>} : memref<8x128x256xf32, #tpu.memory_space<vmem>>, vector<1x8x256xf32>,
    %232 = vector.extract_strided_slice %199 {offsets = [0, 64], sizes = [8, 256], strides = [1, 1]} : vector<8x384xf32> to vector<8x256xf32>
    %c3_165 = arith.constant 3 : index
    %c64_166 = arith.constant 64 : index
    %c0_167 = arith.constant 0 : index
    %233 = vector.load %arg3[%c3_165, %c64_166, %c0_167] : memref<8x128x256xf32, #tpu.memory_space<vmem>>, vector<1x8x256xf32>
    %234 = vector.shape_cast %233 : vector<1x8x256xf32> to vector<8x256xf32>
    %235 = vector.shape_cast %232 : vector<8x256xf32> to vector<1x8x256xf32>
    tpu.vector_store %arg3[%c3_165, %c64_166, %c0_167], %235 {strides = array<i32>} : memref<8x128x256xf32, #tpu.memory_space<vmem>>, vector<1x8x256xf32>,
    %236 = vector.extract_strided_slice %199 {offsets = [0, 56], sizes = [8, 256], strides = [1, 1]} : vector<8x384xf32> to vector<8x256xf32>
    %c3_168 = arith.constant 3 : index
    %c72_169 = arith.constant 72 : index
    %c0_170 = arith.constant 0 : index
    %237 = vector.load %arg3[%c3_168, %c72_169, %c0_170] : memref<8x128x256xf32, #tpu.memory_space<vmem>>, vector<1x8x256xf32>
    %238 = vector.shape_cast %237 : vector<1x8x256xf32> to vector<8x256xf32>
    %239 = vector.shape_cast %236 : vector<8x256xf32> to vector<1x8x256xf32>
    tpu.vector_store %arg3[%c3_168, %c72_169, %c0_170], %239 {strides = array<i32>} : memref<8x128x256xf32, #tpu.memory_space<vmem>>, vector<1x8x256xf32>,
    %240 = vector.extract_strided_slice %199 {offsets = [0, 48], sizes = [8, 256], strides = [1, 1]} : vector<8x384xf32> to vector<8x256xf32>
    %c3_171 = arith.constant 3 : index
    %c80_172 = arith.constant 80 : index
    %c0_173 = arith.constant 0 : index
    %241 = vector.load %arg3[%c3_171, %c80_172, %c0_173] : memref<8x128x256xf32, #tpu.memory_space<vmem>>, vector<1x8x256xf32>
    %242 = vector.shape_cast %241 : vector<1x8x256xf32> to vector<8x256xf32>
    %243 = vector.shape_cast %240 : vector<8x256xf32> to vector<1x8x256xf32>
    tpu.vector_store %arg3[%c3_171, %c80_172, %c0_173], %243 {strides = array<i32>} : memref<8x128x256xf32, #tpu.memory_space<vmem>>, vector<1x8x256xf32>,
    %244 = vector.extract_strided_slice %199 {offsets = [0, 40], sizes = [8, 256], strides = [1, 1]} : vector<8x384xf32> to vector<8x256xf32>
    %c3_174 = arith.constant 3 : index
    %c88_175 = arith.constant 88 : index
    %c0_176 = arith.constant 0 : index
    %245 = vector.load %arg3[%c3_174, %c88_175, %c0_176] : memref<8x128x256xf32, #tpu.memory_space<vmem>>, vector<1x8x256xf32>
    %246 = vector.shape_cast %245 : vector<1x8x256xf32> to vector<8x256xf32>
    %247 = vector.shape_cast %244 : vector<8x256xf32> to vector<1x8x256xf32>
    tpu.vector_store %arg3[%c3_174, %c88_175, %c0_176], %247 {strides = array<i32>} : memref<8x128x256xf32, #tpu.memory_space<vmem>>, vector<1x8x256xf32>,
    %248 = vector.extract_strided_slice %199 {offsets = [0, 32], sizes = [8, 256], strides = [1, 1]} : vector<8x384xf32> to vector<8x256xf32>
    %c3_177 = arith.constant 3 : index
    %c96_178 = arith.constant 96 : index
    %c0_179 = arith.constant 0 : index
    %249 = vector.load %arg3[%c3_177, %c96_178, %c0_179] : memref<8x128x256xf32, #tpu.memory_space<vmem>>, vector<1x8x256xf32>
    %250 = vector.shape_cast %249 : vector<1x8x256xf32> to vector<8x256xf32>
    %251 = vector.shape_cast %248 : vector<8x256xf32> to vector<1x8x256xf32>
    tpu.vector_store %arg3[%c3_177, %c96_178, %c0_179], %251 {strides = array<i32>} : memref<8x128x256xf32, #tpu.memory_space<vmem>>, vector<1x8x256xf32>,
    %252 = vector.extract_strided_slice %199 {offsets = [0, 24], sizes = [8, 256], strides = [1, 1]} : vector<8x384xf32> to vector<8x256xf32>
    %c3_180 = arith.constant 3 : index
    %c104_181 = arith.constant 104 : index
    %c0_182 = arith.constant 0 : index
    %253 = vector.load %arg3[%c3_180, %c104_181, %c0_182] : memref<8x128x256xf32, #tpu.memory_space<vmem>>, vector<1x8x256xf32>
    %254 = vector.shape_cast %253 : vector<1x8x256xf32> to vector<8x256xf32>
    %255 = vector.shape_cast %252 : vector<8x256xf32> to vector<1x8x256xf32>
    tpu.vector_store %arg3[%c3_180, %c104_181, %c0_182], %255 {strides = array<i32>} : memref<8x128x256xf32, #tpu.memory_space<vmem>>, vector<1x8x256xf32>,
    %256 = vector.extract_strided_slice %199 {offsets = [0, 16], sizes = [8, 256], strides = [1, 1]} : vector<8x384xf32> to vector<8x256xf32>
    %c3_183 = arith.constant 3 : index
    %c112_184 = arith.constant 112 : index
    %c0_185 = arith.constant 0 : index
    %257 = vector.load %arg3[%c3_183, %c112_184, %c0_185] : memref<8x128x256xf32, #tpu.memory_space<vmem>>, vector<1x8x256xf32>
    %258 = vector.shape_cast %257 : vector<1x8x256xf32> to vector<8x256xf32>
    %259 = vector.shape_cast %256 : vector<8x256xf32> to vector<1x8x256xf32>
    tpu.vector_store %arg3[%c3_183, %c112_184, %c0_185], %259 {strides = array<i32>} : memref<8x128x256xf32, #tpu.memory_space<vmem>>, vector<1x8x256xf32>,
    %260 = vector.extract_strided_slice %199 {offsets = [0, 8], sizes = [8, 256], strides = [1, 1]} : vector<8x384xf32> to vector<8x256xf32>
    %c3_186 = arith.constant 3 : index
    %c120_187 = arith.constant 120 : index
    %c0_188 = arith.constant 0 : index
    %261 = vector.load %arg3[%c3_186, %c120_187, %c0_188] : memref<8x128x256xf32, #tpu.memory_space<vmem>>, vector<1x8x256xf32>
    %262 = vector.shape_cast %261 : vector<1x8x256xf32> to vector<8x256xf32>
    %263 = vector.shape_cast %260 : vector<8x256xf32> to vector<1x8x256xf32>
    tpu.vector_store %arg3[%c3_186, %c120_187, %c0_188], %263 {strides = array<i32>} : memref<8x128x256xf32, #tpu.memory_space<vmem>>, vector<1x8x256xf32>,
    %c0_189 = arith.constant 0 : index
    %c4 = arith.constant 4 : index
    %c0_190 = arith.constant 0 : index
    %c0_191 = arith.constant 0 : index
    %264 = vector.load %arg2[%c0_189, %c4, %c0_190, %c0_191] : memref<1x8x8x384xf32, #tpu.memory_space<vmem>>, vector<1x1x8x384xf32>
    %265 = vector.shape_cast %264 : vector<1x1x8x384xf32> to vector<8x384xf32>
    %266 = vector.extract_strided_slice %265 {offsets = [0, 128], sizes = [8, 256], strides = [1, 1]} : vector<8x384xf32> to vector<8x256xf32>
    %c4_192 = arith.constant 4 : index
    %c0_193 = arith.constant 0 : index
    %c0_194 = arith.constant 0 : index
    %267 = vector.load %arg3[%c4_192, %c0_193, %c0_194] : memref<8x128x256xf32, #tpu.memory_space<vmem>>, vector<1x8x256xf32>
    %268 = vector.shape_cast %267 : vector<1x8x256xf32> to vector<8x256xf32>
    %269 = vector.shape_cast %266 : vector<8x256xf32> to vector<1x8x256xf32>
    tpu.vector_store %arg3[%c4_192, %c0_193, %c0_194], %269 {strides = array<i32>} : memref<8x128x256xf32, #tpu.memory_space<vmem>>, vector<1x8x256xf32>,
    %270 = vector.extract_strided_slice %265 {offsets = [0, 120], sizes = [8, 256], strides = [1, 1]} : vector<8x384xf32> to vector<8x256xf32>
    %c4_195 = arith.constant 4 : index
    %c8_196 = arith.constant 8 : index
    %c0_197 = arith.constant 0 : index
    %271 = vector.load %arg3[%c4_195, %c8_196, %c0_197] : memref<8x128x256xf32, #tpu.memory_space<vmem>>, vector<1x8x256xf32>
    %272 = vector.shape_cast %271 : vector<1x8x256xf32> to vector<8x256xf32>
    %273 = vector.shape_cast %270 : vector<8x256xf32> to vector<1x8x256xf32>
    tpu.vector_store %arg3[%c4_195, %c8_196, %c0_197], %273 {strides = array<i32>} : memref<8x128x256xf32, #tpu.memory_space<vmem>>, vector<1x8x256xf32>,
    %274 = vector.extract_strided_slice %265 {offsets = [0, 112], sizes = [8, 256], strides = [1, 1]} : vector<8x384xf32> to vector<8x256xf32>
    %c4_198 = arith.constant 4 : index
    %c16_199 = arith.constant 16 : index
    %c0_200 = arith.constant 0 : index
    %275 = vector.load %arg3[%c4_198, %c16_199, %c0_200] : memref<8x128x256xf32, #tpu.memory_space<vmem>>, vector<1x8x256xf32>
    %276 = vector.shape_cast %275 : vector<1x8x256xf32> to vector<8x256xf32>
    %277 = vector.shape_cast %274 : vector<8x256xf32> to vector<1x8x256xf32>
    tpu.vector_store %arg3[%c4_198, %c16_199, %c0_200], %277 {strides = array<i32>} : memref<8x128x256xf32, #tpu.memory_space<vmem>>, vector<1x8x256xf32>,
    %278 = vector.extract_strided_slice %265 {offsets = [0, 104], sizes = [8, 256], strides = [1, 1]} : vector<8x384xf32> to vector<8x256xf32>
    %c4_201 = arith.constant 4 : index
    %c24_202 = arith.constant 24 : index
    %c0_203 = arith.constant 0 : index
    %279 = vector.load %arg3[%c4_201, %c24_202, %c0_203] : memref<8x128x256xf32, #tpu.memory_space<vmem>>, vector<1x8x256xf32>
    %280 = vector.shape_cast %279 : vector<1x8x256xf32> to vector<8x256xf32>
    %281 = vector.shape_cast %278 : vector<8x256xf32> to vector<1x8x256xf32>
    tpu.vector_store %arg3[%c4_201, %c24_202, %c0_203], %281 {strides = array<i32>} : memref<8x128x256xf32, #tpu.memory_space<vmem>>, vector<1x8x256xf32>,
    %282 = vector.extract_strided_slice %265 {offsets = [0, 96], sizes = [8, 256], strides = [1, 1]} : vector<8x384xf32> to vector<8x256xf32>
    %c4_204 = arith.constant 4 : index
    %c32_205 = arith.constant 32 : index
    %c0_206 = arith.constant 0 : index
    %283 = vector.load %arg3[%c4_204, %c32_205, %c0_206] : memref<8x128x256xf32, #tpu.memory_space<vmem>>, vector<1x8x256xf32>
    %284 = vector.shape_cast %283 : vector<1x8x256xf32> to vector<8x256xf32>
    %285 = vector.shape_cast %282 : vector<8x256xf32> to vector<1x8x256xf32>
    tpu.vector_store %arg3[%c4_204, %c32_205, %c0_206], %285 {strides = array<i32>} : memref<8x128x256xf32, #tpu.memory_space<vmem>>, vector<1x8x256xf32>,
    %286 = vector.extract_strided_slice %265 {offsets = [0, 88], sizes = [8, 256], strides = [1, 1]} : vector<8x384xf32> to vector<8x256xf32>
    %c4_207 = arith.constant 4 : index
    %c40_208 = arith.constant 40 : index
    %c0_209 = arith.constant 0 : index
    %287 = vector.load %arg3[%c4_207, %c40_208, %c0_209] : memref<8x128x256xf32, #tpu.memory_space<vmem>>, vector<1x8x256xf32>
    %288 = vector.shape_cast %287 : vector<1x8x256xf32> to vector<8x256xf32>
    %289 = vector.shape_cast %286 : vector<8x256xf32> to vector<1x8x256xf32>
    tpu.vector_store %arg3[%c4_207, %c40_208, %c0_209], %289 {strides = array<i32>} : memref<8x128x256xf32, #tpu.memory_space<vmem>>, vector<1x8x256xf32>,
    %290 = vector.extract_strided_slice %265 {offsets = [0, 80], sizes = [8, 256], strides = [1, 1]} : vector<8x384xf32> to vector<8x256xf32>
    %c4_210 = arith.constant 4 : index
    %c48_211 = arith.constant 48 : index
    %c0_212 = arith.constant 0 : index
    %291 = vector.load %arg3[%c4_210, %c48_211, %c0_212] : memref<8x128x256xf32, #tpu.memory_space<vmem>>, vector<1x8x256xf32>
    %292 = vector.shape_cast %291 : vector<1x8x256xf32> to vector<8x256xf32>
    %293 = vector.shape_cast %290 : vector<8x256xf32> to vector<1x8x256xf32>
    tpu.vector_store %arg3[%c4_210, %c48_211, %c0_212], %293 {strides = array<i32>} : memref<8x128x256xf32, #tpu.memory_space<vmem>>, vector<1x8x256xf32>,
    %294 = vector.extract_strided_slice %265 {offsets = [0, 72], sizes = [8, 256], strides = [1, 1]} : vector<8x384xf32> to vector<8x256xf32>
    %c4_213 = arith.constant 4 : index
    %c56_214 = arith.constant 56 : index
    %c0_215 = arith.constant 0 : index
    %295 = vector.load %arg3[%c4_213, %c56_214, %c0_215] : memref<8x128x256xf32, #tpu.memory_space<vmem>>, vector<1x8x256xf32>
    %296 = vector.shape_cast %295 : vector<1x8x256xf32> to vector<8x256xf32>
    %297 = vector.shape_cast %294 : vector<8x256xf32> to vector<1x8x256xf32>
    tpu.vector_store %arg3[%c4_213, %c56_214, %c0_215], %297 {strides = array<i32>} : memref<8x128x256xf32, #tpu.memory_space<vmem>>, vector<1x8x256xf32>,
    %298 = vector.extract_strided_slice %265 {offsets = [0, 64], sizes = [8, 256], strides = [1, 1]} : vector<8x384xf32> to vector<8x256xf32>
    %c4_216 = arith.constant 4 : index
    %c64_217 = arith.constant 64 : index
    %c0_218 = arith.constant 0 : index
    %299 = vector.load %arg3[%c4_216, %c64_217, %c0_218] : memref<8x128x256xf32, #tpu.memory_space<vmem>>, vector<1x8x256xf32>
    %300 = vector.shape_cast %299 : vector<1x8x256xf32> to vector<8x256xf32>
    %301 = vector.shape_cast %298 : vector<8x256xf32> to vector<1x8x256xf32>
    tpu.vector_store %arg3[%c4_216, %c64_217, %c0_218], %301 {strides = array<i32>} : memref<8x128x256xf32, #tpu.memory_space<vmem>>, vector<1x8x256xf32>,
    %302 = vector.extract_strided_slice %265 {offsets = [0, 56], sizes = [8, 256], strides = [1, 1]} : vector<8x384xf32> to vector<8x256xf32>
    %c4_219 = arith.constant 4 : index
    %c72_220 = arith.constant 72 : index
    %c0_221 = arith.constant 0 : index
    %303 = vector.load %arg3[%c4_219, %c72_220, %c0_221] : memref<8x128x256xf32, #tpu.memory_space<vmem>>, vector<1x8x256xf32>
    %304 = vector.shape_cast %303 : vector<1x8x256xf32> to vector<8x256xf32>
    %305 = vector.shape_cast %302 : vector<8x256xf32> to vector<1x8x256xf32>
    tpu.vector_store %arg3[%c4_219, %c72_220, %c0_221], %305 {strides = array<i32>} : memref<8x128x256xf32, #tpu.memory_space<vmem>>, vector<1x8x256xf32>,
    %306 = vector.extract_strided_slice %265 {offsets = [0, 48], sizes = [8, 256], strides = [1, 1]} : vector<8x384xf32> to vector<8x256xf32>
    %c4_222 = arith.constant 4 : index
    %c80_223 = arith.constant 80 : index
    %c0_224 = arith.constant 0 : index
    %307 = vector.load %arg3[%c4_222, %c80_223, %c0_224] : memref<8x128x256xf32, #tpu.memory_space<vmem>>, vector<1x8x256xf32>
    %308 = vector.shape_cast %307 : vector<1x8x256xf32> to vector<8x256xf32>
    %309 = vector.shape_cast %306 : vector<8x256xf32> to vector<1x8x256xf32>
    tpu.vector_store %arg3[%c4_222, %c80_223, %c0_224], %309 {strides = array<i32>} : memref<8x128x256xf32, #tpu.memory_space<vmem>>, vector<1x8x256xf32>,
    %310 = vector.extract_strided_slice %265 {offsets = [0, 40], sizes = [8, 256], strides = [1, 1]} : vector<8x384xf32> to vector<8x256xf32>
    %c4_225 = arith.constant 4 : index
    %c88_226 = arith.constant 88 : index
    %c0_227 = arith.constant 0 : index
    %311 = vector.load %arg3[%c4_225, %c88_226, %c0_227] : memref<8x128x256xf32, #tpu.memory_space<vmem>>, vector<1x8x256xf32>
    %312 = vector.shape_cast %311 : vector<1x8x256xf32> to vector<8x256xf32>
    %313 = vector.shape_cast %310 : vector<8x256xf32> to vector<1x8x256xf32>
    tpu.vector_store %arg3[%c4_225, %c88_226, %c0_227], %313 {strides = array<i32>} : memref<8x128x256xf32, #tpu.memory_space<vmem>>, vector<1x8x256xf32>,
    %314 = vector.extract_strided_slice %265 {offsets = [0, 32], sizes = [8, 256], strides = [1, 1]} : vector<8x384xf32> to vector<8x256xf32>
    %c4_228 = arith.constant 4 : index
    %c96_229 = arith.constant 96 : index
    %c0_230 = arith.constant 0 : index
    %315 = vector.load %arg3[%c4_228, %c96_229, %c0_230] : memref<8x128x256xf32, #tpu.memory_space<vmem>>, vector<1x8x256xf32>
    %316 = vector.shape_cast %315 : vector<1x8x256xf32> to vector<8x256xf32>
    %317 = vector.shape_cast %314 : vector<8x256xf32> to vector<1x8x256xf32>
    tpu.vector_store %arg3[%c4_228, %c96_229, %c0_230], %317 {strides = array<i32>} : memref<8x128x256xf32, #tpu.memory_space<vmem>>, vector<1x8x256xf32>,
    %318 = vector.extract_strided_slice %265 {offsets = [0, 24], sizes = [8, 256], strides = [1, 1]} : vector<8x384xf32> to vector<8x256xf32>
    %c4_231 = arith.constant 4 : index
    %c104_232 = arith.constant 104 : index
    %c0_233 = arith.constant 0 : index
    %319 = vector.load %arg3[%c4_231, %c104_232, %c0_233] : memref<8x128x256xf32, #tpu.memory_space<vmem>>, vector<1x8x256xf32>
    %320 = vector.shape_cast %319 : vector<1x8x256xf32> to vector<8x256xf32>
    %321 = vector.shape_cast %318 : vector<8x256xf32> to vector<1x8x256xf32>
    tpu.vector_store %arg3[%c4_231, %c104_232, %c0_233], %321 {strides = array<i32>} : memref<8x128x256xf32, #tpu.memory_space<vmem>>, vector<1x8x256xf32>,
    %322 = vector.extract_strided_slice %265 {offsets = [0, 16], sizes = [8, 256], strides = [1, 1]} : vector<8x384xf32> to vector<8x256xf32>
    %c4_234 = arith.constant 4 : index
    %c112_235 = arith.constant 112 : index
    %c0_236 = arith.constant 0 : index
    %323 = vector.load %arg3[%c4_234, %c112_235, %c0_236] : memref<8x128x256xf32, #tpu.memory_space<vmem>>, vector<1x8x256xf32>
    %324 = vector.shape_cast %323 : vector<1x8x256xf32> to vector<8x256xf32>
    %325 = vector.shape_cast %322 : vector<8x256xf32> to vector<1x8x256xf32>
    tpu.vector_store %arg3[%c4_234, %c112_235, %c0_236], %325 {strides = array<i32>} : memref<8x128x256xf32, #tpu.memory_space<vmem>>, vector<1x8x256xf32>,
    %326 = vector.extract_strided_slice %265 {offsets = [0, 8], sizes = [8, 256], strides = [1, 1]} : vector<8x384xf32> to vector<8x256xf32>
    %c4_237 = arith.constant 4 : index
    %c120_238 = arith.constant 120 : index
    %c0_239 = arith.constant 0 : index
    %327 = vector.load %arg3[%c4_237, %c120_238, %c0_239] : memref<8x128x256xf32, #tpu.memory_space<vmem>>, vector<1x8x256xf32>
    %328 = vector.shape_cast %327 : vector<1x8x256xf32> to vector<8x256xf32>
    %329 = vector.shape_cast %326 : vector<8x256xf32> to vector<1x8x256xf32>
    tpu.vector_store %arg3[%c4_237, %c120_238, %c0_239], %329 {strides = array<i32>} : memref<8x128x256xf32, #tpu.memory_space<vmem>>, vector<1x8x256xf32>,
    %c0_240 = arith.constant 0 : index
    %c5 = arith.constant 5 : index
    %c0_241 = arith.constant 0 : index
    %c0_242 = arith.constant 0 : index
    %330 = vector.load %arg2[%c0_240, %c5, %c0_241, %c0_242] : memref<1x8x8x384xf32, #tpu.memory_space<vmem>>, vector<1x1x8x384xf32>
    %331 = vector.shape_cast %330 : vector<1x1x8x384xf32> to vector<8x384xf32>
    %332 = vector.extract_strided_slice %331 {offsets = [0, 128], sizes = [8, 256], strides = [1, 1]} : vector<8x384xf32> to vector<8x256xf32>
    %c5_243 = arith.constant 5 : index
    %c0_244 = arith.constant 0 : index
    %c0_245 = arith.constant 0 : index
    %333 = vector.load %arg3[%c5_243, %c0_244, %c0_245] : memref<8x128x256xf32, #tpu.memory_space<vmem>>, vector<1x8x256xf32>
    %334 = vector.shape_cast %333 : vector<1x8x256xf32> to vector<8x256xf32>
    %335 = vector.shape_cast %332 : vector<8x256xf32> to vector<1x8x256xf32>
    tpu.vector_store %arg3[%c5_243, %c0_244, %c0_245], %335 {strides = array<i32>} : memref<8x128x256xf32, #tpu.memory_space<vmem>>, vector<1x8x256xf32>,
    %336 = vector.extract_strided_slice %331 {offsets = [0, 120], sizes = [8, 256], strides = [1, 1]} : vector<8x384xf32> to vector<8x256xf32>
    %c5_246 = arith.constant 5 : index
    %c8_247 = arith.constant 8 : index
    %c0_248 = arith.constant 0 : index
    %337 = vector.load %arg3[%c5_246, %c8_247, %c0_248] : memref<8x128x256xf32, #tpu.memory_space<vmem>>, vector<1x8x256xf32>
    %338 = vector.shape_cast %337 : vector<1x8x256xf32> to vector<8x256xf32>
    %339 = vector.shape_cast %336 : vector<8x256xf32> to vector<1x8x256xf32>
    tpu.vector_store %arg3[%c5_246, %c8_247, %c0_248], %339 {strides = array<i32>} : memref<8x128x256xf32, #tpu.memory_space<vmem>>, vector<1x8x256xf32>,
    %340 = vector.extract_strided_slice %331 {offsets = [0, 112], sizes = [8, 256], strides = [1, 1]} : vector<8x384xf32> to vector<8x256xf32>
    %c5_249 = arith.constant 5 : index
    %c16_250 = arith.constant 16 : index
    %c0_251 = arith.constant 0 : index
    %341 = vector.load %arg3[%c5_249, %c16_250, %c0_251] : memref<8x128x256xf32, #tpu.memory_space<vmem>>, vector<1x8x256xf32>
    %342 = vector.shape_cast %341 : vector<1x8x256xf32> to vector<8x256xf32>
    %343 = vector.shape_cast %340 : vector<8x256xf32> to vector<1x8x256xf32>
    tpu.vector_store %arg3[%c5_249, %c16_250, %c0_251], %343 {strides = array<i32>} : memref<8x128x256xf32, #tpu.memory_space<vmem>>, vector<1x8x256xf32>,
    %344 = vector.extract_strided_slice %331 {offsets = [0, 104], sizes = [8, 256], strides = [1, 1]} : vector<8x384xf32> to vector<8x256xf32>
    %c5_252 = arith.constant 5 : index
    %c24_253 = arith.constant 24 : index
    %c0_254 = arith.constant 0 : index
    %345 = vector.load %arg3[%c5_252, %c24_253, %c0_254] : memref<8x128x256xf32, #tpu.memory_space<vmem>>, vector<1x8x256xf32>
    %346 = vector.shape_cast %345 : vector<1x8x256xf32> to vector<8x256xf32>
    %347 = vector.shape_cast %344 : vector<8x256xf32> to vector<1x8x256xf32>
    tpu.vector_store %arg3[%c5_252, %c24_253, %c0_254], %347 {strides = array<i32>} : memref<8x128x256xf32, #tpu.memory_space<vmem>>, vector<1x8x256xf32>,
    %348 = vector.extract_strided_slice %331 {offsets = [0, 96], sizes = [8, 256], strides = [1, 1]} : vector<8x384xf32> to vector<8x256xf32>
    %c5_255 = arith.constant 5 : index
    %c32_256 = arith.constant 32 : index
    %c0_257 = arith.constant 0 : index
    %349 = vector.load %arg3[%c5_255, %c32_256, %c0_257] : memref<8x128x256xf32, #tpu.memory_space<vmem>>, vector<1x8x256xf32>
    %350 = vector.shape_cast %349 : vector<1x8x256xf32> to vector<8x256xf32>
    %351 = vector.shape_cast %348 : vector<8x256xf32> to vector<1x8x256xf32>
    tpu.vector_store %arg3[%c5_255, %c32_256, %c0_257], %351 {strides = array<i32>} : memref<8x128x256xf32, #tpu.memory_space<vmem>>, vector<1x8x256xf32>,
    %352 = vector.extract_strided_slice %331 {offsets = [0, 88], sizes = [8, 256], strides = [1, 1]} : vector<8x384xf32> to vector<8x256xf32>
    %c5_258 = arith.constant 5 : index
    %c40_259 = arith.constant 40 : index
    %c0_260 = arith.constant 0 : index
    %353 = vector.load %arg3[%c5_258, %c40_259, %c0_260] : memref<8x128x256xf32, #tpu.memory_space<vmem>>, vector<1x8x256xf32>
    %354 = vector.shape_cast %353 : vector<1x8x256xf32> to vector<8x256xf32>
    %355 = vector.shape_cast %352 : vector<8x256xf32> to vector<1x8x256xf32>
    tpu.vector_store %arg3[%c5_258, %c40_259, %c0_260], %355 {strides = array<i32>} : memref<8x128x256xf32, #tpu.memory_space<vmem>>, vector<1x8x256xf32>,
    %356 = vector.extract_strided_slice %331 {offsets = [0, 80], sizes = [8, 256], strides = [1, 1]} : vector<8x384xf32> to vector<8x256xf32>
    %c5_261 = arith.constant 5 : index
    %c48_262 = arith.constant 48 : index
    %c0_263 = arith.constant 0 : index
    %357 = vector.load %arg3[%c5_261, %c48_262, %c0_263] : memref<8x128x256xf32, #tpu.memory_space<vmem>>, vector<1x8x256xf32>
    %358 = vector.shape_cast %357 : vector<1x8x256xf32> to vector<8x256xf32>
    %359 = vector.shape_cast %356 : vector<8x256xf32> to vector<1x8x256xf32>
    tpu.vector_store %arg3[%c5_261, %c48_262, %c0_263], %359 {strides = array<i32>} : memref<8x128x256xf32, #tpu.memory_space<vmem>>, vector<1x8x256xf32>,
    %360 = vector.extract_strided_slice %331 {offsets = [0, 72], sizes = [8, 256], strides = [1, 1]} : vector<8x384xf32> to vector<8x256xf32>
    %c5_264 = arith.constant 5 : index
    %c56_265 = arith.constant 56 : index
    %c0_266 = arith.constant 0 : index
    %361 = vector.load %arg3[%c5_264, %c56_265, %c0_266] : memref<8x128x256xf32, #tpu.memory_space<vmem>>, vector<1x8x256xf32>
    %362 = vector.shape_cast %361 : vector<1x8x256xf32> to vector<8x256xf32>
    %363 = vector.shape_cast %360 : vector<8x256xf32> to vector<1x8x256xf32>
    tpu.vector_store %arg3[%c5_264, %c56_265, %c0_266], %363 {strides = array<i32>} : memref<8x128x256xf32, #tpu.memory_space<vmem>>, vector<1x8x256xf32>,
    %364 = vector.extract_strided_slice %331 {offsets = [0, 64], sizes = [8, 256], strides = [1, 1]} : vector<8x384xf32> to vector<8x256xf32>
    %c5_267 = arith.constant 5 : index
    %c64_268 = arith.constant 64 : index
    %c0_269 = arith.constant 0 : index
    %365 = vector.load %arg3[%c5_267, %c64_268, %c0_269] : memref<8x128x256xf32, #tpu.memory_space<vmem>>, vector<1x8x256xf32>
    %366 = vector.shape_cast %365 : vector<1x8x256xf32> to vector<8x256xf32>
    %367 = vector.shape_cast %364 : vector<8x256xf32> to vector<1x8x256xf32>
    tpu.vector_store %arg3[%c5_267, %c64_268, %c0_269], %367 {strides = array<i32>} : memref<8x128x256xf32, #tpu.memory_space<vmem>>, vector<1x8x256xf32>,
    %368 = vector.extract_strided_slice %331 {offsets = [0, 56], sizes = [8, 256], strides = [1, 1]} : vector<8x384xf32> to vector<8x256xf32>
    %c5_270 = arith.constant 5 : index
    %c72_271 = arith.constant 72 : index
    %c0_272 = arith.constant 0 : index
    %369 = vector.load %arg3[%c5_270, %c72_271, %c0_272] : memref<8x128x256xf32, #tpu.memory_space<vmem>>, vector<1x8x256xf32>
    %370 = vector.shape_cast %369 : vector<1x8x256xf32> to vector<8x256xf32>
    %371 = vector.shape_cast %368 : vector<8x256xf32> to vector<1x8x256xf32>
    tpu.vector_store %arg3[%c5_270, %c72_271, %c0_272], %371 {strides = array<i32>} : memref<8x128x256xf32, #tpu.memory_space<vmem>>, vector<1x8x256xf32>,
    %372 = vector.extract_strided_slice %331 {offsets = [0, 48], sizes = [8, 256], strides = [1, 1]} : vector<8x384xf32> to vector<8x256xf32>
    %c5_273 = arith.constant 5 : index
    %c80_274 = arith.constant 80 : index
    %c0_275 = arith.constant 0 : index
    %373 = vector.load %arg3[%c5_273, %c80_274, %c0_275] : memref<8x128x256xf32, #tpu.memory_space<vmem>>, vector<1x8x256xf32>
    %374 = vector.shape_cast %373 : vector<1x8x256xf32> to vector<8x256xf32>
    %375 = vector.shape_cast %372 : vector<8x256xf32> to vector<1x8x256xf32>
    tpu.vector_store %arg3[%c5_273, %c80_274, %c0_275], %375 {strides = array<i32>} : memref<8x128x256xf32, #tpu.memory_space<vmem>>, vector<1x8x256xf32>,
    %376 = vector.extract_strided_slice %331 {offsets = [0, 40], sizes = [8, 256], strides = [1, 1]} : vector<8x384xf32> to vector<8x256xf32>
    %c5_276 = arith.constant 5 : index
    %c88_277 = arith.constant 88 : index
    %c0_278 = arith.constant 0 : index
    %377 = vector.load %arg3[%c5_276, %c88_277, %c0_278] : memref<8x128x256xf32, #tpu.memory_space<vmem>>, vector<1x8x256xf32>
    %378 = vector.shape_cast %377 : vector<1x8x256xf32> to vector<8x256xf32>
    %379 = vector.shape_cast %376 : vector<8x256xf32> to vector<1x8x256xf32>
    tpu.vector_store %arg3[%c5_276, %c88_277, %c0_278], %379 {strides = array<i32>} : memref<8x128x256xf32, #tpu.memory_space<vmem>>, vector<1x8x256xf32>,
    %380 = vector.extract_strided_slice %331 {offsets = [0, 32], sizes = [8, 256], strides = [1, 1]} : vector<8x384xf32> to vector<8x256xf32>
    %c5_279 = arith.constant 5 : index
    %c96_280 = arith.constant 96 : index
    %c0_281 = arith.constant 0 : index
    %381 = vector.load %arg3[%c5_279, %c96_280, %c0_281] : memref<8x128x256xf32, #tpu.memory_space<vmem>>, vector<1x8x256xf32>
    %382 = vector.shape_cast %381 : vector<1x8x256xf32> to vector<8x256xf32>
    %383 = vector.shape_cast %380 : vector<8x256xf32> to vector<1x8x256xf32>
    tpu.vector_store %arg3[%c5_279, %c96_280, %c0_281], %383 {strides = array<i32>} : memref<8x128x256xf32, #tpu.memory_space<vmem>>, vector<1x8x256xf32>,
    %384 = vector.extract_strided_slice %331 {offsets = [0, 24], sizes = [8, 256], strides = [1, 1]} : vector<8x384xf32> to vector<8x256xf32>
    %c5_282 = arith.constant 5 : index
    %c104_283 = arith.constant 104 : index
    %c0_284 = arith.constant 0 : index
    %385 = vector.load %arg3[%c5_282, %c104_283, %c0_284] : memref<8x128x256xf32, #tpu.memory_space<vmem>>, vector<1x8x256xf32>
    %386 = vector.shape_cast %385 : vector<1x8x256xf32> to vector<8x256xf32>
    %387 = vector.shape_cast %384 : vector<8x256xf32> to vector<1x8x256xf32>
    tpu.vector_store %arg3[%c5_282, %c104_283, %c0_284], %387 {strides = array<i32>} : memref<8x128x256xf32, #tpu.memory_space<vmem>>, vector<1x8x256xf32>,
    %388 = vector.extract_strided_slice %331 {offsets = [0, 16], sizes = [8, 256], strides = [1, 1]} : vector<8x384xf32> to vector<8x256xf32>
    %c5_285 = arith.constant 5 : index
    %c112_286 = arith.constant 112 : index
    %c0_287 = arith.constant 0 : index
    %389 = vector.load %arg3[%c5_285, %c112_286, %c0_287] : memref<8x128x256xf32, #tpu.memory_space<vmem>>, vector<1x8x256xf32>
    %390 = vector.shape_cast %389 : vector<1x8x256xf32> to vector<8x256xf32>
    %391 = vector.shape_cast %388 : vector<8x256xf32> to vector<1x8x256xf32>
    tpu.vector_store %arg3[%c5_285, %c112_286, %c0_287], %391 {strides = array<i32>} : memref<8x128x256xf32, #tpu.memory_space<vmem>>, vector<1x8x256xf32>,
    %392 = vector.extract_strided_slice %331 {offsets = [0, 8], sizes = [8, 256], strides = [1, 1]} : vector<8x384xf32> to vector<8x256xf32>
    %c5_288 = arith.constant 5 : index
    %c120_289 = arith.constant 120 : index
    %c0_290 = arith.constant 0 : index
    %393 = vector.load %arg3[%c5_288, %c120_289, %c0_290] : memref<8x128x256xf32, #tpu.memory_space<vmem>>, vector<1x8x256xf32>
    %394 = vector.shape_cast %393 : vector<1x8x256xf32> to vector<8x256xf32>
    %395 = vector.shape_cast %392 : vector<8x256xf32> to vector<1x8x256xf32>
    tpu.vector_store %arg3[%c5_288, %c120_289, %c0_290], %395 {strides = array<i32>} : memref<8x128x256xf32, #tpu.memory_space<vmem>>, vector<1x8x256xf32>,
    %c0_291 = arith.constant 0 : index
    %c6 = arith.constant 6 : index
    %c0_292 = arith.constant 0 : index
    %c0_293 = arith.constant 0 : index
    %396 = vector.load %arg2[%c0_291, %c6, %c0_292, %c0_293] : memref<1x8x8x384xf32, #tpu.memory_space<vmem>>, vector<1x1x8x384xf32>
    %397 = vector.shape_cast %396 : vector<1x1x8x384xf32> to vector<8x384xf32>
    %398 = vector.extract_strided_slice %397 {offsets = [0, 128], sizes = [8, 256], strides = [1, 1]} : vector<8x384xf32> to vector<8x256xf32>
    %c6_294 = arith.constant 6 : index
    %c0_295 = arith.constant 0 : index
    %c0_296 = arith.constant 0 : index
    %399 = vector.load %arg3[%c6_294, %c0_295, %c0_296] : memref<8x128x256xf32, #tpu.memory_space<vmem>>, vector<1x8x256xf32>
    %400 = vector.shape_cast %399 : vector<1x8x256xf32> to vector<8x256xf32>
    %401 = vector.shape_cast %398 : vector<8x256xf32> to vector<1x8x256xf32>
    tpu.vector_store %arg3[%c6_294, %c0_295, %c0_296], %401 {strides = array<i32>} : memref<8x128x256xf32, #tpu.memory_space<vmem>>, vector<1x8x256xf32>,
    %402 = vector.extract_strided_slice %397 {offsets = [0, 120], sizes = [8, 256], strides = [1, 1]} : vector<8x384xf32> to vector<8x256xf32>
    %c6_297 = arith.constant 6 : index
    %c8_298 = arith.constant 8 : index
    %c0_299 = arith.constant 0 : index
    %403 = vector.load %arg3[%c6_297, %c8_298, %c0_299] : memref<8x128x256xf32, #tpu.memory_space<vmem>>, vector<1x8x256xf32>
    %404 = vector.shape_cast %403 : vector<1x8x256xf32> to vector<8x256xf32>
    %405 = vector.shape_cast %402 : vector<8x256xf32> to vector<1x8x256xf32>
    tpu.vector_store %arg3[%c6_297, %c8_298, %c0_299], %405 {strides = array<i32>} : memref<8x128x256xf32, #tpu.memory_space<vmem>>, vector<1x8x256xf32>,
    %406 = vector.extract_strided_slice %397 {offsets = [0, 112], sizes = [8, 256], strides = [1, 1]} : vector<8x384xf32> to vector<8x256xf32>
    %c6_300 = arith.constant 6 : index
    %c16_301 = arith.constant 16 : index
    %c0_302 = arith.constant 0 : index
    %407 = vector.load %arg3[%c6_300, %c16_301, %c0_302] : memref<8x128x256xf32, #tpu.memory_space<vmem>>, vector<1x8x256xf32>
    %408 = vector.shape_cast %407 : vector<1x8x256xf32> to vector<8x256xf32>
    %409 = vector.shape_cast %406 : vector<8x256xf32> to vector<1x8x256xf32>
    tpu.vector_store %arg3[%c6_300, %c16_301, %c0_302], %409 {strides = array<i32>} : memref<8x128x256xf32, #tpu.memory_space<vmem>>, vector<1x8x256xf32>,
    %410 = vector.extract_strided_slice %397 {offsets = [0, 104], sizes = [8, 256], strides = [1, 1]} : vector<8x384xf32> to vector<8x256xf32>
    %c6_303 = arith.constant 6 : index
    %c24_304 = arith.constant 24 : index
    %c0_305 = arith.constant 0 : index
    %411 = vector.load %arg3[%c6_303, %c24_304, %c0_305] : memref<8x128x256xf32, #tpu.memory_space<vmem>>, vector<1x8x256xf32>
    %412 = vector.shape_cast %411 : vector<1x8x256xf32> to vector<8x256xf32>
    %413 = vector.shape_cast %410 : vector<8x256xf32> to vector<1x8x256xf32>
    tpu.vector_store %arg3[%c6_303, %c24_304, %c0_305], %413 {strides = array<i32>} : memref<8x128x256xf32, #tpu.memory_space<vmem>>, vector<1x8x256xf32>,
    %414 = vector.extract_strided_slice %397 {offsets = [0, 96], sizes = [8, 256], strides = [1, 1]} : vector<8x384xf32> to vector<8x256xf32>
    %c6_306 = arith.constant 6 : index
    %c32_307 = arith.constant 32 : index
    %c0_308 = arith.constant 0 : index
    %415 = vector.load %arg3[%c6_306, %c32_307, %c0_308] : memref<8x128x256xf32, #tpu.memory_space<vmem>>, vector<1x8x256xf32>
    %416 = vector.shape_cast %415 : vector<1x8x256xf32> to vector<8x256xf32>
    %417 = vector.shape_cast %414 : vector<8x256xf32> to vector<1x8x256xf32>
    tpu.vector_store %arg3[%c6_306, %c32_307, %c0_308], %417 {strides = array<i32>} : memref<8x128x256xf32, #tpu.memory_space<vmem>>, vector<1x8x256xf32>,
    %418 = vector.extract_strided_slice %397 {offsets = [0, 88], sizes = [8, 256], strides = [1, 1]} : vector<8x384xf32> to vector<8x256xf32>
    %c6_309 = arith.constant 6 : index
    %c40_310 = arith.constant 40 : index
    %c0_311 = arith.constant 0 : index
    %419 = vector.load %arg3[%c6_309, %c40_310, %c0_311] : memref<8x128x256xf32, #tpu.memory_space<vmem>>, vector<1x8x256xf32>
    %420 = vector.shape_cast %419 : vector<1x8x256xf32> to vector<8x256xf32>
    %421 = vector.shape_cast %418 : vector<8x256xf32> to vector<1x8x256xf32>
    tpu.vector_store %arg3[%c6_309, %c40_310, %c0_311], %421 {strides = array<i32>} : memref<8x128x256xf32, #tpu.memory_space<vmem>>, vector<1x8x256xf32>,
    %422 = vector.extract_strided_slice %397 {offsets = [0, 80], sizes = [8, 256], strides = [1, 1]} : vector<8x384xf32> to vector<8x256xf32>
    %c6_312 = arith.constant 6 : index
    %c48_313 = arith.constant 48 : index
    %c0_314 = arith.constant 0 : index
    %423 = vector.load %arg3[%c6_312, %c48_313, %c0_314] : memref<8x128x256xf32, #tpu.memory_space<vmem>>, vector<1x8x256xf32>
    %424 = vector.shape_cast %423 : vector<1x8x256xf32> to vector<8x256xf32>
    %425 = vector.shape_cast %422 : vector<8x256xf32> to vector<1x8x256xf32>
    tpu.vector_store %arg3[%c6_312, %c48_313, %c0_314], %425 {strides = array<i32>} : memref<8x128x256xf32, #tpu.memory_space<vmem>>, vector<1x8x256xf32>,
    %426 = vector.extract_strided_slice %397 {offsets = [0, 72], sizes = [8, 256], strides = [1, 1]} : vector<8x384xf32> to vector<8x256xf32>
    %c6_315 = arith.constant 6 : index
    %c56_316 = arith.constant 56 : index
    %c0_317 = arith.constant 0 : index
    %427 = vector.load %arg3[%c6_315, %c56_316, %c0_317] : memref<8x128x256xf32, #tpu.memory_space<vmem>>, vector<1x8x256xf32>
    %428 = vector.shape_cast %427 : vector<1x8x256xf32> to vector<8x256xf32>
    %429 = vector.shape_cast %426 : vector<8x256xf32> to vector<1x8x256xf32>
    tpu.vector_store %arg3[%c6_315, %c56_316, %c0_317], %429 {strides = array<i32>} : memref<8x128x256xf32, #tpu.memory_space<vmem>>, vector<1x8x256xf32>,
    %430 = vector.extract_strided_slice %397 {offsets = [0, 64], sizes = [8, 256], strides = [1, 1]} : vector<8x384xf32> to vector<8x256xf32>
    %c6_318 = arith.constant 6 : index
    %c64_319 = arith.constant 64 : index
    %c0_320 = arith.constant 0 : index
    %431 = vector.load %arg3[%c6_318, %c64_319, %c0_320] : memref<8x128x256xf32, #tpu.memory_space<vmem>>, vector<1x8x256xf32>
    %432 = vector.shape_cast %431 : vector<1x8x256xf32> to vector<8x256xf32>
    %433 = vector.shape_cast %430 : vector<8x256xf32> to vector<1x8x256xf32>
    tpu.vector_store %arg3[%c6_318, %c64_319, %c0_320], %433 {strides = array<i32>} : memref<8x128x256xf32, #tpu.memory_space<vmem>>, vector<1x8x256xf32>,
    %434 = vector.extract_strided_slice %397 {offsets = [0, 56], sizes = [8, 256], strides = [1, 1]} : vector<8x384xf32> to vector<8x256xf32>
    %c6_321 = arith.constant 6 : index
    %c72_322 = arith.constant 72 : index
    %c0_323 = arith.constant 0 : index
    %435 = vector.load %arg3[%c6_321, %c72_322, %c0_323] : memref<8x128x256xf32, #tpu.memory_space<vmem>>, vector<1x8x256xf32>
    %436 = vector.shape_cast %435 : vector<1x8x256xf32> to vector<8x256xf32>
    %437 = vector.shape_cast %434 : vector<8x256xf32> to vector<1x8x256xf32>
    tpu.vector_store %arg3[%c6_321, %c72_322, %c0_323], %437 {strides = array<i32>} : memref<8x128x256xf32, #tpu.memory_space<vmem>>, vector<1x8x256xf32>,
    %438 = vector.extract_strided_slice %397 {offsets = [0, 48], sizes = [8, 256], strides = [1, 1]} : vector<8x384xf32> to vector<8x256xf32>
    %c6_324 = arith.constant 6 : index
    %c80_325 = arith.constant 80 : index
    %c0_326 = arith.constant 0 : index
    %439 = vector.load %arg3[%c6_324, %c80_325, %c0_326] : memref<8x128x256xf32, #tpu.memory_space<vmem>>, vector<1x8x256xf32>
    %440 = vector.shape_cast %439 : vector<1x8x256xf32> to vector<8x256xf32>
    %441 = vector.shape_cast %438 : vector<8x256xf32> to vector<1x8x256xf32>
    tpu.vector_store %arg3[%c6_324, %c80_325, %c0_326], %441 {strides = array<i32>} : memref<8x128x256xf32, #tpu.memory_space<vmem>>, vector<1x8x256xf32>,
    %442 = vector.extract_strided_slice %397 {offsets = [0, 40], sizes = [8, 256], strides = [1, 1]} : vector<8x384xf32> to vector<8x256xf32>
    %c6_327 = arith.constant 6 : index
    %c88_328 = arith.constant 88 : index
    %c0_329 = arith.constant 0 : index
    %443 = vector.load %arg3[%c6_327, %c88_328, %c0_329] : memref<8x128x256xf32, #tpu.memory_space<vmem>>, vector<1x8x256xf32>
    %444 = vector.shape_cast %443 : vector<1x8x256xf32> to vector<8x256xf32>
    %445 = vector.shape_cast %442 : vector<8x256xf32> to vector<1x8x256xf32>
    tpu.vector_store %arg3[%c6_327, %c88_328, %c0_329], %445 {strides = array<i32>} : memref<8x128x256xf32, #tpu.memory_space<vmem>>, vector<1x8x256xf32>,
    %446 = vector.extract_strided_slice %397 {offsets = [0, 32], sizes = [8, 256], strides = [1, 1]} : vector<8x384xf32> to vector<8x256xf32>
    %c6_330 = arith.constant 6 : index
    %c96_331 = arith.constant 96 : index
    %c0_332 = arith.constant 0 : index
    %447 = vector.load %arg3[%c6_330, %c96_331, %c0_332] : memref<8x128x256xf32, #tpu.memory_space<vmem>>, vector<1x8x256xf32>
    %448 = vector.shape_cast %447 : vector<1x8x256xf32> to vector<8x256xf32>
    %449 = vector.shape_cast %446 : vector<8x256xf32> to vector<1x8x256xf32>
    tpu.vector_store %arg3[%c6_330, %c96_331, %c0_332], %449 {strides = array<i32>} : memref<8x128x256xf32, #tpu.memory_space<vmem>>, vector<1x8x256xf32>,
    %450 = vector.extract_strided_slice %397 {offsets = [0, 24], sizes = [8, 256], strides = [1, 1]} : vector<8x384xf32> to vector<8x256xf32>
    %c6_333 = arith.constant 6 : index
    %c104_334 = arith.constant 104 : index
    %c0_335 = arith.constant 0 : index
    %451 = vector.load %arg3[%c6_333, %c104_334, %c0_335] : memref<8x128x256xf32, #tpu.memory_space<vmem>>, vector<1x8x256xf32>
    %452 = vector.shape_cast %451 : vector<1x8x256xf32> to vector<8x256xf32>
    %453 = vector.shape_cast %450 : vector<8x256xf32> to vector<1x8x256xf32>
    tpu.vector_store %arg3[%c6_333, %c104_334, %c0_335], %453 {strides = array<i32>} : memref<8x128x256xf32, #tpu.memory_space<vmem>>, vector<1x8x256xf32>,
    %454 = vector.extract_strided_slice %397 {offsets = [0, 16], sizes = [8, 256], strides = [1, 1]} : vector<8x384xf32> to vector<8x256xf32>
    %c6_336 = arith.constant 6 : index
    %c112_337 = arith.constant 112 : index
    %c0_338 = arith.constant 0 : index
    %455 = vector.load %arg3[%c6_336, %c112_337, %c0_338] : memref<8x128x256xf32, #tpu.memory_space<vmem>>, vector<1x8x256xf32>
    %456 = vector.shape_cast %455 : vector<1x8x256xf32> to vector<8x256xf32>
    %457 = vector.shape_cast %454 : vector<8x256xf32> to vector<1x8x256xf32>
    tpu.vector_store %arg3[%c6_336, %c112_337, %c0_338], %457 {strides = array<i32>} : memref<8x128x256xf32, #tpu.memory_space<vmem>>, vector<1x8x256xf32>,
    %458 = vector.extract_strided_slice %397 {offsets = [0, 8], sizes = [8, 256], strides = [1, 1]} : vector<8x384xf32> to vector<8x256xf32>
    %c6_339 = arith.constant 6 : index
    %c120_340 = arith.constant 120 : index
    %c0_341 = arith.constant 0 : index
    %459 = vector.load %arg3[%c6_339, %c120_340, %c0_341] : memref<8x128x256xf32, #tpu.memory_space<vmem>>, vector<1x8x256xf32>
    %460 = vector.shape_cast %459 : vector<1x8x256xf32> to vector<8x256xf32>
    %461 = vector.shape_cast %458 : vector<8x256xf32> to vector<1x8x256xf32>
    tpu.vector_store %arg3[%c6_339, %c120_340, %c0_341], %461 {strides = array<i32>} : memref<8x128x256xf32, #tpu.memory_space<vmem>>, vector<1x8x256xf32>,
    %c0_342 = arith.constant 0 : index
    %c7 = arith.constant 7 : index
    %c0_343 = arith.constant 0 : index
    %c0_344 = arith.constant 0 : index
    %462 = vector.load %arg2[%c0_342, %c7, %c0_343, %c0_344] : memref<1x8x8x384xf32, #tpu.memory_space<vmem>>, vector<1x1x8x384xf32>
    %463 = vector.shape_cast %462 : vector<1x1x8x384xf32> to vector<8x384xf32>
    %464 = vector.extract_strided_slice %463 {offsets = [0, 128], sizes = [8, 256], strides = [1, 1]} : vector<8x384xf32> to vector<8x256xf32>
    %c7_345 = arith.constant 7 : index
    %c0_346 = arith.constant 0 : index
    %c0_347 = arith.constant 0 : index
    %465 = vector.load %arg3[%c7_345, %c0_346, %c0_347] : memref<8x128x256xf32, #tpu.memory_space<vmem>>, vector<1x8x256xf32>
    %466 = vector.shape_cast %465 : vector<1x8x256xf32> to vector<8x256xf32>
    %467 = vector.shape_cast %464 : vector<8x256xf32> to vector<1x8x256xf32>
    tpu.vector_store %arg3[%c7_345, %c0_346, %c0_347], %467 {strides = array<i32>} : memref<8x128x256xf32, #tpu.memory_space<vmem>>, vector<1x8x256xf32>,
    %468 = vector.extract_strided_slice %463 {offsets = [0, 120], sizes = [8, 256], strides = [1, 1]} : vector<8x384xf32> to vector<8x256xf32>
    %c7_348 = arith.constant 7 : index
    %c8_349 = arith.constant 8 : index
    %c0_350 = arith.constant 0 : index
    %469 = vector.load %arg3[%c7_348, %c8_349, %c0_350] : memref<8x128x256xf32, #tpu.memory_space<vmem>>, vector<1x8x256xf32>
    %470 = vector.shape_cast %469 : vector<1x8x256xf32> to vector<8x256xf32>
    %471 = vector.shape_cast %468 : vector<8x256xf32> to vector<1x8x256xf32>
    tpu.vector_store %arg3[%c7_348, %c8_349, %c0_350], %471 {strides = array<i32>} : memref<8x128x256xf32, #tpu.memory_space<vmem>>, vector<1x8x256xf32>,
    %472 = vector.extract_strided_slice %463 {offsets = [0, 112], sizes = [8, 256], strides = [1, 1]} : vector<8x384xf32> to vector<8x256xf32>
    %c7_351 = arith.constant 7 : index
    %c16_352 = arith.constant 16 : index
    %c0_353 = arith.constant 0 : index
    %473 = vector.load %arg3[%c7_351, %c16_352, %c0_353] : memref<8x128x256xf32, #tpu.memory_space<vmem>>, vector<1x8x256xf32>
    %474 = vector.shape_cast %473 : vector<1x8x256xf32> to vector<8x256xf32>
    %475 = vector.shape_cast %472 : vector<8x256xf32> to vector<1x8x256xf32>
    tpu.vector_store %arg3[%c7_351, %c16_352, %c0_353], %475 {strides = array<i32>} : memref<8x128x256xf32, #tpu.memory_space<vmem>>, vector<1x8x256xf32>,
    %476 = vector.extract_strided_slice %463 {offsets = [0, 104], sizes = [8, 256], strides = [1, 1]} : vector<8x384xf32> to vector<8x256xf32>
    %c7_354 = arith.constant 7 : index
    %c24_355 = arith.constant 24 : index
    %c0_356 = arith.constant 0 : index
    %477 = vector.load %arg3[%c7_354, %c24_355, %c0_356] : memref<8x128x256xf32, #tpu.memory_space<vmem>>, vector<1x8x256xf32>
    %478 = vector.shape_cast %477 : vector<1x8x256xf32> to vector<8x256xf32>
    %479 = vector.shape_cast %476 : vector<8x256xf32> to vector<1x8x256xf32>
    tpu.vector_store %arg3[%c7_354, %c24_355, %c0_356], %479 {strides = array<i32>} : memref<8x128x256xf32, #tpu.memory_space<vmem>>, vector<1x8x256xf32>,
    %480 = vector.extract_strided_slice %463 {offsets = [0, 96], sizes = [8, 256], strides = [1, 1]} : vector<8x384xf32> to vector<8x256xf32>
    %c7_357 = arith.constant 7 : index
    %c32_358 = arith.constant 32 : index
    %c0_359 = arith.constant 0 : index
    %481 = vector.load %arg3[%c7_357, %c32_358, %c0_359] : memref<8x128x256xf32, #tpu.memory_space<vmem>>, vector<1x8x256xf32>
    %482 = vector.shape_cast %481 : vector<1x8x256xf32> to vector<8x256xf32>
    %483 = vector.shape_cast %480 : vector<8x256xf32> to vector<1x8x256xf32>
    tpu.vector_store %arg3[%c7_357, %c32_358, %c0_359], %483 {strides = array<i32>} : memref<8x128x256xf32, #tpu.memory_space<vmem>>, vector<1x8x256xf32>,
    %484 = vector.extract_strided_slice %463 {offsets = [0, 88], sizes = [8, 256], strides = [1, 1]} : vector<8x384xf32> to vector<8x256xf32>
    %c7_360 = arith.constant 7 : index
    %c40_361 = arith.constant 40 : index
    %c0_362 = arith.constant 0 : index
    %485 = vector.load %arg3[%c7_360, %c40_361, %c0_362] : memref<8x128x256xf32, #tpu.memory_space<vmem>>, vector<1x8x256xf32>
    %486 = vector.shape_cast %485 : vector<1x8x256xf32> to vector<8x256xf32>
    %487 = vector.shape_cast %484 : vector<8x256xf32> to vector<1x8x256xf32>
    tpu.vector_store %arg3[%c7_360, %c40_361, %c0_362], %487 {strides = array<i32>} : memref<8x128x256xf32, #tpu.memory_space<vmem>>, vector<1x8x256xf32>,
    %488 = vector.extract_strided_slice %463 {offsets = [0, 80], sizes = [8, 256], strides = [1, 1]} : vector<8x384xf32> to vector<8x256xf32>
    %c7_363 = arith.constant 7 : index
    %c48_364 = arith.constant 48 : index
    %c0_365 = arith.constant 0 : index
    %489 = vector.load %arg3[%c7_363, %c48_364, %c0_365] : memref<8x128x256xf32, #tpu.memory_space<vmem>>, vector<1x8x256xf32>
    %490 = vector.shape_cast %489 : vector<1x8x256xf32> to vector<8x256xf32>
    %491 = vector.shape_cast %488 : vector<8x256xf32> to vector<1x8x256xf32>
    tpu.vector_store %arg3[%c7_363, %c48_364, %c0_365], %491 {strides = array<i32>} : memref<8x128x256xf32, #tpu.memory_space<vmem>>, vector<1x8x256xf32>,
    %492 = vector.extract_strided_slice %463 {offsets = [0, 72], sizes = [8, 256], strides = [1, 1]} : vector<8x384xf32> to vector<8x256xf32>
    %c7_366 = arith.constant 7 : index
    %c56_367 = arith.constant 56 : index
    %c0_368 = arith.constant 0 : index
    %493 = vector.load %arg3[%c7_366, %c56_367, %c0_368] : memref<8x128x256xf32, #tpu.memory_space<vmem>>, vector<1x8x256xf32>
    %494 = vector.shape_cast %493 : vector<1x8x256xf32> to vector<8x256xf32>
    %495 = vector.shape_cast %492 : vector<8x256xf32> to vector<1x8x256xf32>
    tpu.vector_store %arg3[%c7_366, %c56_367, %c0_368], %495 {strides = array<i32>} : memref<8x128x256xf32, #tpu.memory_space<vmem>>, vector<1x8x256xf32>,
    %496 = vector.extract_strided_slice %463 {offsets = [0, 64], sizes = [8, 256], strides = [1, 1]} : vector<8x384xf32> to vector<8x256xf32>
    %c7_369 = arith.constant 7 : index
    %c64_370 = arith.constant 64 : index
    %c0_371 = arith.constant 0 : index
    %497 = vector.load %arg3[%c7_369, %c64_370, %c0_371] : memref<8x128x256xf32, #tpu.memory_space<vmem>>, vector<1x8x256xf32>
    %498 = vector.shape_cast %497 : vector<1x8x256xf32> to vector<8x256xf32>
    %499 = vector.shape_cast %496 : vector<8x256xf32> to vector<1x8x256xf32>
    tpu.vector_store %arg3[%c7_369, %c64_370, %c0_371], %499 {strides = array<i32>} : memref<8x128x256xf32, #tpu.memory_space<vmem>>, vector<1x8x256xf32>,
    %500 = vector.extract_strided_slice %463 {offsets = [0, 56], sizes = [8, 256], strides = [1, 1]} : vector<8x384xf32> to vector<8x256xf32>
    %c7_372 = arith.constant 7 : index
    %c72_373 = arith.constant 72 : index
    %c0_374 = arith.constant 0 : index
    %501 = vector.load %arg3[%c7_372, %c72_373, %c0_374] : memref<8x128x256xf32, #tpu.memory_space<vmem>>, vector<1x8x256xf32>
    %502 = vector.shape_cast %501 : vector<1x8x256xf32> to vector<8x256xf32>
    %503 = vector.shape_cast %500 : vector<8x256xf32> to vector<1x8x256xf32>
    tpu.vector_store %arg3[%c7_372, %c72_373, %c0_374], %503 {strides = array<i32>} : memref<8x128x256xf32, #tpu.memory_space<vmem>>, vector<1x8x256xf32>,
    %504 = vector.extract_strided_slice %463 {offsets = [0, 48], sizes = [8, 256], strides = [1, 1]} : vector<8x384xf32> to vector<8x256xf32>
    %c7_375 = arith.constant 7 : index
    %c80_376 = arith.constant 80 : index
    %c0_377 = arith.constant 0 : index
    %505 = vector.load %arg3[%c7_375, %c80_376, %c0_377] : memref<8x128x256xf32, #tpu.memory_space<vmem>>, vector<1x8x256xf32>
    %506 = vector.shape_cast %505 : vector<1x8x256xf32> to vector<8x256xf32>
    %507 = vector.shape_cast %504 : vector<8x256xf32> to vector<1x8x256xf32>
    tpu.vector_store %arg3[%c7_375, %c80_376, %c0_377], %507 {strides = array<i32>} : memref<8x128x256xf32, #tpu.memory_space<vmem>>, vector<1x8x256xf32>,
    %508 = vector.extract_strided_slice %463 {offsets = [0, 40], sizes = [8, 256], strides = [1, 1]} : vector<8x384xf32> to vector<8x256xf32>
    %c7_378 = arith.constant 7 : index
    %c88_379 = arith.constant 88 : index
    %c0_380 = arith.constant 0 : index
    %509 = vector.load %arg3[%c7_378, %c88_379, %c0_380] : memref<8x128x256xf32, #tpu.memory_space<vmem>>, vector<1x8x256xf32>
    %510 = vector.shape_cast %509 : vector<1x8x256xf32> to vector<8x256xf32>
    %511 = vector.shape_cast %508 : vector<8x256xf32> to vector<1x8x256xf32>
    tpu.vector_store %arg3[%c7_378, %c88_379, %c0_380], %511 {strides = array<i32>} : memref<8x128x256xf32, #tpu.memory_space<vmem>>, vector<1x8x256xf32>,
    %512 = vector.extract_strided_slice %463 {offsets = [0, 32], sizes = [8, 256], strides = [1, 1]} : vector<8x384xf32> to vector<8x256xf32>
    %c7_381 = arith.constant 7 : index
    %c96_382 = arith.constant 96 : index
    %c0_383 = arith.constant 0 : index
    %513 = vector.load %arg3[%c7_381, %c96_382, %c0_383] : memref<8x128x256xf32, #tpu.memory_space<vmem>>, vector<1x8x256xf32>
    %514 = vector.shape_cast %513 : vector<1x8x256xf32> to vector<8x256xf32>
    %515 = vector.shape_cast %512 : vector<8x256xf32> to vector<1x8x256xf32>
    tpu.vector_store %arg3[%c7_381, %c96_382, %c0_383], %515 {strides = array<i32>} : memref<8x128x256xf32, #tpu.memory_space<vmem>>, vector<1x8x256xf32>,
    %516 = vector.extract_strided_slice %463 {offsets = [0, 24], sizes = [8, 256], strides = [1, 1]} : vector<8x384xf32> to vector<8x256xf32>
    %c7_384 = arith.constant 7 : index
    %c104_385 = arith.constant 104 : index
    %c0_386 = arith.constant 0 : index
    %517 = vector.load %arg3[%c7_384, %c104_385, %c0_386] : memref<8x128x256xf32, #tpu.memory_space<vmem>>, vector<1x8x256xf32>
    %518 = vector.shape_cast %517 : vector<1x8x256xf32> to vector<8x256xf32>
    %519 = vector.shape_cast %516 : vector<8x256xf32> to vector<1x8x256xf32>
    tpu.vector_store %arg3[%c7_384, %c104_385, %c0_386], %519 {strides = array<i32>} : memref<8x128x256xf32, #tpu.memory_space<vmem>>, vector<1x8x256xf32>,
    %520 = vector.extract_strided_slice %463 {offsets = [0, 16], sizes = [8, 256], strides = [1, 1]} : vector<8x384xf32> to vector<8x256xf32>
    %c7_387 = arith.constant 7 : index
    %c112_388 = arith.constant 112 : index
    %c0_389 = arith.constant 0 : index
    %521 = vector.load %arg3[%c7_387, %c112_388, %c0_389] : memref<8x128x256xf32, #tpu.memory_space<vmem>>, vector<1x8x256xf32>
    %522 = vector.shape_cast %521 : vector<1x8x256xf32> to vector<8x256xf32>
    %523 = vector.shape_cast %520 : vector<8x256xf32> to vector<1x8x256xf32>
    tpu.vector_store %arg3[%c7_387, %c112_388, %c0_389], %523 {strides = array<i32>} : memref<8x128x256xf32, #tpu.memory_space<vmem>>, vector<1x8x256xf32>,
    %524 = vector.extract_strided_slice %463 {offsets = [0, 8], sizes = [8, 256], strides = [1, 1]} : vector<8x384xf32> to vector<8x256xf32>
    %c7_390 = arith.constant 7 : index
    %c120_391 = arith.constant 120 : index
    %c0_392 = arith.constant 0 : index
    %525 = vector.load %arg3[%c7_390, %c120_391, %c0_392] : memref<8x128x256xf32, #tpu.memory_space<vmem>>, vector<1x8x256xf32>
    %526 = vector.shape_cast %525 : vector<1x8x256xf32> to vector<8x256xf32>
    %527 = vector.shape_cast %524 : vector<8x256xf32> to vector<1x8x256xf32>
    tpu.vector_store %arg3[%c7_390, %c120_391, %c0_392], %527 {strides = array<i32>} : memref<8x128x256xf32, #tpu.memory_space<vmem>>, vector<1x8x256xf32>,
    return
  }
  func.func @transform_0(%arg0: i32, %arg1: i32) -> (i32, i32, i32, i32) {
    %c2_i32 = arith.constant 2 : i32
    %0 = arith.muli %arg1, %c2_i32 : i32
    %c1_i32 = arith.constant 1 : i32
    %1 = arith.addi %c1_i32, %0 : i32
    %c1_i32_0 = arith.constant 1 : i32
    %2 = arith.muli %arg0, %c1_i32_0 : i32
    %3 = arith.subi %1, %2 : i32
    %c0_i32 = arith.constant 0 : i32
    %c0_i32_1 = arith.constant 0 : i32
    %c0_i32_2 = arith.constant 0 : i32
    %c0_i32_3 = arith.constant 0 : i32
    return %3, %c0_i32, %c0_i32_1, %c0_i32_2 : i32, i32, i32, i32
  }
  func.func @transform_1(%arg0: i32, %arg1: i32) -> (i32, i32, i32) {
    %c0_i32 = arith.constant 0 : i32
    %c0_i32_0 = arith.constant 0 : i32
    return %c0_i32, %arg0, %arg1 : i32, i32, i32
  }
}

</mosaic_0001>

<llo_original>
// kernel: tpu_custom_call.1
$region0: #{tpu_custom_call.1}
  #allocation0 [shape = 'u32[]', space=smem, size = 0x4, offset = 0x4, fixed_abs, tag = 'smem constant byte address 0x4 - core index']
  #allocation1 [shape = 'u32[144,128]{1,0:T(1,128)}', space=vmem, size = 0x12000, scoped, tag = 'internal scratch']
  #allocation6 [shape = 's32[]', space=sflag, size = 0x4, offset = 0, fixed_abs, tag = 'sflag constant byte address 0x0 - dummy sync flag']
  %s0 = inlined_call_operand.hbm [shape: f32[2,8,8,384], index: 0, kind: input, shape index: {}]
  %s1 = inlined_call_operand.hbm [shape: f32[8,256,256], index: 1, kind: output, shape index: {}]
  %s2 = sld [smem:[#allocation0]]
  $region41: #{tpu_custom_call.1} parent=0
    _
  %s4 = ssub.s32 1, %s2
  %s5 = scalar_select 0, %s4, %s2
  $region1: #{tpu_custom_call.1} parent=0
    #allocation2 [shape = 'u8[196608]{0}', space=vmem, size = 0x30000, scoped, tag = 'input window, operand 0']
    #allocation3 [shape = 's32[2]{0}', space=sflag, size = 0x8, scoped, tag = 'scoped memory for tpu_custom_call.1']
    #allocation4 [shape = 's32[2]{0}', space=sflag, size = 0x8, scoped, tag = 'scoped memory for tpu_custom_call.1']
    #allocation5 [shape = 'u8[2097152]{0}', space=vmem, size = 0x200000, scoped, tag = 'output window, operand 0']
    %6 = vsyncpa [#allocation3], 0
    %s7 = scalar_lea.sflag [#allocation3], 1
    %8 = vsyncpa %s7, 0
    %9 = vsyncpa [#allocation4], 0
    %s10 = scalar_lea.sflag [#allocation4], 1
    %11 = vsyncpa %s10, 0
    loop: start=0, step=1, limit=4
    $region2: #{tpu_custom_call.1} parent=1 // loop_pre_header
      _
    $region3: #{tpu_custom_call.1} parent=1 // loop_header
      %s13 = sphi 0, %s17
      %p14 = scmp.ge.s32.totalorder %s13, 4
      %s20 = sphi 0, %s32
      %s21 = sphi 0, %s28
      %s22 = sphi 0, %s20
      %s23 = sphi 0, %s21
      %s24 = sphi 0, %s22
      %s25 = sphi 0, %s23
      %s41 = sphi 0, %s43
      %s44 = sphi 0, %s41
      %s45 = sphi 0, %s44
      %s61 = sphi 0, %s45
      %s69 = sphi 0, %s71
      %s72 = sphi 0, %s69
      %s73 = sphi 0, %s72
      %s89 = sphi 0, %s73
    $region4: #{tpu_custom_call.1} parent=1 // loop_header_branch
      %16 = sbr.rel (%p14) target = $region8
    $region5: #{tpu_custom_call.1} parent=1 // loop_body
      %s18 = ssub.s32 %s13, 1
      %s19 = ssub.s32 %s13, 2
      %s26 = sadd.s32 1, %s21
      %p27 = scmp.ge.s32.totalorder %s26, 1
      %s28 = scalar_select %p27, 0, %s26
      %s29 = sadd.s32 1, %s20
      %s30 = scalar_select %p27, %s29, %s20
      %p31 = scmp.ge.s32.totalorder %s30, 2
      %s32 = scalar_select %p31, 0, %s30
      %s33 = smul.u32 %s21, 2
      %s34 = sadd.s32 %s33, 1
      %s35 = ssub.s32 %s34, %s20
      %s36 = smul.u32 %s28, 2
      %s37 = sadd.s32 %s36, 1
      %s38 = ssub.s32 %s37, %s32
      %s39 = ssub.s32 %s35, %s38
      %p40 = scmp.eq.s32.totalorder %s39, 0
      %s42 = sadd.s32 %s41, 1
      %s43 = scalar_select %p40, %s41, %s42
      %p46 = pneg %p40
      %p47 = scmp.eq.s32.totalorder %s13, 1
      %p48 = por %p46, %p47
      %p49 = scmp.ne.s32.totalorder %s41, %s44
      %p50 = scmp.eq.s32.totalorder %s13, 0
      %p51 = por %p49, %p50
      %p52 = scmp.ne.s32.totalorder %s41, %s44
      %p53 = scmp.eq.s32.totalorder %s18, 1
      %p54 = por %p52, %p53
      %p55 = scmp.ne.s32.totalorder %s44, %s45
      %p56 = scmp.eq.s32.totalorder %s18, 0
      %p57 = por %p55, %p56
      %p58 = scmp.ne.s32.totalorder %s44, %s45
      %p59 = scmp.eq.s32.totalorder %s19, 1
      %p60 = por %p58, %p59
      %p62 = scmp.ne.s32.totalorder %s45, %s61
      %p63 = scmp.eq.s32.totalorder %s19, 0
      %p64 = por %p62, %p63
      %s65 = ssub.s32 %s20, %s32
      %s66 = ssub.s32 %s21, %s28
      %s67 = sor.u32 %s65, %s66
      %p68 = scmp.eq.s32.totalorder %s67, 0
      %s70 = sadd.s32 %s69, 1
      %s71 = scalar_select %p68, %s69, %s70
      %p74 = pneg %p68
      %p75 = scmp.eq.s32.totalorder %s13, 1
      %p76 = por %p74, %p75
      %p77 = scmp.ne.s32.totalorder %s69, %s72
      %p78 = scmp.eq.s32.totalorder %s13, 0
      %p79 = por %p77, %p78
      %p80 = scmp.ne.s32.totalorder %s69, %s72
      %p81 = scmp.eq.s32.totalorder %s18, 1
      %p82 = por %p80, %p81
      %p83 = scmp.ne.s32.totalorder %s72, %s73
      %p84 = scmp.eq.s32.totalorder %s18, 0
      %p85 = por %p83, %p84
      %p86 = scmp.ne.s32.totalorder %s72, %s73
      %p87 = scmp.eq.s32.totalorder %s19, 1
      %p88 = por %p86, %p87
      %p90 = scmp.ne.s32.totalorder %s73, %s89
      %p91 = scmp.eq.s32.totalorder %s19, 0
      %p92 = por %p90, %p91
      %p93 = scmp.le.s32.totalorder 1, %s13
      %p94 = scmp.lt.s32.totalorder %s13, 3
      %p95 = pnand %p93, %p94
      %p96 = pneg %p95
      // Predicated region
      $region9: #{tpu_custom_call.1} parent=5 // pred_check
        _
      $region10: #{tpu_custom_call.1} parent=5 // pred_check_branch
        %98 = sbr.rel (%p95) target = $region12
      $region11: #{tpu_custom_call.1} parent=5 // pred_region
        %s99 = ssub.s32 %s13, 1
      $region12: #{tpu_custom_call.1} parent=5 // pred_fallthru
        _
      %p100 = scmp.lt.s32.totalorder %s13, 2
      // Predicated region
      $region13: #{tpu_custom_call.1} parent=5 // pred_check
        %p101 = pneg %p100
      $region14: #{tpu_custom_call.1} parent=5 // pred_check_branch
        %103 = sbr.rel (%p101) target = $region16
      $region15: #{tpu_custom_call.1} parent=5 // pred_region
        // Predicated region
        $region17: #{tpu_custom_call.1} parent=15 // pred_check
          %p104 = pneg %p51
        $region18: #{tpu_custom_call.1} parent=15 // pred_check_branch
          %106 = sbr.rel (%p104) target = $region20
        $region19: #{tpu_custom_call.1} parent=15 // pred_region
          %s107 = sand.u32 %s41, 1
          %s108 = scalar_lea.sflag [#allocation3], %s107
          %s109 = sand.u32 %s41, 1
          %s110 = smul.addr %s109, 192
          %s111 = scalar_lea.vmem [#allocation2], %s110
          %s112 = smul.u32 %s21, 2
          %s113 = sadd.s32 %s112, 1
          %s114 = ssub.s32 %s113, %s20
          %s116 = ssub.s32 3072, 3072
          %117 = vsyncadd %s108, %s116
          %s118 = smul.addr %s114, 24
          %s119 = smul.addr %s118, 128
          %s120 = scalar_lea.hbm %s0, %s119
          %s121 = sshll.u32 %s111, 4
          %s122 = int_to_ptr.vmem [resolvable:$true] %s121
          %127 = dma.hbm_to_vmem [thread:$0]  %s120, 3072, %s122, %s108, 384, 384, 24
        $region20: #{tpu_custom_call.1} parent=15 // pred_fallthru
          _
      $region16: #{tpu_custom_call.1} parent=5 // pred_fallthru
        _
      %p128 = scmp.le.s32.totalorder 1, %s13
      %p129 = scmp.lt.s32.totalorder %s13, 3
      %p130 = pnand %p128, %p129
      %p131 = pneg %p130
      // Predicated region
      $region21: #{tpu_custom_call.1} parent=5 // pred_check
        _
      $region22: #{tpu_custom_call.1} parent=5 // pred_check_branch
        %133 = sbr.rel (%p130) target = $region24
      $region23: #{tpu_custom_call.1} parent=5 // pred_region
        %s134 = ssub.s32 %s13, 1
        %s135 = sand.u32 %s44, 1
        %s136 = scalar_lea.sflag [#allocation3], %s135
        %s137 = sand.u32 %s44, 1
        %s138 = smul.addr %s137, 192
        %s139 = scalar_lea.vmem [#allocation2], %s138
        // Predicated region
        $region25: #{tpu_custom_call.1} parent=23 // pred_check
          %p140 = pneg %p57
        $region26: #{tpu_custom_call.1} parent=23 // pred_check_branch
          %142 = sbr.rel (%p140) target = $region28
        $region27: #{tpu_custom_call.1} parent=23 // pred_region
          %143 = dma.done %s136, 3072
        $region28: #{tpu_custom_call.1} parent=23 // pred_fallthru
          _
        %s144 = sand.u32 %s44, 1
        %s145 = scalar_lea.sflag [#allocation3], %s144
        %s146 = sand.u32 %s44, 1
        %s147 = smul.addr %s146, 192
        %s148 = scalar_lea.vmem [#allocation2], %s147
        %p149 = pneg %p57
        %p150 = pneg %p54
        %p151 = pneg %p85
        %p152 = pneg %p82
        %s153 = sand.u32 %s72, 1
        %s154 = scalar_lea.sflag [#allocation4], %s153
        %s155 = sand.u32 %s72, 1
        %s156 = smul.addr %s155, 2048
        %s157 = scalar_lea.vmem [#allocation5], %s156
        %s158 = smul.u32 %s23, 2
        %s159 = sadd.s32 %s158, 1
        %s160 = ssub.s32 %s159, %s22
        %s161 = smul.u32 16, %s22
        %s162 = smul.u32 2, %s23
        %v163 = vld [vmem:[%s139] sm:$0xff]
        %v164 = vld [vmem:[%s139 + $0x8] sm:$0xff]
        %v165 = vld [vmem:[%s139 + $0x10] sm:$0xff]
        %166 = vst [vmem:[%s157] sm:$0xff] %v164
        %167 = vst [vmem:[%s157 + $0x8] sm:$0xff] %v165
        %171 = vrot.lane.b32.xlu0 %v163, 8
        %v172 = vpop.permute.xlu0 %171
        %173 = vrot.lane.b32.xlu0 %v164, 8
        %v174 = vpop.permute.xlu0 %173
        %175 = vrot.lane.b32.xlu0 %v165, 8
        %v176 = vpop.permute.xlu0 %175
        %vm177 = vcmask 64512
        %v178 = vsel %vm177, %v172, %v174
        %v179 = vsel %vm177, %v174, %v176
        %182 = vst [vmem:[%s157 + $0x10] sm:$0xff] %v178
        %183 = vst [vmem:[%s157 + $0x18] sm:$0xff] %v179
        %184 = vrot.lane.b32.xlu0 %v163, 16
        %v185 = vpop.permute.xlu0 %184
        %186 = vrot.lane.b32.xlu0 %v164, 16
        %v187 = vpop.permute.xlu0 %186
        %188 = vrot.lane.b32.xlu0 %v165, 16
        %v189 = vpop.permute.xlu0 %188
        %vm190 = vcmask 130048
        %v191 = vsel %vm190, %v185, %v187
        %v192 = vsel %vm190, %v187, %v189
        %195 = vst [vmem:[%s157 + $0x20] sm:$0xff] %v191
        %196 = vst [vmem:[%s157 + $0x28] sm:$0xff] %v192
        %197 = vrot.lane.b32.xlu0 %v163, 24
        %v198 = vpop.permute.xlu0 %197
        %199 = vrot.lane.b32.xlu0 %v164, 24
        %v200 = vpop.permute.xlu0 %199
        %201 = vrot.lane.b32.xlu0 %v165, 24
        %v202 = vpop.permute.xlu0 %201
        %vm203 = vcmask 195584
        %v204 = vsel %vm203, %v198, %v200
        %v205 = vsel %vm203, %v200, %v202
        %208 = vst [vmem:[%s157 + $0x30] sm:$0xff] %v204
        %209 = vst [vmem:[%s157 + $0x38] sm:$0xff] %v205
        %210 = vrot.lane.b32.xlu0 %v163, 32
        %v211 = vpop.permute.xlu0 %210
        %212 = vrot.lane.b32.xlu0 %v164, 32
        %v213 = vpop.permute.xlu0 %212
        %214 = vrot.lane.b32.xlu0 %v165, 32
        %v215 = vpop.permute.xlu0 %214
        %vm216 = vcmask 261120
        %v217 = vsel %vm216, %v211, %v213
        %v218 = vsel %vm216, %v213, %v215
        %221 = vst [vmem:[%s157 + $0x40] sm:$0xff] %v217
        %222 = vst [vmem:[%s157 + $0x48] sm:$0xff] %v218
        %223 = vrot.lane.b32.xlu0 %v163, 40
        %v224 = vpop.permute.xlu0 %223
        %225 = vrot.lane.b32.xlu0 %v164, 40
        %v226 = vpop.permute.xlu0 %225
        %227 = vrot.lane.b32.xlu0 %v165, 40
        %v228 = vpop.permute.xlu0 %227
        %vm229 = vcmask 326656
        %v230 = vsel %vm229, %v224, %v226
        %v231 = vsel %vm229, %v226, %v228
        %234 = vst [vmem:[%s157 + $0x50] sm:$0xff] %v230
        %235 = vst [vmem:[%s157 + $0x58] sm:$0xff] %v231
        %236 = vrot.lane.b32.xlu0 %v163, 48
        %v237 = vpop.permute.xlu0 %236
        %238 = vrot.lane.b32.xlu0 %v164, 48
        %v239 = vpop.permute.xlu0 %238
        %240 = vrot.lane.b32.xlu0 %v165, 48
        %v241 = vpop.permute.xlu0 %240
        %vm242 = vcmask 392192
        %v243 = vsel %vm242, %v237, %v239
        %v244 = vsel %vm242, %v239, %v241
        %247 = vst [vmem:[%s157 + $0x60] sm:$0xff] %v243
        %248 = vst [vmem:[%s157 + $0x68] sm:$0xff] %v244
        %249 = vrot.lane.b32.xlu0 %v163, 56
        %v250 = vpop.permute.xlu0 %249
        %251 = vrot.lane.b32.xlu0 %v164, 56
        %v252 = vpop.permute.xlu0 %251
        %253 = vrot.lane.b32.xlu0 %v165, 56
        %v254 = vpop.permute.xlu0 %253
        %vm255 = vcmask 457728
        %v256 = vsel %vm255, %v250, %v252
        %v257 = vsel %vm255, %v252, %v254
        %260 = vst [vmem:[%s157 + $0x70] sm:$0xff] %v256
        %261 = vst [vmem:[%s157 + $0x78] sm:$0xff] %v257
        %262 = vrot.lane.b32.xlu0 %v163, 64
        %v263 = vpop.permute.xlu0 %262
        %264 = vrot.lane.b32.xlu0 %v164, 64
        %v265 = vpop.permute.xlu0 %264
        %266 = vrot.lane.b32.xlu0 %v165, 64
        %v267 = vpop.permute.xlu0 %266
        %vm268 = vcmask 523264
        %v269 = vsel %vm268, %v263, %v265
        %v270 = vsel %vm268, %v265, %v267
        %273 = vst [vmem:[%s157 + $0x80] sm:$0xff] %v269
        %274 = vst [vmem:[%s157 + $0x88] sm:$0xff] %v270
        %275 = vrot.lane.b32.xlu0 %v163, 72
        %v276 = vpop.permute.xlu0 %275
        %277 = vrot.lane.b32.xlu0 %v164, 72
        %v278 = vpop.permute.xlu0 %277
        %279 = vrot.lane.b32.xlu0 %v165, 72
        %v280 = vpop.permute.xlu0 %279
        %vm281 = vcmask 588800
        %v282 = vsel %vm281, %v276, %v278
        %v283 = vsel %vm281, %v278, %v280
        %286 = vst [vmem:[%s157 + $0x90] sm:$0xff] %v282
        %287 = vst [vmem:[%s157 + $0x98] sm:$0xff] %v283
        %288 = vrot.lane.b32.xlu0 %v163, 80
        %v289 = vpop.permute.xlu0 %288
        %290 = vrot.lane.b32.xlu0 %v164, 80
        %v291 = vpop.permute.xlu0 %290
        %292 = vrot.lane.b32.xlu0 %v165, 80
        %v293 = vpop.permute.xlu0 %292
        %vm294 = vcmask 654336
        %v295 = vsel %vm294, %v289, %v291
        %v296 = vsel %vm294, %v291, %v293
        %299 = vst [vmem:[%s157 + $0xa0] sm:$0xff] %v295
        %300 = vst [vmem:[%s157 + $0xa8] sm:$0xff] %v296
        %301 = vrot.lane.b32.xlu0 %v163, 88
        %v302 = vpop.permute.xlu0 %301
        %303 = vrot.lane.b32.xlu0 %v164, 88
        %v304 = vpop.permute.xlu0 %303
        %305 = vrot.lane.b32.xlu0 %v165, 88
        %v306 = vpop.permute.xlu0 %305
        %vm307 = vcmask 719872
        %v308 = vsel %vm307, %v302, %v304
        %v309 = vsel %vm307, %v304, %v306
        %312 = vst [vmem:[%s157 + $0xb0] sm:$0xff] %v308
        %313 = vst [vmem:[%s157 + $0xb8] sm:$0xff] %v309
        %314 = vrot.lane.b32.xlu0 %v163, 96
        %v315 = vpop.permute.xlu0 %314
        %316 = vrot.lane.b32.xlu0 %v164, 96
        %v317 = vpop.permute.xlu0 %316
        %318 = vrot.lane.b32.xlu0 %v165, 96
        %v319 = vpop.permute.xlu0 %318
        %vm320 = vcmask 785408
        %v321 = vsel %vm320, %v315, %v317
        %v322 = vsel %vm320, %v317, %v319
        %325 = vst [vmem:[%s157 + $0xc0] sm:$0xff] %v321
        %326 = vst [vmem:[%s157 + $0xc8] sm:$0xff] %v322
        %327 = vrot.lane.b32.xlu0 %v163, 104
        %v328 = vpop.permute.xlu0 %327
        %329 = vrot.lane.b32.xlu0 %v164, 104
        %v330 = vpop.permute.xlu0 %329
        %331 = vrot.lane.b32.xlu0 %v165, 104
        %v332 = vpop.permute.xlu0 %331
        %vm333 = vcmask 850944
        %v334 = vsel %vm333, %v328, %v330
        %v335 = vsel %vm333, %v330, %v332
        %338 = vst [vmem:[%s157 + $0xd0] sm:$0xff] %v334
        %339 = vst [vmem:[%s157 + $0xd8] sm:$0xff] %v335
        %340 = vrot.lane.b32.xlu0 %v163, 112
        %v341 = vpop.permute.xlu0 %340
        %342 = vrot.lane.b32.xlu0 %v164, 112
        %v343 = vpop.permute.xlu0 %342
        %344 = vrot.lane.b32.xlu0 %v165, 112
        %v345 = vpop.permute.xlu0 %344
        %vm346 = vcmask 916480
        %v347 = vsel %vm346, %v341, %v343
        %v348 = vsel %vm346, %v343, %v345
        %351 = vst [vmem:[%s157 + $0xe0] sm:$0xff] %v347
        %352 = vst [vmem:[%s157 + $0xe8] sm:$0xff] %v348
        %353 = vrot.lane.b32.xlu0 %v163, 120
        %v354 = vpop.permute.xlu0 %353
        %355 = vrot.lane.b32.xlu0 %v164, 120
        %v356 = vpop.permute.xlu0 %355
        %357 = vrot.lane.b32.xlu0 %v165, 120
        %v358 = vpop.permute.xlu0 %357
        %vm359 = vcmask 982016
        %v360 = vsel %vm359, %v354, %v356
        %v361 = vsel %vm359, %v356, %v358
        %364 = vst [vmem:[%s157 + $0xf0] sm:$0xff] %v360
        %365 = vst [vmem:[%s157 + $0xf8] sm:$0xff] %v361
        %s366 = scalar_lea.vmem %s139, 24 [#allocation2]
        %v367 = vld [vmem:[%s366] sm:$0xff]
        %v368 = vld [vmem:[%s366 + $0x8] sm:$0xff]
        %v369 = vld [vmem:[%s366 + $0x10] sm:$0xff]
        %s370 = scalar_lea.vmem %s157, 256 [#allocation5]
        %371 = vst [vmem:[%s370] sm:$0xff] %v368
        %372 = vst [vmem:[%s370 + $0x8] sm:$0xff] %v369
        %376 = vrot.lane.b32.xlu0 %v367, 8
        %v377 = vpop.permute.xlu0 %376
        %378 = vrot.lane.b32.xlu0 %v368, 8
        %v379 = vpop.permute.xlu0 %378
        %380 = vrot.lane.b32.xlu0 %v369, 8
        %v381 = vpop.permute.xlu0 %380
        %v382 = vsel %vm177, %v377, %v379
        %v383 = vsel %vm177, %v379, %v381
        %386 = vst [vmem:[%s370 + $0x10] sm:$0xff] %v382
        %387 = vst [vmem:[%s370 + $0x18] sm:$0xff] %v383
        %388 = vrot.lane.b32.xlu0 %v367, 16
        %v389 = vpop.permute.xlu0 %388
        %390 = vrot.lane.b32.xlu0 %v368, 16
        %v391 = vpop.permute.xlu0 %390
        %392 = vrot.lane.b32.xlu0 %v369, 16
        %v393 = vpop.permute.xlu0 %392
        %v394 = vsel %vm190, %v389, %v391
        %v395 = vsel %vm190, %v391, %v393
        %398 = vst [vmem:[%s370 + $0x20] sm:$0xff] %v394
        %399 = vst [vmem:[%s370 + $0x28] sm:$0xff] %v395
        %400 = vrot.lane.b32.xlu0 %v367, 24
        %v401 = vpop.permute.xlu0 %400
        %402 = vrot.lane.b32.xlu0 %v368, 24
        %v403 = vpop.permute.xlu0 %402
        %404 = vrot.lane.b32.xlu0 %v369, 24
        %v405 = vpop.permute.xlu0 %404
        %v406 = vsel %vm203, %v401, %v403
        %v407 = vsel %vm203, %v403, %v405
        %410 = vst [vmem:[%s370 + $0x30] sm:$0xff] %v406
        %411 = vst [vmem:[%s370 + $0x38] sm:$0xff] %v407
        %412 = vrot.lane.b32.xlu0 %v367, 32
        %v413 = vpop.permute.xlu0 %412
        %414 = vrot.lane.b32.xlu0 %v368, 32
        %v415 = vpop.permute.xlu0 %414
        %416 = vrot.lane.b32.xlu0 %v369, 32
        %v417 = vpop.permute.xlu0 %416
        %v418 = vsel %vm216, %v413, %v415
        %v419 = vsel %vm216, %v415, %v417
        %422 = vst [vmem:[%s370 + $0x40] sm:$0xff] %v418
        %423 = vst [vmem:[%s370 + $0x48] sm:$0xff] %v419
        %424 = vrot.lane.b32.xlu0 %v367, 40
        %v425 = vpop.permute.xlu0 %424
        %426 = vrot.lane.b32.xlu0 %v368, 40
        %v427 = vpop.permute.xlu0 %426
        %428 = vrot.lane.b32.xlu0 %v369, 40
        %v429 = vpop.permute.xlu0 %428
        %v430 = vsel %vm229, %v425, %v427
        %v431 = vsel %vm229, %v427, %v429
        %434 = vst [vmem:[%s370 + $0x50] sm:$0xff] %v430
        %435 = vst [vmem:[%s370 + $0x58] sm:$0xff] %v431
        %436 = vrot.lane.b32.xlu0 %v367, 48
        %v437 = vpop.permute.xlu0 %436
        %438 = vrot.lane.b32.xlu0 %v368, 48
        %v439 = vpop.permute.xlu0 %438
        %440 = vrot.lane.b32.xlu0 %v369, 48
        %v441 = vpop.permute.xlu0 %440
        %v442 = vsel %vm242, %v437, %v439
        %v443 = vsel %vm242, %v439, %v441
        %446 = vst [vmem:[%s370 + $0x60] sm:$0xff] %v442
        %447 = vst [vmem:[%s370 + $0x68] sm:$0xff] %v443
        %448 = vrot.lane.b32.xlu0 %v367, 56
        %v449 = vpop.permute.xlu0 %448
        %450 = vrot.lane.b32.xlu0 %v368, 56
        %v451 = vpop.permute.xlu0 %450
        %452 = vrot.lane.b32.xlu0 %v369, 56
        %v453 = vpop.permute.xlu0 %452
        %v454 = vsel %vm255, %v449, %v451
        %v455 = vsel %vm255, %v451, %v453
        %458 = vst [vmem:[%s370 + $0x70] sm:$0xff] %v454
        %459 = vst [vmem:[%s370 + $0x78] sm:$0xff] %v455
        %460 = vrot.lane.b32.xlu0 %v367, 64
        %v461 = vpop.permute.xlu0 %460
        %462 = vrot.lane.b32.xlu0 %v368, 64
        %v463 = vpop.permute.xlu0 %462
        %464 = vrot.lane.b32.xlu0 %v369, 64
        %v465 = vpop.permute.xlu0 %464
        %v466 = vsel %vm268, %v461, %v463
        %v467 = vsel %vm268, %v463, %v465
        %470 = vst [vmem:[%s370 + $0x80] sm:$0xff] %v466
        %471 = vst [vmem:[%s370 + $0x88] sm:$0xff] %v467
        %472 = vrot.lane.b32.xlu0 %v367, 72
        %v473 = vpop.permute.xlu0 %472
        %474 = vrot.lane.b32.xlu0 %v368, 72
        %v475 = vpop.permute.xlu0 %474
        %476 = vrot.lane.b32.xlu0 %v369, 72
        %v477 = vpop.permute.xlu0 %476
        %v478 = vsel %vm281, %v473, %v475
        %v479 = vsel %vm281, %v475, %v477
        %482 = vst [vmem:[%s370 + $0x90] sm:$0xff] %v478
        %483 = vst [vmem:[%s370 + $0x98] sm:$0xff] %v479
        %484 = vrot.lane.b32.xlu0 %v367, 80
        %v485 = vpop.permute.xlu0 %484
        %486 = vrot.lane.b32.xlu0 %v368, 80
        %v487 = vpop.permute.xlu0 %486
        %488 = vrot.lane.b32.xlu0 %v369, 80
        %v489 = vpop.permute.xlu0 %488
        %v490 = vsel %vm294, %v485, %v487
        %v491 = vsel %vm294, %v487, %v489
        %494 = vst [vmem:[%s370 + $0xa0] sm:$0xff] %v490
        %495 = vst [vmem:[%s370 + $0xa8] sm:$0xff] %v491
        %496 = vrot.lane.b32.xlu0 %v367, 88
        %v497 = vpop.permute.xlu0 %496
        %498 = vrot.lane.b32.xlu0 %v368, 88
        %v499 = vpop.permute.xlu0 %498
        %500 = vrot.lane.b32.xlu0 %v369, 88
        %v501 = vpop.permute.xlu0 %500
        %v502 = vsel %vm307, %v497, %v499
        %v503 = vsel %vm307, %v499, %v501
        %506 = vst [vmem:[%s370 + $0xb0] sm:$0xff] %v502
        %507 = vst [vmem:[%s370 + $0xb8] sm:$0xff] %v503
        %508 = vrot.lane.b32.xlu0 %v367, 96
        %v509 = vpop.permute.xlu0 %508
        %510 = vrot.lane.b32.xlu0 %v368, 96
        %v511 = vpop.permute.xlu0 %510
        %512 = vrot.lane.b32.xlu0 %v369, 96
        %v513 = vpop.permute.xlu0 %512
        %v514 = vsel %vm320, %v509, %v511
        %v515 = vsel %vm320, %v511, %v513
        %518 = vst [vmem:[%s370 + $0xc0] sm:$0xff] %v514
        %519 = vst [vmem:[%s370 + $0xc8] sm:$0xff] %v515
        %520 = vrot.lane.b32.xlu0 %v367, 104
        %v521 = vpop.permute.xlu0 %520
        %522 = vrot.lane.b32.xlu0 %v368, 104
        %v523 = vpop.permute.xlu0 %522
        %524 = vrot.lane.b32.xlu0 %v369, 104
        %v525 = vpop.permute.xlu0 %524
        %v526 = vsel %vm333, %v521, %v523
        %v527 = vsel %vm333, %v523, %v525
        %530 = vst [vmem:[%s370 + $0xd0] sm:$0xff] %v526
        %531 = vst [vmem:[%s370 + $0xd8] sm:$0xff] %v527
        %532 = vrot.lane.b32.xlu0 %v367, 112
        %v533 = vpop.permute.xlu0 %532
        %534 = vrot.lane.b32.xlu0 %v368, 112
        %v535 = vpop.permute.xlu0 %534
        %536 = vrot.lane.b32.xlu0 %v369, 112
        %v537 = vpop.permute.xlu0 %536
        %v538 = vsel %vm346, %v533, %v535
        %v539 = vsel %vm346, %v535, %v537
        %542 = vst [vmem:[%s370 + $0xe0] sm:$0xff] %v538
        %543 = vst [vmem:[%s370 + $0xe8] sm:$0xff] %v539
        %544 = vrot.lane.b32.xlu0 %v367, 120
        %v545 = vpop.permute.xlu0 %544
        %546 = vrot.lane.b32.xlu0 %v368, 120
        %v547 = vpop.permute.xlu0 %546
        %548 = vrot.lane.b32.xlu0 %v369, 120
        %v549 = vpop.permute.xlu0 %548
        %v550 = vsel %vm359, %v545, %v547
        %v551 = vsel %vm359, %v547, %v549
        %554 = vst [vmem:[%s370 + $0xf0] sm:$0xff] %v550
        %555 = vst [vmem:[%s370 + $0xf8] sm:$0xff] %v551
        %s556 = scalar_lea.vmem %s139, 48 [#allocation2]
        %v557 = vld [vmem:[%s556] sm:$0xff]
        %v558 = vld [vmem:[%s556 + $0x8] sm:$0xff]
        %v559 = vld [vmem:[%s556 + $0x10] sm:$0xff]
        %s560 = scalar_lea.vmem %s157, 512 [#allocation5]
        %561 = vst [vmem:[%s560] sm:$0xff] %v558
        %562 = vst [vmem:[%s560 + $0x8] sm:$0xff] %v559
        %566 = vrot.lane.b32.xlu0 %v557, 8
        %v567 = vpop.permute.xlu0 %566
        %568 = vrot.lane.b32.xlu0 %v558, 8
        %v569 = vpop.permute.xlu0 %568
        %570 = vrot.lane.b32.xlu0 %v559, 8
        %v571 = vpop.permute.xlu0 %570
        %v572 = vsel %vm177, %v567, %v569
        %v573 = vsel %vm177, %v569, %v571
        %576 = vst [vmem:[%s560 + $0x10] sm:$0xff] %v572
        %577 = vst [vmem:[%s560 + $0x18] sm:$0xff] %v573
        %578 = vrot.lane.b32.xlu0 %v557, 16
        %v579 = vpop.permute.xlu0 %578
        %580 = vrot.lane.b32.xlu0 %v558, 16
        %v581 = vpop.permute.xlu0 %580
        %582 = vrot.lane.b32.xlu0 %v559, 16
        %v583 = vpop.permute.xlu0 %582
        %v584 = vsel %vm190, %v579, %v581
        %v585 = vsel %vm190, %v581, %v583
        %588 = vst [vmem:[%s560 + $0x20] sm:$0xff] %v584
        %589 = vst [vmem:[%s560 + $0x28] sm:$0xff] %v585
        %590 = vrot.lane.b32.xlu0 %v557, 24
        %v591 = vpop.permute.xlu0 %590
        %592 = vrot.lane.b32.xlu0 %v558, 24
        %v593 = vpop.permute.xlu0 %592
        %594 = vrot.lane.b32.xlu0 %v559, 24
        %v595 = vpop.permute.xlu0 %594
        %v596 = vsel %vm203, %v591, %v593
        %v597 = vsel %vm203, %v593, %v595
        %600 = vst [vmem:[%s560 + $0x30] sm:$0xff] %v596
        %601 = vst [vmem:[%s560 + $0x38] sm:$0xff] %v597
        %602 = vrot.lane.b32.xlu0 %v557, 32
        %v603 = vpop.permute.xlu0 %602
        %604 = vrot.lane.b32.xlu0 %v558, 32
        %v605 = vpop.permute.xlu0 %604
        %606 = vrot.lane.b32.xlu0 %v559, 32
        %v607 = vpop.permute.xlu0 %606
        %v608 = vsel %vm216, %v603, %v605
        %v609 = vsel %vm216, %v605, %v607
        %612 = vst [vmem:[%s560 + $0x40] sm:$0xff] %v608
        %613 = vst [vmem:[%s560 + $0x48] sm:$0xff] %v609
        %614 = vrot.lane.b32.xlu0 %v557, 40
        %v615 = vpop.permute.xlu0 %614
        %616 = vrot.lane.b32.xlu0 %v558, 40
        %v617 = vpop.permute.xlu0 %616
        %618 = vrot.lane.b32.xlu0 %v559, 40
        %v619 = vpop.permute.xlu0 %618
        %v620 = vsel %vm229, %v615, %v617
        %v621 = vsel %vm229, %v617, %v619
        %624 = vst [vmem:[%s560 + $0x50] sm:$0xff] %v620
        %625 = vst [vmem:[%s560 + $0x58] sm:$0xff] %v621
        %626 = vrot.lane.b32.xlu0 %v557, 48
        %v627 = vpop.permute.xlu0 %626
        %628 = vrot.lane.b32.xlu0 %v558, 48
        %v629 = vpop.permute.xlu0 %628
        %630 = vrot.lane.b32.xlu0 %v559, 48
        %v631 = vpop.permute.xlu0 %630
        %v632 = vsel %vm242, %v627, %v629
        %v633 = vsel %vm242, %v629, %v631
        %636 = vst [vmem:[%s560 + $0x60] sm:$0xff] %v632
        %637 = vst [vmem:[%s560 + $0x68] sm:$0xff] %v633
        %638 = vrot.lane.b32.xlu0 %v557, 56
        %v639 = vpop.permute.xlu0 %638
        %640 = vrot.lane.b32.xlu0 %v558, 56
        %v641 = vpop.permute.xlu0 %640
        %642 = vrot.lane.b32.xlu0 %v559, 56
        %v643 = vpop.permute.xlu0 %642
        %v644 = vsel %vm255, %v639, %v641
        %v645 = vsel %vm255, %v641, %v643
        %648 = vst [vmem:[%s560 + $0x70] sm:$0xff] %v644
        %649 = vst [vmem:[%s560 + $0x78] sm:$0xff] %v645
        %650 = vrot.lane.b32.xlu0 %v557, 64
        %v651 = vpop.permute.xlu0 %650
        %652 = vrot.lane.b32.xlu0 %v558, 64
        %v653 = vpop.permute.xlu0 %652
        %654 = vrot.lane.b32.xlu0 %v559, 64
        %v655 = vpop.permute.xlu0 %654
        %v656 = vsel %vm268, %v651, %v653
        %v657 = vsel %vm268, %v653, %v655
        %660 = vst [vmem:[%s560 + $0x80] sm:$0xff] %v656
        %661 = vst [vmem:[%s560 + $0x88] sm:$0xff] %v657
        %662 = vrot.lane.b32.xlu0 %v557, 72
        %v663 = vpop.permute.xlu0 %662
        %664 = vrot.lane.b32.xlu0 %v558, 72
        %v665 = vpop.permute.xlu0 %664
        %666 = vrot.lane.b32.xlu0 %v559, 72
        %v667 = vpop.permute.xlu0 %666
        %v668 = vsel %vm281, %v663, %v665
        %v669 = vsel %vm281, %v665, %v667
        %672 = vst [vmem:[%s560 + $0x90] sm:$0xff] %v668
        %673 = vst [vmem:[%s560 + $0x98] sm:$0xff] %v669
        %674 = vrot.lane.b32.xlu0 %v557, 80
        %v675 = vpop.permute.xlu0 %674
        %676 = vrot.lane.b32.xlu0 %v558, 80
        %v677 = vpop.permute.xlu0 %676
        %678 = vrot.lane.b32.xlu0 %v559, 80
        %v679 = vpop.permute.xlu0 %678
        %v680 = vsel %vm294, %v675, %v677
        %v681 = vsel %vm294, %v677, %v679
        %684 = vst [vmem:[%s560 + $0xa0] sm:$0xff] %v680
        %685 = vst [vmem:[%s560 + $0xa8] sm:$0xff] %v681
        %686 = vrot.lane.b32.xlu0 %v557, 88
        %v687 = vpop.permute.xlu0 %686
        %688 = vrot.lane.b32.xlu0 %v558, 88
        %v689 = vpop.permute.xlu0 %688
        %690 = vrot.lane.b32.xlu0 %v559, 88
        %v691 = vpop.permute.xlu0 %690
        %v692 = vsel %vm307, %v687, %v689
        %v693 = vsel %vm307, %v689, %v691
        %696 = vst [vmem:[%s560 + $0xb0] sm:$0xff] %v692
        %697 = vst [vmem:[%s560 + $0xb8] sm:$0xff] %v693
        %698 = vrot.lane.b32.xlu0 %v557, 96
        %v699 = vpop.permute.xlu0 %698
        %700 = vrot.lane.b32.xlu0 %v558, 96
        %v701 = vpop.permute.xlu0 %700
        %702 = vrot.lane.b32.xlu0 %v559, 96
        %v703 = vpop.permute.xlu0 %702
        %v704 = vsel %vm320, %v699, %v701
        %v705 = vsel %vm320, %v701, %v703
        %708 = vst [vmem:[%s560 + $0xc0] sm:$0xff] %v704
        %709 = vst [vmem:[%s560 + $0xc8] sm:$0xff] %v705
        %710 = vrot.lane.b32.xlu0 %v557, 104
        %v711 = vpop.permute.xlu0 %710
        %712 = vrot.lane.b32.xlu0 %v558, 104
        %v713 = vpop.permute.xlu0 %712
        %714 = vrot.lane.b32.xlu0 %v559, 104
        %v715 = vpop.permute.xlu0 %714
        %v716 = vsel %vm333, %v711, %v713
        %v717 = vsel %vm333, %v713, %v715
        %720 = vst [vmem:[%s560 + $0xd0] sm:$0xff] %v716
        %721 = vst [vmem:[%s560 + $0xd8] sm:$0xff] %v717
        %722 = vrot.lane.b32.xlu0 %v557, 112
        %v723 = vpop.permute.xlu0 %722
        %724 = vrot.lane.b32.xlu0 %v558, 112
        %v725 = vpop.permute.xlu0 %724
        %726 = vrot.lane.b32.xlu0 %v559, 112
        %v727 = vpop.permute.xlu0 %726
        %v728 = vsel %vm346, %v723, %v725
        %v729 = vsel %vm346, %v725, %v727
        %732 = vst [vmem:[%s560 + $0xe0] sm:$0xff] %v728
        %733 = vst [vmem:[%s560 + $0xe8] sm:$0xff] %v729
        %734 = vrot.lane.b32.xlu0 %v557, 120
        %v735 = vpop.permute.xlu0 %734
        %736 = vrot.lane.b32.xlu0 %v558, 120
        %v737 = vpop.permute.xlu0 %736
        %738 = vrot.lane.b32.xlu0 %v559, 120
        %v739 = vpop.permute.xlu0 %738
        %v740 = vsel %vm359, %v735, %v737
        %v741 = vsel %vm359, %v737, %v739
        %744 = vst [vmem:[%s560 + $0xf0] sm:$0xff] %v740
        %745 = vst [vmem:[%s560 + $0xf8] sm:$0xff] %v741
        %s746 = scalar_lea.vmem %s139, 72 [#allocation2]
        %v747 = vld [vmem:[%s746] sm:$0xff]
        %v748 = vld [vmem:[%s746 + $0x8] sm:$0xff]
        %v749 = vld [vmem:[%s746 + $0x10] sm:$0xff]
        %s750 = scalar_lea.vmem %s157, 768 [#allocation5]
        %751 = vst [vmem:[%s750] sm:$0xff] %v748
        %752 = vst [vmem:[%s750 + $0x8] sm:$0xff] %v749
        %756 = vrot.lane.b32.xlu0 %v747, 8
        %v757 = vpop.permute.xlu0 %756
        %758 = vrot.lane.b32.xlu0 %v748, 8
        %v759 = vpop.permute.xlu0 %758
        %760 = vrot.lane.b32.xlu0 %v749, 8
        %v761 = vpop.permute.xlu0 %760
        %v762 = vsel %vm177, %v757, %v759
        %v763 = vsel %vm177, %v759, %v761
        %766 = vst [vmem:[%s750 + $0x10] sm:$0xff] %v762
        %767 = vst [vmem:[%s750 + $0x18] sm:$0xff] %v763
        %768 = vrot.lane.b32.xlu0 %v747, 16
        %v769 = vpop.permute.xlu0 %768
        %770 = vrot.lane.b32.xlu0 %v748, 16
        %v771 = vpop.permute.xlu0 %770
        %772 = vrot.lane.b32.xlu0 %v749, 16
        %v773 = vpop.permute.xlu0 %772
        %v774 = vsel %vm190, %v769, %v771
        %v775 = vsel %vm190, %v771, %v773
        %778 = vst [vmem:[%s750 + $0x20] sm:$0xff] %v774
        %779 = vst [vmem:[%s750 + $0x28] sm:$0xff] %v775
        %780 = vrot.lane.b32.xlu0 %v747, 24
        %v781 = vpop.permute.xlu0 %780
        %782 = vrot.lane.b32.xlu0 %v748, 24
        %v783 = vpop.permute.xlu0 %782
        %784 = vrot.lane.b32.xlu0 %v749, 24
        %v785 = vpop.permute.xlu0 %784
        %v786 = vsel %vm203, %v781, %v783
        %v787 = vsel %vm203, %v783, %v785
        %790 = vst [vmem:[%s750 + $0x30] sm:$0xff] %v786
        %791 = vst [vmem:[%s750 + $0x38] sm:$0xff] %v787
        %792 = vrot.lane.b32.xlu0 %v747, 32
        %v793 = vpop.permute.xlu0 %792
        %794 = vrot.lane.b32.xlu0 %v748, 32
        %v795 = vpop.permute.xlu0 %794
        %796 = vrot.lane.b32.xlu0 %v749, 32
        %v797 = vpop.permute.xlu0 %796
        %v798 = vsel %vm216, %v793, %v795
        %v799 = vsel %vm216, %v795, %v797
        %802 = vst [vmem:[%s750 + $0x40] sm:$0xff] %v798
        %803 = vst [vmem:[%s750 + $0x48] sm:$0xff] %v799
        %804 = vrot.lane.b32.xlu0 %v747, 40
        %v805 = vpop.permute.xlu0 %804
        %806 = vrot.lane.b32.xlu0 %v748, 40
        %v807 = vpop.permute.xlu0 %806
        %808 = vrot.lane.b32.xlu0 %v749, 40
        %v809 = vpop.permute.xlu0 %808
        %v810 = vsel %vm229, %v805, %v807
        %v811 = vsel %vm229, %v807, %v809
        %814 = vst [vmem:[%s750 + $0x50] sm:$0xff] %v810
        %815 = vst [vmem:[%s750 + $0x58] sm:$0xff] %v811
        %816 = vrot.lane.b32.xlu0 %v747, 48
        %v817 = vpop.permute.xlu0 %816
        %818 = vrot.lane.b32.xlu0 %v748, 48
        %v819 = vpop.permute.xlu0 %818
        %820 = vrot.lane.b32.xlu0 %v749, 48
        %v821 = vpop.permute.xlu0 %820
        %v822 = vsel %vm242, %v817, %v819
        %v823 = vsel %vm242, %v819, %v821
        %826 = vst [vmem:[%s750 + $0x60] sm:$0xff] %v822
        %827 = vst [vmem:[%s750 + $0x68] sm:$0xff] %v823
        %828 = vrot.lane.b32.xlu0 %v747, 56
        %v829 = vpop.permute.xlu0 %828
        %830 = vrot.lane.b32.xlu0 %v748, 56
        %v831 = vpop.permute.xlu0 %830
        %832 = vrot.lane.b32.xlu0 %v749, 56
        %v833 = vpop.permute.xlu0 %832
        %v834 = vsel %vm255, %v829, %v831
        %v835 = vsel %vm255, %v831, %v833
        %838 = vst [vmem:[%s750 + $0x70] sm:$0xff] %v834
        %839 = vst [vmem:[%s750 + $0x78] sm:$0xff] %v835
        %840 = vrot.lane.b32.xlu0 %v747, 64
        %v841 = vpop.permute.xlu0 %840
        %842 = vrot.lane.b32.xlu0 %v748, 64
        %v843 = vpop.permute.xlu0 %842
        %844 = vrot.lane.b32.xlu0 %v749, 64
        %v845 = vpop.permute.xlu0 %844
        %v846 = vsel %vm268, %v841, %v843
        %v847 = vsel %vm268, %v843, %v845
        %850 = vst [vmem:[%s750 + $0x80] sm:$0xff] %v846
        %851 = vst [vmem:[%s750 + $0x88] sm:$0xff] %v847
        %852 = vrot.lane.b32.xlu0 %v747, 72
        %v853 = vpop.permute.xlu0 %852
        %854 = vrot.lane.b32.xlu0 %v748, 72
        %v855 = vpop.permute.xlu0 %854
        %856 = vrot.lane.b32.xlu0 %v749, 72
        %v857 = vpop.permute.xlu0 %856
        %v858 = vsel %vm281, %v853, %v855
        %v859 = vsel %vm281, %v855, %v857
        %862 = vst [vmem:[%s750 + $0x90] sm:$0xff] %v858
        %863 = vst [vmem:[%s750 + $0x98] sm:$0xff] %v859
        %864 = vrot.lane.b32.xlu0 %v747, 80
        %v865 = vpop.permute.xlu0 %864
        %866 = vrot.lane.b32.xlu0 %v748, 80
        %v867 = vpop.permute.xlu0 %866
        %868 = vrot.lane.b32.xlu0 %v749, 80
        %v869 = vpop.permute.xlu0 %868
        %v870 = vsel %vm294, %v865, %v867
        %v871 = vsel %vm294, %v867, %v869
        %874 = vst [vmem:[%s750 + $0xa0] sm:$0xff] %v870
        %875 = vst [vmem:[%s750 + $0xa8] sm:$0xff] %v871
        %876 = vrot.lane.b32.xlu0 %v747, 88
        %v877 = vpop.permute.xlu0 %876
        %878 = vrot.lane.b32.xlu0 %v748, 88
        %v879 = vpop.permute.xlu0 %878
        %880 = vrot.lane.b32.xlu0 %v749, 88
        %v881 = vpop.permute.xlu0 %880
        %v882 = vsel %vm307, %v877, %v879
        %v883 = vsel %vm307, %v879, %v881
        %886 = vst [vmem:[%s750 + $0xb0] sm:$0xff] %v882
        %887 = vst [vmem:[%s750 + $0xb8] sm:$0xff] %v883
        %888 = vrot.lane.b32.xlu0 %v747, 96
        %v889 = vpop.permute.xlu0 %888
        %890 = vrot.lane.b32.xlu0 %v748, 96
        %v891 = vpop.permute.xlu0 %890
        %892 = vrot.lane.b32.xlu0 %v749, 96
        %v893 = vpop.permute.xlu0 %892
        %v894 = vsel %vm320, %v889, %v891
        %v895 = vsel %vm320, %v891, %v893
        %898 = vst [vmem:[%s750 + $0xc0] sm:$0xff] %v894
        %899 = vst [vmem:[%s750 + $0xc8] sm:$0xff] %v895
        %900 = vrot.lane.b32.xlu0 %v747, 104
        %v901 = vpop.permute.xlu0 %900
        %902 = vrot.lane.b32.xlu0 %v748, 104
        %v903 = vpop.permute.xlu0 %902
        %904 = vrot.lane.b32.xlu0 %v749, 104
        %v905 = vpop.permute.xlu0 %904
        %v906 = vsel %vm333, %v901, %v903
        %v907 = vsel %vm333, %v903, %v905
        %910 = vst [vmem:[%s750 + $0xd0] sm:$0xff] %v906
        %911 = vst [vmem:[%s750 + $0xd8] sm:$0xff] %v907
        %912 = vrot.lane.b32.xlu0 %v747, 112
        %v913 = vpop.permute.xlu0 %912
        %914 = vrot.lane.b32.xlu0 %v748, 112
        %v915 = vpop.permute.xlu0 %914
        %916 = vrot.lane.b32.xlu0 %v749, 112
        %v917 = vpop.permute.xlu0 %916
        %v918 = vsel %vm346, %v913, %v915
        %v919 = vsel %vm346, %v915, %v917
        %922 = vst [vmem:[%s750 + $0xe0] sm:$0xff] %v918
        %923 = vst [vmem:[%s750 + $0xe8] sm:$0xff] %v919
        %924 = vrot.lane.b32.xlu0 %v747, 120
        %v925 = vpop.permute.xlu0 %924
        %926 = vrot.lane.b32.xlu0 %v748, 120
        %v927 = vpop.permute.xlu0 %926
        %928 = vrot.lane.b32.xlu0 %v749, 120
        %v929 = vpop.permute.xlu0 %928
        %v930 = vsel %vm359, %v925, %v927
        %v931 = vsel %vm359, %v927, %v929
        %934 = vst [vmem:[%s750 + $0xf0] sm:$0xff] %v930
        %935 = vst [vmem:[%s750 + $0xf8] sm:$0xff] %v931
        %s936 = scalar_lea.vmem %s139, 96 [#allocation2]
        %v937 = vld [vmem:[%s936] sm:$0xff]
        %v938 = vld [vmem:[%s936 + $0x8] sm:$0xff]
        %v939 = vld [vmem:[%s936 + $0x10] sm:$0xff]
        %s940 = scalar_lea.vmem %s157, 1024 [#allocation5]
        %941 = vst [vmem:[%s940] sm:$0xff] %v938
        %942 = vst [vmem:[%s940 + $0x8] sm:$0xff] %v939
        %946 = vrot.lane.b32.xlu0 %v937, 8
        %v947 = vpop.permute.xlu0 %946
        %948 = vrot.lane.b32.xlu0 %v938, 8
        %v949 = vpop.permute.xlu0 %948
        %950 = vrot.lane.b32.xlu0 %v939, 8
        %v951 = vpop.permute.xlu0 %950
        %v952 = vsel %vm177, %v947, %v949
        %v953 = vsel %vm177, %v949, %v951
        %956 = vst [vmem:[%s940 + $0x10] sm:$0xff] %v952
        %957 = vst [vmem:[%s940 + $0x18] sm:$0xff] %v953
        %958 = vrot.lane.b32.xlu0 %v937, 16
        %v959 = vpop.permute.xlu0 %958
        %960 = vrot.lane.b32.xlu0 %v938, 16
        %v961 = vpop.permute.xlu0 %960
        %962 = vrot.lane.b32.xlu0 %v939, 16
        %v963 = vpop.permute.xlu0 %962
        %v964 = vsel %vm190, %v959, %v961
        %v965 = vsel %vm190, %v961, %v963
        %968 = vst [vmem:[%s940 + $0x20] sm:$0xff] %v964
        %969 = vst [vmem:[%s940 + $0x28] sm:$0xff] %v965
        %970 = vrot.lane.b32.xlu0 %v937, 24
        %v971 = vpop.permute.xlu0 %970
        %972 = vrot.lane.b32.xlu0 %v938, 24
        %v973 = vpop.permute.xlu0 %972
        %974 = vrot.lane.b32.xlu0 %v939, 24
        %v975 = vpop.permute.xlu0 %974
        %v976 = vsel %vm203, %v971, %v973
        %v977 = vsel %vm203, %v973, %v975
        %980 = vst [vmem:[%s940 + $0x30] sm:$0xff] %v976
        %981 = vst [vmem:[%s940 + $0x38] sm:$0xff] %v977
        %982 = vrot.lane.b32.xlu0 %v937, 32
        %v983 = vpop.permute.xlu0 %982
        %984 = vrot.lane.b32.xlu0 %v938, 32
        %v985 = vpop.permute.xlu0 %984
        %986 = vrot.lane.b32.xlu0 %v939, 32
        %v987 = vpop.permute.xlu0 %986
        %v988 = vsel %vm216, %v983, %v985
        %v989 = vsel %vm216, %v985, %v987
        %992 = vst [vmem:[%s940 + $0x40] sm:$0xff] %v988
        %993 = vst [vmem:[%s940 + $0x48] sm:$0xff] %v989
        %994 = vrot.lane.b32.xlu0 %v937, 40
        %v995 = vpop.permute.xlu0 %994
        %996 = vrot.lane.b32.xlu0 %v938, 40
        %v997 = vpop.permute.xlu0 %996
        %998 = vrot.lane.b32.xlu0 %v939, 40
        %v999 = vpop.permute.xlu0 %998
        %v1000 = vsel %vm229, %v995, %v997
        %v1001 = vsel %vm229, %v997, %v999
        %1004 = vst [vmem:[%s940 + $0x50] sm:$0xff] %v1000
        %1005 = vst [vmem:[%s940 + $0x58] sm:$0xff] %v1001
        %1006 = vrot.lane.b32.xlu0 %v937, 48
        %v1007 = vpop.permute.xlu0 %1006
        %1008 = vrot.lane.b32.xlu0 %v938, 48
        %v1009 = vpop.permute.xlu0 %1008
        %1010 = vrot.lane.b32.xlu0 %v939, 48
        %v1011 = vpop.permute.xlu0 %1010
        %v1012 = vsel %vm242, %v1007, %v1009
        %v1013 = vsel %vm242, %v1009, %v1011
        %1016 = vst [vmem:[%s940 + $0x60] sm:$0xff] %v1012
        %1017 = vst [vmem:[%s940 + $0x68] sm:$0xff] %v1013
        %1018 = vrot.lane.b32.xlu0 %v937, 56
        %v1019 = vpop.permute.xlu0 %1018
        %1020 = vrot.lane.b32.xlu0 %v938, 56
        %v1021 = vpop.permute.xlu0 %1020
        %1022 = vrot.lane.b32.xlu0 %v939, 56
        %v1023 = vpop.permute.xlu0 %1022
        %v1024 = vsel %vm255, %v1019, %v1021
        %v1025 = vsel %vm255, %v1021, %v1023
        %1028 = vst [vmem:[%s940 + $0x70] sm:$0xff] %v1024
        %1029 = vst [vmem:[%s940 + $0x78] sm:$0xff] %v1025
        %1030 = vrot.lane.b32.xlu0 %v937, 64
        %v1031 = vpop.permute.xlu0 %1030
        %1032 = vrot.lane.b32.xlu0 %v938, 64
        %v1033 = vpop.permute.xlu0 %1032
        %1034 = vrot.lane.b32.xlu0 %v939, 64
        %v1035 = vpop.permute.xlu0 %1034
        %v1036 = vsel %vm268, %v1031, %v1033
        %v1037 = vsel %vm268, %v1033, %v1035
        %1040 = vst [vmem:[%s940 + $0x80] sm:$0xff] %v1036
        %1041 = vst [vmem:[%s940 + $0x88] sm:$0xff] %v1037
        %1042 = vrot.lane.b32.xlu0 %v937, 72
        %v1043 = vpop.permute.xlu0 %1042
        %1044 = vrot.lane.b32.xlu0 %v938, 72
        %v1045 = vpop.permute.xlu0 %1044
        %1046 = vrot.lane.b32.xlu0 %v939, 72
        %v1047 = vpop.permute.xlu0 %1046
        %v1048 = vsel %vm281, %v1043, %v1045
        %v1049 = vsel %vm281, %v1045, %v1047
        %1052 = vst [vmem:[%s940 + $0x90] sm:$0xff] %v1048
        %1053 = vst [vmem:[%s940 + $0x98] sm:$0xff] %v1049
        %1054 = vrot.lane.b32.xlu0 %v937, 80
        %v1055 = vpop.permute.xlu0 %1054
        %1056 = vrot.lane.b32.xlu0 %v938, 80
        %v1057 = vpop.permute.xlu0 %1056
        %1058 = vrot.lane.b32.xlu0 %v939, 80
        %v1059 = vpop.permute.xlu0 %1058
        %v1060 = vsel %vm294, %v1055, %v1057
        %v1061 = vsel %vm294, %v1057, %v1059
        %1064 = vst [vmem:[%s940 + $0xa0] sm:$0xff] %v1060
        %1065 = vst [vmem:[%s940 + $0xa8] sm:$0xff] %v1061
        %1066 = vrot.lane.b32.xlu0 %v937, 88
        %v1067 = vpop.permute.xlu0 %1066
        %1068 = vrot.lane.b32.xlu0 %v938, 88
        %v1069 = vpop.permute.xlu0 %1068
        %1070 = vrot.lane.b32.xlu0 %v939, 88
        %v1071 = vpop.permute.xlu0 %1070
        %v1072 = vsel %vm307, %v1067, %v1069
        %v1073 = vsel %vm307, %v1069, %v1071
        %1076 = vst [vmem:[%s940 + $0xb0] sm:$0xff] %v1072
        %1077 = vst [vmem:[%s940 + $0xb8] sm:$0xff] %v1073
        %1078 = vrot.lane.b32.xlu0 %v937, 96
        %v1079 = vpop.permute.xlu0 %1078
        %1080 = vrot.lane.b32.xlu0 %v938, 96
        %v1081 = vpop.permute.xlu0 %1080
        %1082 = vrot.lane.b32.xlu0 %v939, 96
        %v1083 = vpop.permute.xlu0 %1082
        %v1084 = vsel %vm320, %v1079, %v1081
        %v1085 = vsel %vm320, %v1081, %v1083
        %1088 = vst [vmem:[%s940 + $0xc0] sm:$0xff] %v1084
        %1089 = vst [vmem:[%s940 + $0xc8] sm:$0xff] %v1085
        %1090 = vrot.lane.b32.xlu0 %v937, 104
        %v1091 = vpop.permute.xlu0 %1090
        %1092 = vrot.lane.b32.xlu0 %v938, 104
        %v1093 = vpop.permute.xlu0 %1092
        %1094 = vrot.lane.b32.xlu0 %v939, 104
        %v1095 = vpop.permute.xlu0 %1094
        %v1096 = vsel %vm333, %v1091, %v1093
        %v1097 = vsel %vm333, %v1093, %v1095
        %1100 = vst [vmem:[%s940 + $0xd0] sm:$0xff] %v1096
        %1101 = vst [vmem:[%s940 + $0xd8] sm:$0xff] %v1097
        %1102 = vrot.lane.b32.xlu0 %v937, 112
        %v1103 = vpop.permute.xlu0 %1102
        %1104 = vrot.lane.b32.xlu0 %v938, 112
        %v1105 = vpop.permute.xlu0 %1104
        %1106 = vrot.lane.b32.xlu0 %v939, 112
        %v1107 = vpop.permute.xlu0 %1106
        %v1108 = vsel %vm346, %v1103, %v1105
        %v1109 = vsel %vm346, %v1105, %v1107
        %1112 = vst [vmem:[%s940 + $0xe0] sm:$0xff] %v1108
        %1113 = vst [vmem:[%s940 + $0xe8] sm:$0xff] %v1109
        %1114 = vrot.lane.b32.xlu0 %v937, 120
        %v1115 = vpop.permute.xlu0 %1114
        %1116 = vrot.lane.b32.xlu0 %v938, 120
        %v1117 = vpop.permute.xlu0 %1116
        %1118 = vrot.lane.b32.xlu0 %v939, 120
        %v1119 = vpop.permute.xlu0 %1118
        %v1120 = vsel %vm359, %v1115, %v1117
        %v1121 = vsel %vm359, %v1117, %v1119
        %1124 = vst [vmem:[%s940 + $0xf0] sm:$0xff] %v1120
        %1125 = vst [vmem:[%s940 + $0xf8] sm:$0xff] %v1121
        %s1126 = scalar_lea.vmem %s139, 120 [#allocation2]
        %v1127 = vld [vmem:[%s1126] sm:$0xff]
        %v1128 = vld [vmem:[%s1126 + $0x8] sm:$0xff]
        %v1129 = vld [vmem:[%s1126 + $0x10] sm:$0xff]
        %s1130 = scalar_lea.vmem %s157, 1280 [#allocation5]
        %1131 = vst [vmem:[%s1130] sm:$0xff] %v1128
        %1132 = vst [vmem:[%s1130 + $0x8] sm:$0xff] %v1129
        %1136 = vrot.lane.b32.xlu0 %v1127, 8
        %v1137 = vpop.permute.xlu0 %1136
        %1138 = vrot.lane.b32.xlu0 %v1128, 8
        %v1139 = vpop.permute.xlu0 %1138
        %1140 = vrot.lane.b32.xlu0 %v1129, 8
        %v1141 = vpop.permute.xlu0 %1140
        %v1142 = vsel %vm177, %v1137, %v1139
        %v1143 = vsel %vm177, %v1139, %v1141
        %1146 = vst [vmem:[%s1130 + $0x10] sm:$0xff] %v1142
        %1147 = vst [vmem:[%s1130 + $0x18] sm:$0xff] %v1143
        %1148 = vrot.lane.b32.xlu0 %v1127, 16
        %v1149 = vpop.permute.xlu0 %1148
        %1150 = vrot.lane.b32.xlu0 %v1128, 16
        %v1151 = vpop.permute.xlu0 %1150
        %1152 = vrot.lane.b32.xlu0 %v1129, 16
        %v1153 = vpop.permute.xlu0 %1152
        %v1154 = vsel %vm190, %v1149, %v1151
        %v1155 = vsel %vm190, %v1151, %v1153
        %1158 = vst [vmem:[%s1130 + $0x20] sm:$0xff] %v1154
        %1159 = vst [vmem:[%s1130 + $0x28] sm:$0xff] %v1155
        %1160 = vrot.lane.b32.xlu0 %v1127, 24
        %v1161 = vpop.permute.xlu0 %1160
        %1162 = vrot.lane.b32.xlu0 %v1128, 24
        %v1163 = vpop.permute.xlu0 %1162
        %1164 = vrot.lane.b32.xlu0 %v1129, 24
        %v1165 = vpop.permute.xlu0 %1164
        %v1166 = vsel %vm203, %v1161, %v1163
        %v1167 = vsel %vm203, %v1163, %v1165
        %1170 = vst [vmem:[%s1130 + $0x30] sm:$0xff] %v1166
        %1171 = vst [vmem:[%s1130 + $0x38] sm:$0xff] %v1167
        %1172 = vrot.lane.b32.xlu0 %v1127, 32
        %v1173 = vpop.permute.xlu0 %1172
        %1174 = vrot.lane.b32.xlu0 %v1128, 32
        %v1175 = vpop.permute.xlu0 %1174
        %1176 = vrot.lane.b32.xlu0 %v1129, 32
        %v1177 = vpop.permute.xlu0 %1176
        %v1178 = vsel %vm216, %v1173, %v1175
        %v1179 = vsel %vm216, %v1175, %v1177
        %1182 = vst [vmem:[%s1130 + $0x40] sm:$0xff] %v1178
        %1183 = vst [vmem:[%s1130 + $0x48] sm:$0xff] %v1179
        %1184 = vrot.lane.b32.xlu0 %v1127, 40
        %v1185 = vpop.permute.xlu0 %1184
        %1186 = vrot.lane.b32.xlu0 %v1128, 40
        %v1187 = vpop.permute.xlu0 %1186
        %1188 = vrot.lane.b32.xlu0 %v1129, 40
        %v1189 = vpop.permute.xlu0 %1188
        %v1190 = vsel %vm229, %v1185, %v1187
        %v1191 = vsel %vm229, %v1187, %v1189
        %1194 = vst [vmem:[%s1130 + $0x50] sm:$0xff] %v1190
        %1195 = vst [vmem:[%s1130 + $0x58] sm:$0xff] %v1191
        %1196 = vrot.lane.b32.xlu0 %v1127, 48
        %v1197 = vpop.permute.xlu0 %1196
        %1198 = vrot.lane.b32.xlu0 %v1128, 48
        %v1199 = vpop.permute.xlu0 %1198
        %1200 = vrot.lane.b32.xlu0 %v1129, 48
        %v1201 = vpop.permute.xlu0 %1200
        %v1202 = vsel %vm242, %v1197, %v1199
        %v1203 = vsel %vm242, %v1199, %v1201
        %1206 = vst [vmem:[%s1130 + $0x60] sm:$0xff] %v1202
        %1207 = vst [vmem:[%s1130 + $0x68] sm:$0xff] %v1203
        %1208 = vrot.lane.b32.xlu0 %v1127, 56
        %v1209 = vpop.permute.xlu0 %1208
        %1210 = vrot.lane.b32.xlu0 %v1128, 56
        %v1211 = vpop.permute.xlu0 %1210
        %1212 = vrot.lane.b32.xlu0 %v1129, 56
        %v1213 = vpop.permute.xlu0 %1212
        %v1214 = vsel %vm255, %v1209, %v1211
        %v1215 = vsel %vm255, %v1211, %v1213
        %1218 = vst [vmem:[%s1130 + $0x70] sm:$0xff] %v1214
        %1219 = vst [vmem:[%s1130 + $0x78] sm:$0xff] %v1215
        %1220 = vrot.lane.b32.xlu0 %v1127, 64
        %v1221 = vpop.permute.xlu0 %1220
        %1222 = vrot.lane.b32.xlu0 %v1128, 64
        %v1223 = vpop.permute.xlu0 %1222
        %1224 = vrot.lane.b32.xlu0 %v1129, 64
        %v1225 = vpop.permute.xlu0 %1224
        %v1226 = vsel %vm268, %v1221, %v1223
        %v1227 = vsel %vm268, %v1223, %v1225
        %1230 = vst [vmem:[%s1130 + $0x80] sm:$0xff] %v1226
        %1231 = vst [vmem:[%s1130 + $0x88] sm:$0xff] %v1227
        %1232 = vrot.lane.b32.xlu0 %v1127, 72
        %v1233 = vpop.permute.xlu0 %1232
        %1234 = vrot.lane.b32.xlu0 %v1128, 72
        %v1235 = vpop.permute.xlu0 %1234
        %1236 = vrot.lane.b32.xlu0 %v1129, 72
        %v1237 = vpop.permute.xlu0 %1236
        %v1238 = vsel %vm281, %v1233, %v1235
        %v1239 = vsel %vm281, %v1235, %v1237
        %1242 = vst [vmem:[%s1130 + $0x90] sm:$0xff] %v1238
        %1243 = vst [vmem:[%s1130 + $0x98] sm:$0xff] %v1239
        %1244 = vrot.lane.b32.xlu0 %v1127, 80
        %v1245 = vpop.permute.xlu0 %1244
        %1246 = vrot.lane.b32.xlu0 %v1128, 80
        %v1247 = vpop.permute.xlu0 %1246
        %1248 = vrot.lane.b32.xlu0 %v1129, 80
        %v1249 = vpop.permute.xlu0 %1248
        %v1250 = vsel %vm294, %v1245, %v1247
        %v1251 = vsel %vm294, %v1247, %v1249
        %1254 = vst [vmem:[%s1130 + $0xa0] sm:$0xff] %v1250
        %1255 = vst [vmem:[%s1130 + $0xa8] sm:$0xff] %v1251
        %1256 = vrot.lane.b32.xlu0 %v1127, 88
        %v1257 = vpop.permute.xlu0 %1256
        %1258 = vrot.lane.b32.xlu0 %v1128, 88
        %v1259 = vpop.permute.xlu0 %1258
        %1260 = vrot.lane.b32.xlu0 %v1129, 88
        %v1261 = vpop.permute.xlu0 %1260
        %v1262 = vsel %vm307, %v1257, %v1259
        %v1263 = vsel %vm307, %v1259, %v1261
        %1266 = vst [vmem:[%s1130 + $0xb0] sm:$0xff] %v1262
        %1267 = vst [vmem:[%s1130 + $0xb8] sm:$0xff] %v1263
        %1268 = vrot.lane.b32.xlu0 %v1127, 96
        %v1269 = vpop.permute.xlu0 %1268
        %1270 = vrot.lane.b32.xlu0 %v1128, 96
        %v1271 = vpop.permute.xlu0 %1270
        %1272 = vrot.lane.b32.xlu0 %v1129, 96
        %v1273 = vpop.permute.xlu0 %1272
        %v1274 = vsel %vm320, %v1269, %v1271
        %v1275 = vsel %vm320, %v1271, %v1273
        %1278 = vst [vmem:[%s1130 + $0xc0] sm:$0xff] %v1274
        %1279 = vst [vmem:[%s1130 + $0xc8] sm:$0xff] %v1275
        %1280 = vrot.lane.b32.xlu0 %v1127, 104
        %v1281 = vpop.permute.xlu0 %1280
        %1282 = vrot.lane.b32.xlu0 %v1128, 104
        %v1283 = vpop.permute.xlu0 %1282
        %1284 = vrot.lane.b32.xlu0 %v1129, 104
        %v1285 = vpop.permute.xlu0 %1284
        %v1286 = vsel %vm333, %v1281, %v1283
        %v1287 = vsel %vm333, %v1283, %v1285
        %1290 = vst [vmem:[%s1130 + $0xd0] sm:$0xff] %v1286
        %1291 = vst [vmem:[%s1130 + $0xd8] sm:$0xff] %v1287
        %1292 = vrot.lane.b32.xlu0 %v1127, 112
        %v1293 = vpop.permute.xlu0 %1292
        %1294 = vrot.lane.b32.xlu0 %v1128, 112
        %v1295 = vpop.permute.xlu0 %1294
        %1296 = vrot.lane.b32.xlu0 %v1129, 112
        %v1297 = vpop.permute.xlu0 %1296
        %v1298 = vsel %vm346, %v1293, %v1295
        %v1299 = vsel %vm346, %v1295, %v1297
        %1302 = vst [vmem:[%s1130 + $0xe0] sm:$0xff] %v1298
        %1303 = vst [vmem:[%s1130 + $0xe8] sm:$0xff] %v1299
        %1304 = vrot.lane.b32.xlu0 %v1127, 120
        %v1305 = vpop.permute.xlu0 %1304
        %1306 = vrot.lane.b32.xlu0 %v1128, 120
        %v1307 = vpop.permute.xlu0 %1306
        %1308 = vrot.lane.b32.xlu0 %v1129, 120
        %v1309 = vpop.permute.xlu0 %1308
        %v1310 = vsel %vm359, %v1305, %v1307
        %v1311 = vsel %vm359, %v1307, %v1309
        %1314 = vst [vmem:[%s1130 + $0xf0] sm:$0xff] %v1310
        %1315 = vst [vmem:[%s1130 + $0xf8] sm:$0xff] %v1311
        %s1316 = scalar_lea.vmem %s139, 144 [#allocation2]
        %v1317 = vld [vmem:[%s1316] sm:$0xff]
        %v1318 = vld [vmem:[%s1316 + $0x8] sm:$0xff]
        %v1319 = vld [vmem:[%s1316 + $0x10] sm:$0xff]
        %s1320 = scalar_lea.vmem %s157, 1536 [#allocation5]
        %1321 = vst [vmem:[%s1320] sm:$0xff] %v1318
        %1322 = vst [vmem:[%s1320 + $0x8] sm:$0xff] %v1319
        %1326 = vrot.lane.b32.xlu0 %v1317, 8
        %v1327 = vpop.permute.xlu0 %1326
        %1328 = vrot.lane.b32.xlu0 %v1318, 8
        %v1329 = vpop.permute.xlu0 %1328
        %1330 = vrot.lane.b32.xlu0 %v1319, 8
        %v1331 = vpop.permute.xlu0 %1330
        %v1332 = vsel %vm177, %v1327, %v1329
        %v1333 = vsel %vm177, %v1329, %v1331
        %1336 = vst [vmem:[%s1320 + $0x10] sm:$0xff] %v1332
        %1337 = vst [vmem:[%s1320 + $0x18] sm:$0xff] %v1333
        %1338 = vrot.lane.b32.xlu0 %v1317, 16
        %v1339 = vpop.permute.xlu0 %1338
        %1340 = vrot.lane.b32.xlu0 %v1318, 16
        %v1341 = vpop.permute.xlu0 %1340
        %1342 = vrot.lane.b32.xlu0 %v1319, 16
        %v1343 = vpop.permute.xlu0 %1342
        %v1344 = vsel %vm190, %v1339, %v1341
        %v1345 = vsel %vm190, %v1341, %v1343
        %1348 = vst [vmem:[%s1320 + $0x20] sm:$0xff] %v1344
        %1349 = vst [vmem:[%s1320 + $0x28] sm:$0xff] %v1345
        %1350 = vrot.lane.b32.xlu0 %v1317, 24
        %v1351 = vpop.permute.xlu0 %1350
        %1352 = vrot.lane.b32.xlu0 %v1318, 24
        %v1353 = vpop.permute.xlu0 %1352
        %1354 = vrot.lane.b32.xlu0 %v1319, 24
        %v1355 = vpop.permute.xlu0 %1354
        %v1356 = vsel %vm203, %v1351, %v1353
        %v1357 = vsel %vm203, %v1353, %v1355
        %1360 = vst [vmem:[%s1320 + $0x30] sm:$0xff] %v1356
        %1361 = vst [vmem:[%s1320 + $0x38] sm:$0xff] %v1357
        %1362 = vrot.lane.b32.xlu0 %v1317, 32
        %v1363 = vpop.permute.xlu0 %1362
        %1364 = vrot.lane.b32.xlu0 %v1318, 32
        %v1365 = vpop.permute.xlu0 %1364
        %1366 = vrot.lane.b32.xlu0 %v1319, 32
        %v1367 = vpop.permute.xlu0 %1366
        %v1368 = vsel %vm216, %v1363, %v1365
        %v1369 = vsel %vm216, %v1365, %v1367
        %1372 = vst [vmem:[%s1320 + $0x40] sm:$0xff] %v1368
        %1373 = vst [vmem:[%s1320 + $0x48] sm:$0xff] %v1369
        %1374 = vrot.lane.b32.xlu0 %v1317, 40
        %v1375 = vpop.permute.xlu0 %1374
        %1376 = vrot.lane.b32.xlu0 %v1318, 40
        %v1377 = vpop.permute.xlu0 %1376
        %1378 = vrot.lane.b32.xlu0 %v1319, 40
        %v1379 = vpop.permute.xlu0 %1378
        %v1380 = vsel %vm229, %v1375, %v1377
        %v1381 = vsel %vm229, %v1377, %v1379
        %1384 = vst [vmem:[%s1320 + $0x50] sm:$0xff] %v1380
        %1385 = vst [vmem:[%s1320 + $0x58] sm:$0xff] %v1381
        %1386 = vrot.lane.b32.xlu0 %v1317, 48
        %v1387 = vpop.permute.xlu0 %1386
        %1388 = vrot.lane.b32.xlu0 %v1318, 48
        %v1389 = vpop.permute.xlu0 %1388
        %1390 = vrot.lane.b32.xlu0 %v1319, 48
        %v1391 = vpop.permute.xlu0 %1390
        %v1392 = vsel %vm242, %v1387, %v1389
        %v1393 = vsel %vm242, %v1389, %v1391
        %1396 = vst [vmem:[%s1320 + $0x60] sm:$0xff] %v1392
        %1397 = vst [vmem:[%s1320 + $0x68] sm:$0xff] %v1393
        %1398 = vrot.lane.b32.xlu0 %v1317, 56
        %v1399 = vpop.permute.xlu0 %1398
        %1400 = vrot.lane.b32.xlu0 %v1318, 56
        %v1401 = vpop.permute.xlu0 %1400
        %1402 = vrot.lane.b32.xlu0 %v1319, 56
        %v1403 = vpop.permute.xlu0 %1402
        %v1404 = vsel %vm255, %v1399, %v1401
        %v1405 = vsel %vm255, %v1401, %v1403
        %1408 = vst [vmem:[%s1320 + $0x70] sm:$0xff] %v1404
        %1409 = vst [vmem:[%s1320 + $0x78] sm:$0xff] %v1405
        %1410 = vrot.lane.b32.xlu0 %v1317, 64
        %v1411 = vpop.permute.xlu0 %1410
        %1412 = vrot.lane.b32.xlu0 %v1318, 64
        %v1413 = vpop.permute.xlu0 %1412
        %1414 = vrot.lane.b32.xlu0 %v1319, 64
        %v1415 = vpop.permute.xlu0 %1414
        %v1416 = vsel %vm268, %v1411, %v1413
        %v1417 = vsel %vm268, %v1413, %v1415
        %1420 = vst [vmem:[%s1320 + $0x80] sm:$0xff] %v1416
        %1421 = vst [vmem:[%s1320 + $0x88] sm:$0xff] %v1417
        %1422 = vrot.lane.b32.xlu0 %v1317, 72
        %v1423 = vpop.permute.xlu0 %1422
        %1424 = vrot.lane.b32.xlu0 %v1318, 72
        %v1425 = vpop.permute.xlu0 %1424
        %1426 = vrot.lane.b32.xlu0 %v1319, 72
        %v1427 = vpop.permute.xlu0 %1426
        %v1428 = vsel %vm281, %v1423, %v1425
        %v1429 = vsel %vm281, %v1425, %v1427
        %1432 = vst [vmem:[%s1320 + $0x90] sm:$0xff] %v1428
        %1433 = vst [vmem:[%s1320 + $0x98] sm:$0xff] %v1429
        %1434 = vrot.lane.b32.xlu0 %v1317, 80
        %v1435 = vpop.permute.xlu0 %1434
        %1436 = vrot.lane.b32.xlu0 %v1318, 80
        %v1437 = vpop.permute.xlu0 %1436
        %1438 = vrot.lane.b32.xlu0 %v1319, 80
        %v1439 = vpop.permute.xlu0 %1438
        %v1440 = vsel %vm294, %v1435, %v1437
        %v1441 = vsel %vm294, %v1437, %v1439
        %1444 = vst [vmem:[%s1320 + $0xa0] sm:$0xff] %v1440
        %1445 = vst [vmem:[%s1320 + $0xa8] sm:$0xff] %v1441
        %1446 = vrot.lane.b32.xlu0 %v1317, 88
        %v1447 = vpop.permute.xlu0 %1446
        %1448 = vrot.lane.b32.xlu0 %v1318, 88
        %v1449 = vpop.permute.xlu0 %1448
        %1450 = vrot.lane.b32.xlu0 %v1319, 88
        %v1451 = vpop.permute.xlu0 %1450
        %v1452 = vsel %vm307, %v1447, %v1449
        %v1453 = vsel %vm307, %v1449, %v1451
        %1456 = vst [vmem:[%s1320 + $0xb0] sm:$0xff] %v1452
        %1457 = vst [vmem:[%s1320 + $0xb8] sm:$0xff] %v1453
        %1458 = vrot.lane.b32.xlu0 %v1317, 96
        %v1459 = vpop.permute.xlu0 %1458
        %1460 = vrot.lane.b32.xlu0 %v1318, 96
        %v1461 = vpop.permute.xlu0 %1460
        %1462 = vrot.lane.b32.xlu0 %v1319, 96
        %v1463 = vpop.permute.xlu0 %1462
        %v1464 = vsel %vm320, %v1459, %v1461
        %v1465 = vsel %vm320, %v1461, %v1463
        %1468 = vst [vmem:[%s1320 + $0xc0] sm:$0xff] %v1464
        %1469 = vst [vmem:[%s1320 + $0xc8] sm:$0xff] %v1465
        %1470 = vrot.lane.b32.xlu0 %v1317, 104
        %v1471 = vpop.permute.xlu0 %1470
        %1472 = vrot.lane.b32.xlu0 %v1318, 104
        %v1473 = vpop.permute.xlu0 %1472
        %1474 = vrot.lane.b32.xlu0 %v1319, 104
        %v1475 = vpop.permute.xlu0 %1474
        %v1476 = vsel %vm333, %v1471, %v1473
        %v1477 = vsel %vm333, %v1473, %v1475
        %1480 = vst [vmem:[%s1320 + $0xd0] sm:$0xff] %v1476
        %1481 = vst [vmem:[%s1320 + $0xd8] sm:$0xff] %v1477
        %1482 = vrot.lane.b32.xlu0 %v1317, 112
        %v1483 = vpop.permute.xlu0 %1482
        %1484 = vrot.lane.b32.xlu0 %v1318, 112
        %v1485 = vpop.permute.xlu0 %1484
        %1486 = vrot.lane.b32.xlu0 %v1319, 112
        %v1487 = vpop.permute.xlu0 %1486
        %v1488 = vsel %vm346, %v1483, %v1485
        %v1489 = vsel %vm346, %v1485, %v1487
        %1492 = vst [vmem:[%s1320 + $0xe0] sm:$0xff] %v1488
        %1493 = vst [vmem:[%s1320 + $0xe8] sm:$0xff] %v1489
        %1494 = vrot.lane.b32.xlu0 %v1317, 120
        %v1495 = vpop.permute.xlu0 %1494
        %1496 = vrot.lane.b32.xlu0 %v1318, 120
        %v1497 = vpop.permute.xlu0 %1496
        %1498 = vrot.lane.b32.xlu0 %v1319, 120
        %v1499 = vpop.permute.xlu0 %1498
        %v1500 = vsel %vm359, %v1495, %v1497
        %v1501 = vsel %vm359, %v1497, %v1499
        %1504 = vst [vmem:[%s1320 + $0xf0] sm:$0xff] %v1500
        %1505 = vst [vmem:[%s1320 + $0xf8] sm:$0xff] %v1501
        %s1506 = scalar_lea.vmem %s139, 168 [#allocation2]
        %v1507 = vld [vmem:[%s1506] sm:$0xff]
        %v1508 = vld [vmem:[%s1506 + $0x8] sm:$0xff]
        %v1509 = vld [vmem:[%s1506 + $0x10] sm:$0xff]
        %s1510 = scalar_lea.vmem %s157, 1792 [#allocation5]
        %1511 = vst [vmem:[%s1510] sm:$0xff] %v1508
        %1512 = vst [vmem:[%s1510 + $0x8] sm:$0xff] %v1509
        %1516 = vrot.lane.b32.xlu0 %v1507, 8
        %v1517 = vpop.permute.xlu0 %1516
        %1518 = vrot.lane.b32.xlu0 %v1508, 8
        %v1519 = vpop.permute.xlu0 %1518
        %1520 = vrot.lane.b32.xlu0 %v1509, 8
        %v1521 = vpop.permute.xlu0 %1520
        %v1522 = vsel %vm177, %v1517, %v1519
        %v1523 = vsel %vm177, %v1519, %v1521
        %1526 = vst [vmem:[%s1510 + $0x10] sm:$0xff] %v1522
        %1527 = vst [vmem:[%s1510 + $0x18] sm:$0xff] %v1523
        %1528 = vrot.lane.b32.xlu0 %v1507, 16
        %v1529 = vpop.permute.xlu0 %1528
        %1530 = vrot.lane.b32.xlu0 %v1508, 16
        %v1531 = vpop.permute.xlu0 %1530
        %1532 = vrot.lane.b32.xlu0 %v1509, 16
        %v1533 = vpop.permute.xlu0 %1532
        %v1534 = vsel %vm190, %v1529, %v1531
        %v1535 = vsel %vm190, %v1531, %v1533
        %1538 = vst [vmem:[%s1510 + $0x20] sm:$0xff] %v1534
        %1539 = vst [vmem:[%s1510 + $0x28] sm:$0xff] %v1535
        %1540 = vrot.lane.b32.xlu0 %v1507, 24
        %v1541 = vpop.permute.xlu0 %1540
        %1542 = vrot.lane.b32.xlu0 %v1508, 24
        %v1543 = vpop.permute.xlu0 %1542
        %1544 = vrot.lane.b32.xlu0 %v1509, 24
        %v1545 = vpop.permute.xlu0 %1544
        %v1546 = vsel %vm203, %v1541, %v1543
        %v1547 = vsel %vm203, %v1543, %v1545
        %1550 = vst [vmem:[%s1510 + $0x30] sm:$0xff] %v1546
        %1551 = vst [vmem:[%s1510 + $0x38] sm:$0xff] %v1547
        %1552 = vrot.lane.b32.xlu0 %v1507, 32
        %v1553 = vpop.permute.xlu0 %1552
        %1554 = vrot.lane.b32.xlu0 %v1508, 32
        %v1555 = vpop.permute.xlu0 %1554
        %1556 = vrot.lane.b32.xlu0 %v1509, 32
        %v1557 = vpop.permute.xlu0 %1556
        %v1558 = vsel %vm216, %v1553, %v1555
        %v1559 = vsel %vm216, %v1555, %v1557
        %1562 = vst [vmem:[%s1510 + $0x40] sm:$0xff] %v1558
        %1563 = vst [vmem:[%s1510 + $0x48] sm:$0xff] %v1559
        %1564 = vrot.lane.b32.xlu0 %v1507, 40
        %v1565 = vpop.permute.xlu0 %1564
        %1566 = vrot.lane.b32.xlu0 %v1508, 40
        %v1567 = vpop.permute.xlu0 %1566
        %1568 = vrot.lane.b32.xlu0 %v1509, 40
        %v1569 = vpop.permute.xlu0 %1568
        %v1570 = vsel %vm229, %v1565, %v1567
        %v1571 = vsel %vm229, %v1567, %v1569
        %1574 = vst [vmem:[%s1510 + $0x50] sm:$0xff] %v1570
        %1575 = vst [vmem:[%s1510 + $0x58] sm:$0xff] %v1571
        %1576 = vrot.lane.b32.xlu0 %v1507, 48
        %v1577 = vpop.permute.xlu0 %1576
        %1578 = vrot.lane.b32.xlu0 %v1508, 48
        %v1579 = vpop.permute.xlu0 %1578
        %1580 = vrot.lane.b32.xlu0 %v1509, 48
        %v1581 = vpop.permute.xlu0 %1580
        %v1582 = vsel %vm242, %v1577, %v1579
        %v1583 = vsel %vm242, %v1579, %v1581
        %1586 = vst [vmem:[%s1510 + $0x60] sm:$0xff] %v1582
        %1587 = vst [vmem:[%s1510 + $0x68] sm:$0xff] %v1583
        %1588 = vrot.lane.b32.xlu0 %v1507, 56
        %v1589 = vpop.permute.xlu0 %1588
        %1590 = vrot.lane.b32.xlu0 %v1508, 56
        %v1591 = vpop.permute.xlu0 %1590
        %1592 = vrot.lane.b32.xlu0 %v1509, 56
        %v1593 = vpop.permute.xlu0 %1592
        %v1594 = vsel %vm255, %v1589, %v1591
        %v1595 = vsel %vm255, %v1591, %v1593
        %1598 = vst [vmem:[%s1510 + $0x70] sm:$0xff] %v1594
        %1599 = vst [vmem:[%s1510 + $0x78] sm:$0xff] %v1595
        %1600 = vrot.lane.b32.xlu0 %v1507, 64
        %v1601 = vpop.permute.xlu0 %1600
        %1602 = vrot.lane.b32.xlu0 %v1508, 64
        %v1603 = vpop.permute.xlu0 %1602
        %1604 = vrot.lane.b32.xlu0 %v1509, 64
        %v1605 = vpop.permute.xlu0 %1604
        %v1606 = vsel %vm268, %v1601, %v1603
        %v1607 = vsel %vm268, %v1603, %v1605
        %1610 = vst [vmem:[%s1510 + $0x80] sm:$0xff] %v1606
        %1611 = vst [vmem:[%s1510 + $0x88] sm:$0xff] %v1607
        %1612 = vrot.lane.b32.xlu0 %v1507, 72
        %v1613 = vpop.permute.xlu0 %1612
        %1614 = vrot.lane.b32.xlu0 %v1508, 72
        %v1615 = vpop.permute.xlu0 %1614
        %1616 = vrot.lane.b32.xlu0 %v1509, 72
        %v1617 = vpop.permute.xlu0 %1616
        %v1618 = vsel %vm281, %v1613, %v1615
        %v1619 = vsel %vm281, %v1615, %v1617
        %1622 = vst [vmem:[%s1510 + $0x90] sm:$0xff] %v1618
        %1623 = vst [vmem:[%s1510 + $0x98] sm:$0xff] %v1619
        %1624 = vrot.lane.b32.xlu0 %v1507, 80
        %v1625 = vpop.permute.xlu0 %1624
        %1626 = vrot.lane.b32.xlu0 %v1508, 80
        %v1627 = vpop.permute.xlu0 %1626
        %1628 = vrot.lane.b32.xlu0 %v1509, 80
        %v1629 = vpop.permute.xlu0 %1628
        %v1630 = vsel %vm294, %v1625, %v1627
        %v1631 = vsel %vm294, %v1627, %v1629
        %1634 = vst [vmem:[%s1510 + $0xa0] sm:$0xff] %v1630
        %1635 = vst [vmem:[%s1510 + $0xa8] sm:$0xff] %v1631
        %1636 = vrot.lane.b32.xlu0 %v1507, 88
        %v1637 = vpop.permute.xlu0 %1636
        %1638 = vrot.lane.b32.xlu0 %v1508, 88
        %v1639 = vpop.permute.xlu0 %1638
        %1640 = vrot.lane.b32.xlu0 %v1509, 88
        %v1641 = vpop.permute.xlu0 %1640
        %v1642 = vsel %vm307, %v1637, %v1639
        %v1643 = vsel %vm307, %v1639, %v1641
        %1646 = vst [vmem:[%s1510 + $0xb0] sm:$0xff] %v1642
        %1647 = vst [vmem:[%s1510 + $0xb8] sm:$0xff] %v1643
        %1648 = vrot.lane.b32.xlu0 %v1507, 96
        %v1649 = vpop.permute.xlu0 %1648
        %1650 = vrot.lane.b32.xlu0 %v1508, 96
        %v1651 = vpop.permute.xlu0 %1650
        %1652 = vrot.lane.b32.xlu0 %v1509, 96
        %v1653 = vpop.permute.xlu0 %1652
        %v1654 = vsel %vm320, %v1649, %v1651
        %v1655 = vsel %vm320, %v1651, %v1653
        %1658 = vst [vmem:[%s1510 + $0xc0] sm:$0xff] %v1654
        %1659 = vst [vmem:[%s1510 + $0xc8] sm:$0xff] %v1655
        %1660 = vrot.lane.b32.xlu0 %v1507, 104
        %v1661 = vpop.permute.xlu0 %1660
        %1662 = vrot.lane.b32.xlu0 %v1508, 104
        %v1663 = vpop.permute.xlu0 %1662
        %1664 = vrot.lane.b32.xlu0 %v1509, 104
        %v1665 = vpop.permute.xlu0 %1664
        %v1666 = vsel %vm333, %v1661, %v1663
        %v1667 = vsel %vm333, %v1663, %v1665
        %1670 = vst [vmem:[%s1510 + $0xd0] sm:$0xff] %v1666
        %1671 = vst [vmem:[%s1510 + $0xd8] sm:$0xff] %v1667
        %1672 = vrot.lane.b32.xlu0 %v1507, 112
        %v1673 = vpop.permute.xlu0 %1672
        %1674 = vrot.lane.b32.xlu0 %v1508, 112
        %v1675 = vpop.permute.xlu0 %1674
        %1676 = vrot.lane.b32.xlu0 %v1509, 112
        %v1677 = vpop.permute.xlu0 %1676
        %v1678 = vsel %vm346, %v1673, %v1675
        %v1679 = vsel %vm346, %v1675, %v1677
        %1682 = vst [vmem:[%s1510 + $0xe0] sm:$0xff] %v1678
        %1683 = vst [vmem:[%s1510 + $0xe8] sm:$0xff] %v1679
        %1684 = vrot.lane.b32.xlu0 %v1507, 120
        %v1685 = vpop.permute.xlu0 %1684
        %1686 = vrot.lane.b32.xlu0 %v1508, 120
        %v1687 = vpop.permute.xlu0 %1686
        %1688 = vrot.lane.b32.xlu0 %v1509, 120
        %v1689 = vpop.permute.xlu0 %1688
        %v1690 = vsel %vm359, %v1685, %v1687
        %v1691 = vsel %vm359, %v1687, %v1689
        %1694 = vst [vmem:[%s1510 + $0xf0] sm:$0xff] %v1690
        %1695 = vst [vmem:[%s1510 + $0xf8] sm:$0xff] %v1691
        %s1696 = sand.u32 %s72, 1
        %s1697 = scalar_lea.sflag [#allocation4], %s1696
        %s1698 = sand.u32 %s72, 1
        %s1699 = smul.addr %s1698, 2048
        %s1700 = scalar_lea.vmem [#allocation5], %s1699
        // Predicated region
        $region29: #{tpu_custom_call.1} parent=23 // pred_check
          %p1701 = pneg %p82
        $region30: #{tpu_custom_call.1} parent=23 // pred_check_branch
          %1703 = sbr.rel (%p1701) target = $region32
        $region31: #{tpu_custom_call.1} parent=23 // pred_region
          #allocation7 [shape = 'u32[6]{0}', space=smem, size = 0x18, scoped, tag = 'DMA stride descriptor']
          %s1704 = smul.u32 16, %s22
          %s1705 = smul.u32 2, %s23
          %s1707 = ssub.s32 32768, 32768
          %1708 = vsyncadd %s1697, %s1707
          %s1709 = smul.addr %s1704, 2
          %s1710 = sadd.s32 %s1705, %s1709
          %s1711 = smul.addr %s1710, 128
          %s1712 = scalar_lea.hbm %s1, %s1711
          %s1714 = sshll.u32 1, 14
          %s1715 = sxor.u32 4294967295, %s1714
          %s1718 = sshll.u32 7, 18
          %s1719 = sxor.u32 4294967295, %s1718
          %s1720 = sand.u32 0, %s1719
          %s1722 = sor.u32 %s1720, 0
          %s1723 = sshll.u32 %s1700, 4
          %s1724 = int_to_ptr.vmem [resolvable:$true] %s1723
          %1730 = sst [smem:[#allocation7]] 4096
          %s1731 = scalar_lea.smem [#allocation7], 1
          %1732 = sst [smem:[%s1731]] 8192
          %s1733 = scalar_lea.smem [#allocation7], 2
          %1734 = sst [smem:[%s1733]] 16
          %s1735 = scalar_lea.smem [#allocation7], 3
          %1736 = sst [smem:[%s1735]] 256
          %s1737 = scalar_lea.smem [#allocation7], 4
          %1738 = sst [smem:[%s1737]] 256
          %s1739 = scalar_lea.smem [#allocation7], 5
          %1740 = sst [smem:[%s1739]] 16
          %1742 = dma.general %s1724, 32768, %s1712, %s1697, 131072, [#allocation7], %s1722, 0
        $region32: #{tpu_custom_call.1} parent=23 // pred_fallthru
          _
      $region24: #{tpu_custom_call.1} parent=5 // pred_fallthru
        _
      %p1743 = scmp.le.s32.totalorder 2, %s13
      // Predicated region
      $region33: #{tpu_custom_call.1} parent=5 // pred_check
        %p1744 = pneg %p1743
      $region34: #{tpu_custom_call.1} parent=5 // pred_check_branch
        %1746 = sbr.rel (%p1744) target = $region36
      $region35: #{tpu_custom_call.1} parent=5 // pred_region
        %s1747 = ssub.s32 %s13, 2
        // Predicated region
        $region37: #{tpu_custom_call.1} parent=35 // pred_check
          %p1748 = pneg %p88
        $region38: #{tpu_custom_call.1} parent=35 // pred_check_branch
          %1750 = sbr.rel (%p1748) target = $region40
        $region39: #{tpu_custom_call.1} parent=35 // pred_region
          %s1751 = sand.u32 %s73, 1
          %s1752 = scalar_lea.sflag [#allocation4], %s1751
          %s1753 = sand.u32 %s73, 1
          %s1754 = smul.addr %s1753, 2048
          %s1755 = scalar_lea.vmem [#allocation5], %s1754
          %1756 = dma.done %s1752, 32768
        $region40: #{tpu_custom_call.1} parent=35 // pred_fallthru
          _
      $region36: #{tpu_custom_call.1} parent=5 // pred_fallthru
        _
    $region6: #{tpu_custom_call.1} parent=1 // loop_footer
      %s17 = sadd.s32 1, %s13
    $region7: #{tpu_custom_call.1} parent=1 // loop_footer_branch
      %12 = sbr.rel target = $region3
    $region8: #{tpu_custom_call.1} parent=1 // loop_exit
      _
    %1757 = vsyncpa [#allocation3], 1
    %s1758 = scalar_lea.sflag [#allocation3], 1
    %1759 = vsyncpa %s1758, 1
    %1760 = vsyncpa [#allocation4], 1
    %s1761 = scalar_lea.sflag [#allocation4], 1
    %1762 = vsyncpa %s1761, 1

</llo_original>
